<compile_context>
chip_gen: v7x
topology: tpu7x:2x2x1
jax: 0.10.0
libtpu: 0.0.40
codegen_flags: <defaults>
</compile_context>

<pallas_src>
import jax
import jax.numpy as jnp
from jax.experimental import pallas as pl
from jax.experimental.pallas import tpu as pltpu


def stage_up_kernel(x_ref, w1_ref, b1_ref, w2_ref, b2_ref, wupT_ref, bupT_ref,
                    out_ref, xpad_ref, h1pad_ref):
    # x_ref    : (1, H, W, 2C)   un-padded NHWC input block, f32
    # w1_ref   : (9*2C, C)       conv1 weights, K order (ky, kx, cin), bf16
    # b1_ref   : (1, C)          f32
    # w2_ref   : (9*C, C)        conv2 weights, bf16
    # b2_ref   : (1, C)          f32
    # wupT_ref : (4*Cout, C)     up-conv weights, rows = (dy, dx, cout), bf16
    # bupT_ref : (4*Cout, 1)     f32
    # out_ref  : (1, 4*Cout, H*W) channel-major, lane-dense output, f32
    # xpad_ref : (H+2, W+2, 2C)  bf16 scratch: zero-padded input
    # h1pad_ref: (H+2, W+2, C)   bf16 scratch: zero-padded conv1 activation
    Hp, Wp, _ = xpad_ref.shape
    C = h1pad_ref.shape[2]
    H, W = Hp - 2, Wp - 2
    hw_lanes = out_ref.shape[2]          # == H*W

    def zero_halo(ref):
        # Zero only the 1-px halo ring; the interior is fully overwritten below.
        # Done every grid step so it stays correct when the batch axis is
        # sharded across TensorCores ("parallel" semantics, per-core scratch).
        cc = ref.shape[2]
        ref[0:1, :, :] = jnp.zeros((1, Wp, cc), ref.dtype)
        ref[Hp - 1:Hp, :, :] = jnp.zeros((1, Wp, cc), ref.dtype)
        ref[:, 0:1, :] = jnp.zeros((Hp, 1, cc), ref.dtype)
        ref[:, Wp - 1:Wp, :] = jnp.zeros((Hp, 1, cc), ref.dtype)

    def conv3x3_relu(src_ref, w_ref, b_ref):
        # src_ref: (Hp, Wp, cin) bf16 zero-padded activation.
        # Build the 3 kx-shifted planes once (3 sublane-shifted copies), then
        # accumulate 3 matmuls of K = 3*cin over ky (ky slice is a free
        # leading-axis slice; the (H, W, 3cin)->(H*W, 3cin) reshape is
        # layout-free when W is a multiple of 8).
        cin = src_ref.shape[2]
        xk = jnp.concatenate([src_ref[:, kx:kx + W, :] for kx in range(3)],
                             axis=-1)                      # (Hp, W, 3*cin) bf16
        acc = jnp.zeros((H * W, w_ref.shape[1]), jnp.float32)
        for ky in range(3):
            rows = xk[ky:ky + H].reshape(H * W, 3 * cin)
            acc += jnp.dot(rows, w_ref[ky * 3 * cin:(ky + 1) * 3 * cin, :],
                           preferred_element_type=jnp.float32)
        return jnp.maximum(acc + b_ref[...], 0.0)          # (H*W, cout) f32

    # ---- fold 'same' padding into the kernel (bf16 cast happens here) ----
    zero_halo(xpad_ref)
    xpad_ref[1:1 + H, 1:1 + W, :] = x_ref[0].astype(jnp.bfloat16)

    # ---- conv1 (3x3, 'same') + ReLU ----
    h1 = conv3x3_relu(xpad_ref, w1_ref, b1_ref)            # (H*W, C) f32
    zero_halo(h1pad_ref)
    h1pad_ref[1:1 + H, 1:1 + W, :] = h1.reshape(H, W, C).astype(jnp.bfloat16)

    # ---- conv2 (3x3, 'same') + ReLU ----
    h2 = conv3x3_relu(h1pad_ref, w2_ref, b2_ref)           # (H*W, C) f32

    # ---- ConvTranspose2d(kernel=2, stride=2), channel-major output ----
    # zT[(dy,dx,co), y*W+x] = sum_ci wupT[(dy,dx,co), ci] * h2[y*W+x, ci]
    # (A @ B^T pattern; keeps H*W on the lane dim -> unmasked vst stores).
    zT = jax.lax.dot_general(wupT_ref[...], h2.astype(jnp.bfloat16),
                             dimension_numbers=(((1,), (1,)), ((), ())),
                             preferred_element_type=jnp.float32)
    zT = zT + bupT_ref[...]
    out_ref[...] = zT.reshape(1, zT.shape[0], hw_lanes).astype(out_ref.dtype)


@jax.jit
def stage_up_forward(x_nchw, w1_t, b1, w2_t, b2, wup_t, bup):
    """Forward pass with PyTorch-native parameter layouts.

    x_nchw: (N, 2*C, H, W) f32
    w1_t:   (C, 2*C, 3, 3)   conv1 weight, OIHW
    w2_t:   (C, C, 3, 3)     conv2 weight, OIHW
    wup_t:  (C, Cout, 2, 2)  ConvTranspose2d weight (in, out, kH, kW)
    Returns (N, Cout, 2*H, 2*W) f32.
    """
    N, C2, H, W = x_nchw.shape
    C = w1_t.shape[0]
    Cout = wup_t.shape[1]
    Hp, Wp = H + 2, W + 2

    # --- glue: one layout pass over the input (padding is done in-kernel) ---
    x = jnp.transpose(x_nchw, (0, 2, 3, 1))                       # NHWC

    # OIHW -> HWIO -> (9*Cin, Cout); bf16 for the MXU (f32 accumulation in-kernel).
    w1k = jnp.transpose(w1_t, (2, 3, 1, 0)).reshape(9 * C2, C).astype(jnp.bfloat16)
    w2k = jnp.transpose(w2_t, (2, 3, 1, 0)).reshape(9 * C, C).astype(jnp.bfloat16)
    # (Cin, Cout, dy, dx) -> (dy, dx, Cout, Cin) -> (4*Cout, Cin)
    wupTk = jnp.transpose(wup_t, (2, 3, 1, 0)).reshape(4 * Cout, C).astype(jnp.bfloat16)
    b1k = b1.reshape(1, C).astype(jnp.float32)
    b2k = b2.reshape(1, C).astype(jnp.float32)
    bupTk = jnp.tile(bup, 4).reshape(4 * Cout, 1).astype(jnp.float32)

    out = pl.pallas_call(
        stage_up_kernel,
        out_shape=jax.ShapeDtypeStruct((N, 4 * Cout, H * W), jnp.float32),
        grid_spec=pltpu.PrefetchScalarGridSpec(
            num_scalar_prefetch=0,
            grid=(N,),
            in_specs=[
                pl.BlockSpec((1, H, W, C2), lambda n: (n, 0, 0, 0)),
                pl.BlockSpec((9 * C2, C), lambda n: (0, 0)),
                pl.BlockSpec((1, C), lambda n: (0, 0)),
                pl.BlockSpec((9 * C, C), lambda n: (0, 0)),
                pl.BlockSpec((1, C), lambda n: (0, 0)),
                pl.BlockSpec((4 * Cout, C), lambda n: (0, 0)),
                pl.BlockSpec((4 * Cout, 1), lambda n: (0, 0)),
            ],
            out_specs=pl.BlockSpec((1, 4 * Cout, H * W), lambda n: (n, 0, 0)),
            scratch_shapes=[pltpu.VMEM((Hp, Wp, C2), jnp.bfloat16),
                            pltpu.VMEM((Hp, Wp, C), jnp.bfloat16)],
        ),
        compiler_params=pltpu.CompilerParams(
            dimension_semantics=("parallel",),      # batch elems independent (2 TCs on v7x)
            vmem_limit_bytes=64 * 1024 * 1024),
    )(x, w1k, b1k, w2k, b2k, wupTk, bupTk)

    # out[n, (dy, dx, co), y*W + x] -> NCHW (N, Cout, 2H, 2W): single transpose pass.
    y = out.reshape(N, 2, 2, Cout, H, W)
    y = jnp.transpose(y, (0, 3, 4, 1, 5, 2))            # (n, co, y, dy, x, dx)
    return y.reshape(N, Cout, 2 * H, 2 * W)


def _reference(x_nchw, w1_t, b1, w2_t, b2, wup_t, bup):
    """Pure-JAX f32 reference (XLA convs) with the same PyTorch weight layouts."""
    dn = ("NHWC", "HWIO", "NHWC")
    w1 = jnp.transpose(w1_t, (2, 3, 1, 0))
    w2 = jnp.transpose(w2_t, (2, 3, 1, 0))
    x = jnp.transpose(x_nchw, (0, 2, 3, 1))
    h1 = jnp.maximum(jax.lax.conv_general_dilated(x, w1, (1, 1), "SAME",
                                                  dimension_numbers=dn) + b1, 0.0)
    h2 = jnp.maximum(jax.lax.conv_general_dilated(h1, w2, (1, 1), "SAME",
                                                  dimension_numbers=dn) + b2, 0.0)
    # ConvTranspose2d(k=2, s=2): out[n, co, 2y+dy, 2x+dx] = sum_ci h2[n,y,x,ci]*w[ci,co,dy,dx]
    z = jnp.einsum("nhwi,ioyx->nhwyxo", h2, wup_t)
    N, H, W, _, _, Cout = z.shape
    y = z.transpose(0, 1, 3, 2, 4, 5).reshape(N, 2 * H, 2 * W, Cout) + bup
    return jnp.transpose(y, (0, 3, 1, 2))


if __name__ == "__main__":
    chan_in, chan_out = 4, 4
    N, H, W = 2, 16, 16
    C2 = chan_in * 2

    key = jax.random.PRNGKey(0)
    k = jax.random.split(key, 7)
    x = jax.random.normal(k[0], (N, C2, H, W), jnp.float32)
    # deterministic synthetic parameters in PyTorch-native layouts
    w1 = jax.random.normal(k[1], (chan_in, C2, 3, 3), jnp.float32) * 0.1       # OIHW
    b1 = jax.random.normal(k[2], (chan_in,), jnp.float32) * 0.1
    w2 = jax.random.normal(k[3], (chan_in, chan_in, 3, 3), jnp.float32) * 0.1  # OIHW
    b2 = jax.random.normal(k[4], (chan_in,), jnp.float32) * 0.1
    wup = jax.random.normal(k[5], (chan_in, chan_out, 2, 2), jnp.float32) * 0.1  # (in,out,kH,kW)
    bup = jax.random.normal(k[6], (chan_out,), jnp.float32) * 0.1

    out = jax.block_until_ready(stage_up_forward(x, w1, b1, w2, b2, wup, bup))
    assert out.shape == (N, chan_out, 2 * H, 2 * W), out.shape

    ref = jax.block_until_ready(_reference(x, w1, b1, w2, b2, wup, bup))
    max_err = float(jnp.max(jnp.abs(out - ref)))
    # tolerance accounts for bf16 matmul inputs (f32 accumulation)
    assert jnp.allclose(out, ref, atol=3e-2, rtol=3e-2), max_err

    print("KERNEL_OK")
</pallas_src>

<mosaic_0001>
module attributes {stable_mosaic.version = 11 : i64} {
  func.func @stage_up_kernel(%arg0: i32, %arg1: memref<1x16x16x8xf32, #tpu.memory_space<vmem>>, %arg2: memref<72x4xbf16, #tpu.memory_space<vmem>>, %arg3: memref<1x4xf32, #tpu.memory_space<vmem>>, %arg4: memref<36x4xbf16, #tpu.memory_space<vmem>>, %arg5: memref<1x4xf32, #tpu.memory_space<vmem>>, %arg6: memref<16x4xbf16, #tpu.memory_space<vmem>>, %arg7: memref<16x1xf32, #tpu.memory_space<vmem>>, %arg8: memref<1x16x256xf32, #tpu.memory_space<vmem>>, %arg9: memref<18x18x8xbf16, #tpu.memory_space<vmem>>, %arg10: memref<18x18x4xbf16, #tpu.memory_space<vmem>>) attributes {dimension_semantics = [#tpu.dimension_semantics<parallel>], iteration_bounds = array<i64: 2>, scalar_prefetch = 0 : i64, scratch_operands = 2 : i64, tpu.core_type = #tpu.core_type<tc>, window_params = [{transform_indices = @transform_0, window_bounds = array<i64: 1, 16, 16, 8>}, {pipeline_mode = #tpu.pipeline_mode<synchronous>, transform_indices = @transform_1, window_bounds = array<i64: 72, 4>}, {pipeline_mode = #tpu.pipeline_mode<synchronous>, transform_indices = @transform_2, window_bounds = array<i64: 1, 4>}, {pipeline_mode = #tpu.pipeline_mode<synchronous>, transform_indices = @transform_3, window_bounds = array<i64: 36, 4>}, {pipeline_mode = #tpu.pipeline_mode<synchronous>, transform_indices = @transform_4, window_bounds = array<i64: 1, 4>}, {pipeline_mode = #tpu.pipeline_mode<synchronous>, transform_indices = @transform_5, window_bounds = array<i64: 16, 4>}, {pipeline_mode = #tpu.pipeline_mode<synchronous>, transform_indices = @transform_6, window_bounds = array<i64: 16, 1>}, {transform_indices = @transform_7, window_bounds = array<i64: 1, 16, 256>}]} {
    %cst = arith.constant 0.000000e+00 : bf16
    %0 = vector.broadcast %cst : bf16 to vector<1x18x8xbf16>
    %c0 = arith.constant 0 : index
    %c0_0 = arith.constant 0 : index
    %c0_1 = arith.constant 0 : index
    %1 = vector.load %arg9[%c0, %c0_0, %c0_1] : memref<18x18x8xbf16, #tpu.memory_space<vmem>>, vector<1x18x8xbf16>
    tpu.vector_store %arg9[%c0, %c0_0, %c0_1], %0 {strides = array<i32>} : memref<18x18x8xbf16, #tpu.memory_space<vmem>>, vector<1x18x8xbf16>,
    %cst_2 = arith.constant 0.000000e+00 : bf16
    %2 = vector.broadcast %cst_2 : bf16 to vector<1x18x8xbf16>
    %c17 = arith.constant 17 : index
    %c0_3 = arith.constant 0 : index
    %c0_4 = arith.constant 0 : index
    %3 = vector.load %arg9[%c17, %c0_3, %c0_4] : memref<18x18x8xbf16, #tpu.memory_space<vmem>>, vector<1x18x8xbf16>
    tpu.vector_store %arg9[%c17, %c0_3, %c0_4], %2 {strides = array<i32>} : memref<18x18x8xbf16, #tpu.memory_space<vmem>>, vector<1x18x8xbf16>,
    %cst_5 = arith.constant 0.000000e+00 : bf16
    %4 = vector.broadcast %cst_5 : bf16 to vector<18x1x8xbf16>
    %c0_6 = arith.constant 0 : index
    %c0_7 = arith.constant 0 : index
    %c0_8 = arith.constant 0 : index
    %5 = vector.load %arg9[%c0_6, %c0_7, %c0_8] : memref<18x18x8xbf16, #tpu.memory_space<vmem>>, vector<18x1x8xbf16>
    tpu.vector_store %arg9[%c0_6, %c0_7, %c0_8], %4 {strides = array<i32>} : memref<18x18x8xbf16, #tpu.memory_space<vmem>>, vector<18x1x8xbf16>,
    %cst_9 = arith.constant 0.000000e+00 : bf16
    %6 = vector.broadcast %cst_9 : bf16 to vector<18x1x8xbf16>
    %c0_10 = arith.constant 0 : index
    %c17_11 = arith.constant 17 : index
    %c0_12 = arith.constant 0 : index
    %7 = vector.load %arg9[%c0_10, %c17_11, %c0_12] : memref<18x18x8xbf16, #tpu.memory_space<vmem>>, vector<18x1x8xbf16>
    tpu.vector_store %arg9[%c0_10, %c17_11, %c0_12], %6 {strides = array<i32>} : memref<18x18x8xbf16, #tpu.memory_space<vmem>>, vector<18x1x8xbf16>,
    %c0_13 = arith.constant 0 : index
    %c0_14 = arith.constant 0 : index
    %c0_15 = arith.constant 0 : index
    %c0_16 = arith.constant 0 : index
    %8 = vector.load %arg1[%c0_13, %c0_14, %c0_15, %c0_16] : memref<1x16x16x8xf32, #tpu.memory_space<vmem>>, vector<1x16x16x8xf32>
    %9 = vector.shape_cast %8 : vector<1x16x16x8xf32> to vector<16x16x8xf32>
    %10 = arith.truncf %9 : vector<16x16x8xf32> to vector<16x16x8xbf16>
    %c1 = arith.constant 1 : index
    %c1_17 = arith.constant 1 : index
    %c0_18 = arith.constant 0 : index
    %11 = vector.load %arg9[%c1, %c1_17, %c0_18] : memref<18x18x8xbf16, #tpu.memory_space<vmem>>, vector<16x16x8xbf16>
    tpu.vector_store %arg9[%c1, %c1_17, %c0_18], %10 {strides = array<i32>} : memref<18x18x8xbf16, #tpu.memory_space<vmem>>, vector<16x16x8xbf16>,
    %c0_19 = arith.constant 0 : index
    %c0_20 = arith.constant 0 : index
    %c0_21 = arith.constant 0 : index
    %12 = vector.load %arg9[%c0_19, %c0_20, %c0_21] : memref<18x18x8xbf16, #tpu.memory_space<vmem>>, vector<18x16x8xbf16>
    %c0_22 = arith.constant 0 : index
    %c1_23 = arith.constant 1 : index
    %c0_24 = arith.constant 0 : index
    %13 = vector.load %arg9[%c0_22, %c1_23, %c0_24] : memref<18x18x8xbf16, #tpu.memory_space<vmem>>, vector<18x16x8xbf16>
    %c0_25 = arith.constant 0 : index
    %c2 = arith.constant 2 : index
    %c0_26 = arith.constant 0 : index
    %14 = vector.load %arg9[%c0_25, %c2, %c0_26] : memref<18x18x8xbf16, #tpu.memory_space<vmem>>, vector<18x16x8xbf16>
    %15 = tpu.concatenate %12, %13, %14 in 2 : vector<18x16x8xbf16>, vector<18x16x8xbf16>, vector<18x16x8xbf16> -> vector<18x16x24xbf16>
    %cst_27 = arith.constant 0.000000e+00 : f32
    %16 = vector.broadcast %cst_27 : f32 to vector<256x4xf32>
    %17 = vector.extract_strided_slice %15 {offsets = [0, 0, 0], sizes = [16, 16, 24], strides = [1, 1, 1]} : vector<18x16x24xbf16> to vector<16x16x24xbf16>
    %18 = vector.shape_cast %17 : vector<16x16x24xbf16> to vector<256x24xbf16>
    %c0_28 = arith.constant 0 : index
    %c0_29 = arith.constant 0 : index
    %19 = vector.load %arg2[%c0_28, %c0_29] : memref<72x4xbf16, #tpu.memory_space<vmem>>, vector<24x4xbf16>
    %cst_30 = arith.constant dense<0.000000e+00> : vector<256x4xf32>
    %20 = tpu.matmul %18, %19, %cst_30 {dimension_numbers = #tpu.dot_dimension_numbers<[1], [0], [0], [1], [0, 0, 1, 1], [], []>} : vector<256x24xbf16>, vector<24x4xbf16>, vector<256x4xf32> -> vector<256x4xf32>
    %21 = arith.addf %16, %20 : vector<256x4xf32>
    %22 = vector.extract_strided_slice %15 {offsets = [1, 0, 0], sizes = [16, 16, 24], strides = [1, 1, 1]} : vector<18x16x24xbf16> to vector<16x16x24xbf16>
    %23 = vector.shape_cast %22 : vector<16x16x24xbf16> to vector<256x24xbf16>
    %c24 = arith.constant 24 : index
    %c0_31 = arith.constant 0 : index
    %24 = vector.load %arg2[%c24, %c0_31] : memref<72x4xbf16, #tpu.memory_space<vmem>>, vector<24x4xbf16>
    %cst_32 = arith.constant dense<0.000000e+00> : vector<256x4xf32>
    %25 = tpu.matmul %23, %24, %cst_32 {dimension_numbers = #tpu.dot_dimension_numbers<[1], [0], [0], [1], [0, 0, 1, 1], [], []>} : vector<256x24xbf16>, vector<24x4xbf16>, vector<256x4xf32> -> vector<256x4xf32>
    %26 = arith.addf %21, %25 : vector<256x4xf32>
    %27 = vector.extract_strided_slice %15 {offsets = [2, 0, 0], sizes = [16, 16, 24], strides = [1, 1, 1]} : vector<18x16x24xbf16> to vector<16x16x24xbf16>
    %28 = vector.shape_cast %27 : vector<16x16x24xbf16> to vector<256x24xbf16>
    %c48 = arith.constant 48 : index
    %c0_33 = arith.constant 0 : index
    %29 = vector.load %arg2[%c48, %c0_33] : memref<72x4xbf16, #tpu.memory_space<vmem>>, vector<24x4xbf16>
    %cst_34 = arith.constant dense<0.000000e+00> : vector<256x4xf32>
    %30 = tpu.matmul %28, %29, %cst_34 {dimension_numbers = #tpu.dot_dimension_numbers<[1], [0], [0], [1], [0, 0, 1, 1], [], []>} : vector<256x24xbf16>, vector<24x4xbf16>, vector<256x4xf32> -> vector<256x4xf32>
    %31 = arith.addf %26, %30 : vector<256x4xf32>
    %c0_35 = arith.constant 0 : index
    %c0_36 = arith.constant 0 : index
    %32 = vector.load %arg3[%c0_35, %c0_36] : memref<1x4xf32, #tpu.memory_space<vmem>>, vector<1x4xf32>
    %33 = vector.broadcast %32 : vector<1x4xf32> to vector<256x4xf32>
    %34 = arith.addf %31, %33 : vector<256x4xf32>
    %cst_37 = arith.constant 0.000000e+00 : f32
    %35 = vector.broadcast %cst_37 : f32 to vector<256x4xf32>
    %36 = arith.maximumf %34, %35 : vector<256x4xf32>
    %cst_38 = arith.constant 0.000000e+00 : bf16
    %37 = vector.broadcast %cst_38 : bf16 to vector<1x18x4xbf16>
    %c0_39 = arith.constant 0 : index
    %c0_40 = arith.constant 0 : index
    %c0_41 = arith.constant 0 : index
    %38 = vector.load %arg10[%c0_39, %c0_40, %c0_41] : memref<18x18x4xbf16, #tpu.memory_space<vmem>>, vector<1x18x4xbf16>
    tpu.vector_store %arg10[%c0_39, %c0_40, %c0_41], %37 {strides = array<i32>} : memref<18x18x4xbf16, #tpu.memory_space<vmem>>, vector<1x18x4xbf16>,
    %cst_42 = arith.constant 0.000000e+00 : bf16
    %39 = vector.broadcast %cst_42 : bf16 to vector<1x18x4xbf16>
    %c17_43 = arith.constant 17 : index
    %c0_44 = arith.constant 0 : index
    %c0_45 = arith.constant 0 : index
    %40 = vector.load %arg10[%c17_43, %c0_44, %c0_45] : memref<18x18x4xbf16, #tpu.memory_space<vmem>>, vector<1x18x4xbf16>
    tpu.vector_store %arg10[%c17_43, %c0_44, %c0_45], %39 {strides = array<i32>} : memref<18x18x4xbf16, #tpu.memory_space<vmem>>, vector<1x18x4xbf16>,
    %cst_46 = arith.constant 0.000000e+00 : bf16
    %41 = vector.broadcast %cst_46 : bf16 to vector<18x1x4xbf16>
    %c0_47 = arith.constant 0 : index
    %c0_48 = arith.constant 0 : index
    %c0_49 = arith.constant 0 : index
    %42 = vector.load %arg10[%c0_47, %c0_48, %c0_49] : memref<18x18x4xbf16, #tpu.memory_space<vmem>>, vector<18x1x4xbf16>
    tpu.vector_store %arg10[%c0_47, %c0_48, %c0_49], %41 {strides = array<i32>} : memref<18x18x4xbf16, #tpu.memory_space<vmem>>, vector<18x1x4xbf16>,
    %cst_50 = arith.constant 0.000000e+00 : bf16
    %43 = vector.broadcast %cst_50 : bf16 to vector<18x1x4xbf16>
    %c0_51 = arith.constant 0 : index
    %c17_52 = arith.constant 17 : index
    %c0_53 = arith.constant 0 : index
    %44 = vector.load %arg10[%c0_51, %c17_52, %c0_53] : memref<18x18x4xbf16, #tpu.memory_space<vmem>>, vector<18x1x4xbf16>
    tpu.vector_store %arg10[%c0_51, %c17_52, %c0_53], %43 {strides = array<i32>} : memref<18x18x4xbf16, #tpu.memory_space<vmem>>, vector<18x1x4xbf16>,
    %45 = vector.shape_cast %36 : vector<256x4xf32> to vector<16x16x4xf32>
    %46 = arith.truncf %45 : vector<16x16x4xf32> to vector<16x16x4xbf16>
    %c1_54 = arith.constant 1 : index
    %c1_55 = arith.constant 1 : index
    %c0_56 = arith.constant 0 : index
    %47 = vector.load %arg10[%c1_54, %c1_55, %c0_56] : memref<18x18x4xbf16, #tpu.memory_space<vmem>>, vector<16x16x4xbf16>
    tpu.vector_store %arg10[%c1_54, %c1_55, %c0_56], %46 {strides = array<i32>} : memref<18x18x4xbf16, #tpu.memory_space<vmem>>, vector<16x16x4xbf16>,
    %c0_57 = arith.constant 0 : index
    %c0_58 = arith.constant 0 : index
    %c0_59 = arith.constant 0 : index
    %48 = vector.load %arg10[%c0_57, %c0_58, %c0_59] : memref<18x18x4xbf16, #tpu.memory_space<vmem>>, vector<18x16x4xbf16>
    %c0_60 = arith.constant 0 : index
    %c1_61 = arith.constant 1 : index
    %c0_62 = arith.constant 0 : index
    %49 = vector.load %arg10[%c0_60, %c1_61, %c0_62] : memref<18x18x4xbf16, #tpu.memory_space<vmem>>, vector<18x16x4xbf16>
    %c0_63 = arith.constant 0 : index
    %c2_64 = arith.constant 2 : index
    %c0_65 = arith.constant 0 : index
    %50 = vector.load %arg10[%c0_63, %c2_64, %c0_65] : memref<18x18x4xbf16, #tpu.memory_space<vmem>>, vector<18x16x4xbf16>
    %51 = tpu.concatenate %48, %49, %50 in 2 : vector<18x16x4xbf16>, vector<18x16x4xbf16>, vector<18x16x4xbf16> -> vector<18x16x12xbf16>
    %cst_66 = arith.constant 0.000000e+00 : f32
    %52 = vector.broadcast %cst_66 : f32 to vector<256x4xf32>
    %53 = vector.extract_strided_slice %51 {offsets = [0, 0, 0], sizes = [16, 16, 12], strides = [1, 1, 1]} : vector<18x16x12xbf16> to vector<16x16x12xbf16>
    %54 = vector.shape_cast %53 : vector<16x16x12xbf16> to vector<256x12xbf16>
    %c0_67 = arith.constant 0 : index
    %c0_68 = arith.constant 0 : index
    %55 = vector.load %arg4[%c0_67, %c0_68] : memref<36x4xbf16, #tpu.memory_space<vmem>>, vector<12x4xbf16>
    %cst_69 = arith.constant dense<0.000000e+00> : vector<256x4xf32>
    %56 = tpu.matmul %54, %55, %cst_69 {dimension_numbers = #tpu.dot_dimension_numbers<[1], [0], [0], [1], [0, 0, 1, 1], [], []>} : vector<256x12xbf16>, vector<12x4xbf16>, vector<256x4xf32> -> vector<256x4xf32>
    %57 = arith.addf %52, %56 : vector<256x4xf32>
    %58 = vector.extract_strided_slice %51 {offsets = [1, 0, 0], sizes = [16, 16, 12], strides = [1, 1, 1]} : vector<18x16x12xbf16> to vector<16x16x12xbf16>
    %59 = vector.shape_cast %58 : vector<16x16x12xbf16> to vector<256x12xbf16>
    %c12 = arith.constant 12 : index
    %c0_70 = arith.constant 0 : index
    %60 = vector.load %arg4[%c12, %c0_70] : memref<36x4xbf16, #tpu.memory_space<vmem>>, vector<12x4xbf16>
    %cst_71 = arith.constant dense<0.000000e+00> : vector<256x4xf32>
    %61 = tpu.matmul %59, %60, %cst_71 {dimension_numbers = #tpu.dot_dimension_numbers<[1], [0], [0], [1], [0, 0, 1, 1], [], []>} : vector<256x12xbf16>, vector<12x4xbf16>, vector<256x4xf32> -> vector<256x4xf32>
    %62 = arith.addf %57, %61 : vector<256x4xf32>
    %63 = vector.extract_strided_slice %51 {offsets = [2, 0, 0], sizes = [16, 16, 12], strides = [1, 1, 1]} : vector<18x16x12xbf16> to vector<16x16x12xbf16>
    %64 = vector.shape_cast %63 : vector<16x16x12xbf16> to vector<256x12xbf16>
    %c24_72 = arith.constant 24 : index
    %c0_73 = arith.constant 0 : index
    %65 = vector.load %arg4[%c24_72, %c0_73] : memref<36x4xbf16, #tpu.memory_space<vmem>>, vector<12x4xbf16>
    %cst_74 = arith.constant dense<0.000000e+00> : vector<256x4xf32>
    %66 = tpu.matmul %64, %65, %cst_74 {dimension_numbers = #tpu.dot_dimension_numbers<[1], [0], [0], [1], [0, 0, 1, 1], [], []>} : vector<256x12xbf16>, vector<12x4xbf16>, vector<256x4xf32> -> vector<256x4xf32>
    %67 = arith.addf %62, %66 : vector<256x4xf32>
    %c0_75 = arith.constant 0 : index
    %c0_76 = arith.constant 0 : index
    %68 = vector.load %arg5[%c0_75, %c0_76] : memref<1x4xf32, #tpu.memory_space<vmem>>, vector<1x4xf32>
    %69 = vector.broadcast %68 : vector<1x4xf32> to vector<256x4xf32>
    %70 = arith.addf %67, %69 : vector<256x4xf32>
    %cst_77 = arith.constant 0.000000e+00 : f32
    %71 = vector.broadcast %cst_77 : f32 to vector<256x4xf32>
    %72 = arith.maximumf %70, %71 : vector<256x4xf32>
    %c0_78 = arith.constant 0 : index
    %c0_79 = arith.constant 0 : index
    %73 = vector.load %arg6[%c0_78, %c0_79] : memref<16x4xbf16, #tpu.memory_space<vmem>>, vector<16x4xbf16>
    %74 = arith.truncf %72 : vector<256x4xf32> to vector<256x4xbf16>
    %cst_80 = arith.constant dense<0.000000e+00> : vector<16x256xf32>
    %75 = tpu.matmul %73, %74, %cst_80 {dimension_numbers = #tpu.dot_dimension_numbers<[1], [1], [0], [0], [0, 0, 1, 0], [], []>} : vector<16x4xbf16>, vector<256x4xbf16>, vector<16x256xf32> -> vector<16x256xf32>
    %c0_81 = arith.constant 0 : index
    %c0_82 = arith.constant 0 : index
    %76 = vector.load %arg7[%c0_81, %c0_82] : memref<16x1xf32, #tpu.memory_space<vmem>>, vector<16x1xf32>
    %77 = vector.broadcast %76 : vector<16x1xf32> to vector<16x256xf32>
    %78 = arith.addf %75, %77 : vector<16x256xf32>
    %79 = vector.shape_cast %78 : vector<16x256xf32> to vector<1x16x256xf32>
    %c0_83 = arith.constant 0 : index
    %c0_84 = arith.constant 0 : index
    %c0_85 = arith.constant 0 : index
    %80 = vector.load %arg8[%c0_83, %c0_84, %c0_85] : memref<1x16x256xf32, #tpu.memory_space<vmem>>, vector<1x16x256xf32>
    tpu.vector_store %arg8[%c0_83, %c0_84, %c0_85], %79 {strides = array<i32>} : memref<1x16x256xf32, #tpu.memory_space<vmem>>, vector<1x16x256xf32>,
    return
  }
  func.func @transform_0(%arg0: i32) -> (i32, i32, i32, i32) {
    %c0_i32 = arith.constant 0 : i32
    %c0_i32_0 = arith.constant 0 : i32
    %c0_i32_1 = arith.constant 0 : i32
    %c0_i32_2 = arith.constant 0 : i32
    return %arg0, %c0_i32, %c0_i32_0, %c0_i32_1 : i32, i32, i32, i32
  }
  func.func @transform_1(%arg0: i32) -> (i32, i32) {
    %c0_i32 = arith.constant 0 : i32
    %c0_i32_0 = arith.constant 0 : i32
    %c0_i32_1 = arith.constant 0 : i32
    return %c0_i32, %c0_i32_0 : i32, i32
  }
  func.func @transform_2(%arg0: i32) -> (i32, i32) {
    %c0_i32 = arith.constant 0 : i32
    %c0_i32_0 = arith.constant 0 : i32
    %c0_i32_1 = arith.constant 0 : i32
    return %c0_i32, %c0_i32_0 : i32, i32
  }
  func.func @transform_3(%arg0: i32) -> (i32, i32) {
    %c0_i32 = arith.constant 0 : i32
    %c0_i32_0 = arith.constant 0 : i32
    %c0_i32_1 = arith.constant 0 : i32
    return %c0_i32, %c0_i32_0 : i32, i32
  }
  func.func @transform_4(%arg0: i32) -> (i32, i32) {
    %c0_i32 = arith.constant 0 : i32
    %c0_i32_0 = arith.constant 0 : i32
    %c0_i32_1 = arith.constant 0 : i32
    return %c0_i32, %c0_i32_0 : i32, i32
  }
  func.func @transform_5(%arg0: i32) -> (i32, i32) {
    %c0_i32 = arith.constant 0 : i32
    %c0_i32_0 = arith.constant 0 : i32
    %c0_i32_1 = arith.constant 0 : i32
    return %c0_i32, %c0_i32_0 : i32, i32
  }
  func.func @transform_6(%arg0: i32) -> (i32, i32) {
    %c0_i32 = arith.constant 0 : i32
    %c0_i32_0 = arith.constant 0 : i32
    %c0_i32_1 = arith.constant 0 : i32
    return %c0_i32, %c0_i32_0 : i32, i32
  }
  func.func @transform_7(%arg0: i32) -> (i32, i32, i32) {
    %c0_i32 = arith.constant 0 : i32
    %c0_i32_0 = arith.constant 0 : i32
    %c0_i32_1 = arith.constant 0 : i32
    return %arg0, %c0_i32, %c0_i32_0 : i32, i32, i32
  }
}

</mosaic_0001>

<llo_original>
// kernel: tile.0
$region0: #{tile.0}
  %s0 = inlined_call_operand.vmem [shape: f32[4,4], index: 0, kind: input, shape index: {}]
  %s1 = inlined_call_operand.hbm [shape: f32[16,1], index: 1, kind: output, shape index: {}]
  $region1: #{tile.0} parent=0
    #allocation0 [shape = 'u8[8192]{0}', space=vmem, size = 0x2000, scoped, tag = 'operand span for operand 1']
    #allocation1 [shape = 's32[1]{0}', space=sflag, size = 0x4, scoped, tag = 'scoped memory for tile.0']
    #allocation2 [shape = 'u8[4096]{0}', space=vmem, size = 0x1000, scoped, tag = 'scoped mem for input reshape']
    %2 = vsyncpa [#allocation1], 0
    %s4 = sshllo.u32 0, 4
    %v5 = vld [vmem:[%s0] sm:%s4]
    %6 = vst [vmem:[#allocation2] sm:%s4] %v5
    %v7 = vld [vmem:[#allocation2] sm:$0xf]
    %vm8 = vcmask 7168
    %9 = vst.msk [vmem:[#allocation0] ss:$4 sm:$0xf] %vm8, %v7
    %v10 = vld [vmem:[#allocation2] sm:$0xf]
    %11 = vrot.lane.b32.xlu0 %v10, 127
    %v12 = vpop.permute.xlu0 %11
    %vm13 = vcmask 7168
    %s14 = scalar_lea.vmem [#allocation0], 1
    %15 = vst.msk [vmem:[%s14] ss:$4 sm:$0xf] %vm13, %v12
    %v16 = vld [vmem:[#allocation2] sm:$0xf]
    %17 = vrot.lane.b32.xlu0 %v16, 126
    %v18 = vpop.permute.xlu0 %17
    %vm19 = vcmask 7168
    %s20 = scalar_lea.vmem [#allocation0], 2
    %21 = vst.msk [vmem:[%s20] ss:$4 sm:$0xf] %vm19, %v18
    %v22 = vld [vmem:[#allocation2] sm:$0xf]
    %23 = vrot.lane.b32.xlu0 %v22, 125
    %v24 = vpop.permute.xlu0 %23
    %vm25 = vcmask 7168
    %s26 = scalar_lea.vmem [#allocation0], 3
    %27 = vst.msk [vmem:[%s26] ss:$4 sm:$0xf] %vm25, %v24
    %s29 = ssub.s32 256, 256
    %30 = vsyncadd [#allocation1], %s29
    %s32 = sshll.u32 [#allocation0], 4
    %s33 = int_to_ptr.vmem [resolvable:$true] %s32
    %35 = dma.vmem_to_hbm [thread:$0]  %s33, 256, %s1, [#allocation1]
    %36 = dma.done [#allocation1], 256
    %37 = vsyncpa [#allocation1], 1

// kernel: tile.8
$region0: #{tile.8}
  #allocation0 [shape = 's32[1]{0}', space=sflag, size = 0x4, scoped, tag = 'scoped memory for tile.8']
  %s0 = inlined_call_operand.vmem [shape: f32[4], index: 0, kind: input, shape index: {}]
  %s1 = inlined_call_operand.vmem [shape: f32[4,4], index: 1, kind: output, shape index: {}]
  // Predicated region
  $region2: #{tile.8} parent=0 // pred_check
    _
  $region3: #{tile.8} parent=0 // pred_check_branch
    %3 = sbr.rel (0) target = $region5
  $region4: #{tile.8} parent=0 // pred_region
    _
  $region5: #{tile.8} parent=0 // pred_fallthru
    _
  %v4 = vld [vmem:[%s0] ss:$0 sm:$0xff]
  %5 = vst [vmem:[%s1] sm:$0xf] %v4

// kernel: stage_up_forward.1
$region0: #{stage_up_forward.1}
  #allocation0 [shape = 'u32[]', space=smem, size = 0x4, offset = 0x4, fixed_abs, tag = 'smem constant byte address 0x4 - core index']
  #allocation1 [shape = 'u32[144,128]{1,0:T(1,128)}', space=vmem, size = 0x12000, scoped, tag = 'internal scratch']
  #allocation2 [shape = 'bf16[18,18,8]{2,1,0:T(8,128)(2,1)}', space=vmem, size = 0x1b000, scoped, tag = 'scratch operand']
  #allocation3 [shape = 'bf16[18,18,4]{2,1,0:T(8,128)(2,1)}', space=vmem, size = 0x1b000, scoped, tag = 'scratch operand']
  %s0 = inlined_call_operand.hbm [shape: f32[2,16,16,8], index: 0, kind: input, shape index: {}]
  %s1 = inlined_call_operand.hbm [shape: bf16[72,4], index: 1, kind: input, shape index: {}]
  %s2 = inlined_call_operand.hbm [shape: f32[1,4], index: 2, kind: input, shape index: {}]
  %s3 = inlined_call_operand.hbm [shape: bf16[36,4], index: 3, kind: input, shape index: {}]
  %s4 = inlined_call_operand.hbm [shape: f32[1,4], index: 4, kind: input, shape index: {}]
  %s5 = inlined_call_operand.hbm [shape: bf16[16,4], index: 5, kind: input, shape index: {}]
  %s6 = inlined_call_operand.hbm [shape: f32[16,1], index: 6, kind: input, shape index: {}]
  %s7 = inlined_call_operand.hbm [shape: f32[2,16,256], index: 7, kind: output, shape index: {}]
  %s8 = sld [smem:[#allocation0]]
  $region89: #{stage_up_forward.1} parent=0
    _
  %s10 = ssub.s32 1, %s8
  %s11 = scalar_select 0, %s10, %s8
  $region1: #{stage_up_forward.1} parent=0
    #allocation4 [shape = 'u8[262144]{0}', space=vmem, size = 0x40000, scoped, tag = 'input window, operand 0']
    #allocation5 [shape = 's32[2]{0}', space=sflag, size = 0x8, scoped, tag = 'scoped memory for stage_up_forward.1']
    #allocation6 [shape = 's32[2]{0}', space=sflag, size = 0x8, scoped, tag = 'scoped memory for stage_up_forward.1']
    #allocation7 [shape = 'u8[18432]{0}', space=vmem, size = 0x4800, scoped, tag = 'input window, operand 1, single buffered']
    #allocation8 [shape = 's32[1]{0}', space=sflag, size = 0x4, scoped, tag = 'scoped memory for stage_up_forward.1']
    #allocation9 [shape = 'u8[512]{0}', space=vmem, size = 0x400, scoped, tag = 'input window, operand 2, single buffered']
    #allocation10 [shape = 'u8[10240]{0}', space=vmem, size = 0x2800, scoped, tag = 'input window, operand 3, single buffered']
    #allocation11 [shape = 's32[1]{0}', space=sflag, size = 0x4, scoped, tag = 'scoped memory for stage_up_forward.1']
    #allocation12 [shape = 'u8[512]{0}', space=vmem, size = 0x400, scoped, tag = 'input window, operand 4, single buffered']
    #allocation13 [shape = 'u8[4096]{0}', space=vmem, size = 0x1000, scoped, tag = 'input window, operand 5, single buffered']
    #allocation14 [shape = 's32[1]{0}', space=sflag, size = 0x4, scoped, tag = 'scoped memory for stage_up_forward.1']
    #allocation15 [shape = 'u8[8192]{0}', space=vmem, size = 0x2000, scoped, tag = 'input window, operand 6, single buffered']
    #allocation16 [shape = 'u8[32768]{0}', space=vmem, size = 0x8000, scoped, tag = 'output window, operand 0']
    %12 = vsyncpa [#allocation5], 0
    %s13 = scalar_lea.sflag [#allocation5], 1
    %14 = vsyncpa %s13, 0
    %15 = vsyncpa [#allocation8], 0
    %16 = vsyncpa [#allocation11], 0
    %17 = vsyncpa [#allocation14], 0
    %18 = vsyncpa [#allocation6], 0
    %s19 = scalar_lea.sflag [#allocation6], 1
    %20 = vsyncpa %s19, 0
    loop: start=0, step=1, limit=4
    $region2: #{stage_up_forward.1} parent=1 // loop_pre_header
      _
    $region3: #{stage_up_forward.1} parent=1 // loop_header
      %s22 = sphi 0, %s26
      %p23 = scmp.ge.s32.totalorder %s22, 4
      %s32 = sphi 0, %s34
      %s35 = sphi 0, %s32
      %s36 = sphi 0, %s35
      %s52 = sphi 0, %s36
      %s56 = sphi 0, %s56
      %s58 = sphi 0, %s56
      %s59 = sphi 0, %s58
      %s73 = sphi 0, %s59
      %s77 = sphi 0, %s77
      %s79 = sphi 0, %s77
      %s80 = sphi 0, %s79
      %s94 = sphi 0, %s80
      %s98 = sphi 0, %s98
      %s100 = sphi 0, %s98
      %s101 = sphi 0, %s100
      %s115 = sphi 0, %s101
      %s119 = sphi 0, %s119
      %s121 = sphi 0, %s119
      %s122 = sphi 0, %s121
      %s136 = sphi 0, %s122
      %s140 = sphi 0, %s140
      %s142 = sphi 0, %s140
      %s143 = sphi 0, %s142
      %s157 = sphi 0, %s143
      %s161 = sphi 0, %s161
      %s163 = sphi 0, %s161
      %s164 = sphi 0, %s163
      %s178 = sphi 0, %s164
      %s184 = sphi 0, %s186
      %s187 = sphi 0, %s184
      %s188 = sphi 0, %s187
      %s204 = sphi 0, %s188
    $region4: #{stage_up_forward.1} parent=1 // loop_header_branch
      %25 = sbr.rel (%p23) target = $region8
    $region5: #{stage_up_forward.1} parent=1 // loop_body
      %s27 = ssub.s32 %s22, 1
      %s28 = ssub.s32 %s22, 2
      %s29 = sadd.s32 %s22, 1
      %s30 = ssub.s32 %s22, %s29
      %p31 = scmp.eq.s32.totalorder %s30, 0
      %s33 = sadd.s32 %s32, 1
      %s34 = scalar_select %p31, %s32, %s33
      %p37 = pneg %p31
      %p38 = scmp.eq.s32.totalorder %s22, 1
      %p39 = por %p37, %p38
      %p40 = scmp.ne.s32.totalorder %s32, %s35
      %p41 = scmp.eq.s32.totalorder %s22, 0
      %p42 = por %p40, %p41
      %p43 = scmp.ne.s32.totalorder %s32, %s35
      %p44 = scmp.eq.s32.totalorder %s27, 1
      %p45 = por %p43, %p44
      %p46 = scmp.ne.s32.totalorder %s35, %s36
      %p47 = scmp.eq.s32.totalorder %s27, 0
      %p48 = por %p46, %p47
      %p49 = scmp.ne.s32.totalorder %s35, %s36
      %p50 = scmp.eq.s32.totalorder %s28, 1
      %p51 = por %p49, %p50
      %p53 = scmp.ne.s32.totalorder %s36, %s52
      %p54 = scmp.eq.s32.totalorder %s28, 0
      %p55 = por %p53, %p54
      %s57 = sadd.s32 %s56, 1
      %p60 = scmp.eq.s32.totalorder %s22, 1
      %p61 = scmp.ne.s32.totalorder %s56, %s58
      %p62 = scmp.eq.s32.totalorder %s22, 0
      %p63 = por %p61, %p62
      %p64 = scmp.ne.s32.totalorder %s56, %s58
      %p65 = scmp.eq.s32.totalorder %s27, 1
      %p66 = por %p64, %p65
      %p67 = scmp.ne.s32.totalorder %s58, %s59
      %p68 = scmp.eq.s32.totalorder %s27, 0
      %p69 = por %p67, %p68
      %p70 = scmp.ne.s32.totalorder %s58, %s59
      %p71 = scmp.eq.s32.totalorder %s28, 1
      %p72 = por %p70, %p71
      %p74 = scmp.ne.s32.totalorder %s59, %s73
      %p75 = scmp.eq.s32.totalorder %s28, 0
      %p76 = por %p74, %p75
      %s78 = sadd.s32 %s77, 1
      %p81 = scmp.eq.s32.totalorder %s22, 1
      %p82 = scmp.ne.s32.totalorder %s77, %s79
      %p83 = scmp.eq.s32.totalorder %s22, 0
      %p84 = por %p82, %p83
      %p85 = scmp.ne.s32.totalorder %s77, %s79
      %p86 = scmp.eq.s32.totalorder %s27, 1
      %p87 = por %p85, %p86
      %p88 = scmp.ne.s32.totalorder %s79, %s80
      %p89 = scmp.eq.s32.totalorder %s27, 0
      %p90 = por %p88, %p89
      %p91 = scmp.ne.s32.totalorder %s79, %s80
      %p92 = scmp.eq.s32.totalorder %s28, 1
      %p93 = por %p91, %p92
      %p95 = scmp.ne.s32.totalorder %s80, %s94
      %p96 = scmp.eq.s32.totalorder %s28, 0
      %p97 = por %p95, %p96
      %s99 = sadd.s32 %s98, 1
      %p102 = scmp.eq.s32.totalorder %s22, 1
      %p103 = scmp.ne.s32.totalorder %s98, %s100
      %p104 = scmp.eq.s32.totalorder %s22, 0
      %p105 = por %p103, %p104
      %p106 = scmp.ne.s32.totalorder %s98, %s100
      %p107 = scmp.eq.s32.totalorder %s27, 1
      %p108 = por %p106, %p107
      %p109 = scmp.ne.s32.totalorder %s100, %s101
      %p110 = scmp.eq.s32.totalorder %s27, 0
      %p111 = por %p109, %p110
      %p112 = scmp.ne.s32.totalorder %s100, %s101
      %p113 = scmp.eq.s32.totalorder %s28, 1
      %p114 = por %p112, %p113
      %p116 = scmp.ne.s32.totalorder %s101, %s115
      %p117 = scmp.eq.s32.totalorder %s28, 0
      %p118 = por %p116, %p117
      %s120 = sadd.s32 %s119, 1
      %p123 = scmp.eq.s32.totalorder %s22, 1
      %p124 = scmp.ne.s32.totalorder %s119, %s121
      %p125 = scmp.eq.s32.totalorder %s22, 0
      %p126 = por %p124, %p125
      %p127 = scmp.ne.s32.totalorder %s119, %s121
      %p128 = scmp.eq.s32.totalorder %s27, 1
      %p129 = por %p127, %p128
      %p130 = scmp.ne.s32.totalorder %s121, %s122
      %p131 = scmp.eq.s32.totalorder %s27, 0
      %p132 = por %p130, %p131
      %p133 = scmp.ne.s32.totalorder %s121, %s122
      %p134 = scmp.eq.s32.totalorder %s28, 1
      %p135 = por %p133, %p134
      %p137 = scmp.ne.s32.totalorder %s122, %s136
      %p138 = scmp.eq.s32.totalorder %s28, 0
      %p139 = por %p137, %p138
      %s141 = sadd.s32 %s140, 1
      %p144 = scmp.eq.s32.totalorder %s22, 1
      %p145 = scmp.ne.s32.totalorder %s140, %s142
      %p146 = scmp.eq.s32.totalorder %s22, 0
      %p147 = por %p145, %p146
      %p148 = scmp.ne.s32.totalorder %s140, %s142
      %p149 = scmp.eq.s32.totalorder %s27, 1
      %p150 = por %p148, %p149
      %p151 = scmp.ne.s32.totalorder %s142, %s143
      %p152 = scmp.eq.s32.totalorder %s27, 0
      %p153 = por %p151, %p152
      %p154 = scmp.ne.s32.totalorder %s142, %s143
      %p155 = scmp.eq.s32.totalorder %s28, 1
      %p156 = por %p154, %p155
      %p158 = scmp.ne.s32.totalorder %s143, %s157
      %p159 = scmp.eq.s32.totalorder %s28, 0
      %p160 = por %p158, %p159
      %s162 = sadd.s32 %s161, 1
      %p165 = scmp.eq.s32.totalorder %s22, 1
      %p166 = scmp.ne.s32.totalorder %s161, %s163
      %p167 = scmp.eq.s32.totalorder %s22, 0
      %p168 = por %p166, %p167
      %p169 = scmp.ne.s32.totalorder %s161, %s163
      %p170 = scmp.eq.s32.totalorder %s27, 1
      %p171 = por %p169, %p170
      %p172 = scmp.ne.s32.totalorder %s163, %s164
      %p173 = scmp.eq.s32.totalorder %s27, 0
      %p174 = por %p172, %p173
      %p175 = scmp.ne.s32.totalorder %s163, %s164
      %p176 = scmp.eq.s32.totalorder %s28, 1
      %p177 = por %p175, %p176
      %p179 = scmp.ne.s32.totalorder %s164, %s178
      %p180 = scmp.eq.s32.totalorder %s28, 0
      %p181 = por %p179, %p180
      %s182 = ssub.s32 %s22, %s29
      %p183 = scmp.eq.s32.totalorder %s182, 0
      %s185 = sadd.s32 %s184, 1
      %s186 = scalar_select %p183, %s184, %s185
      %p189 = pneg %p183
      %p190 = scmp.eq.s32.totalorder %s22, 1
      %p191 = por %p189, %p190
      %p192 = scmp.ne.s32.totalorder %s184, %s187
      %p193 = scmp.eq.s32.totalorder %s22, 0
      %p194 = por %p192, %p193
      %p195 = scmp.ne.s32.totalorder %s184, %s187
      %p196 = scmp.eq.s32.totalorder %s27, 1
      %p197 = por %p195, %p196
      %p198 = scmp.ne.s32.totalorder %s187, %s188
      %p199 = scmp.eq.s32.totalorder %s27, 0
      %p200 = por %p198, %p199
      %p201 = scmp.ne.s32.totalorder %s187, %s188
      %p202 = scmp.eq.s32.totalorder %s28, 1
      %p203 = por %p201, %p202
      %p205 = scmp.ne.s32.totalorder %s188, %s204
      %p206 = scmp.eq.s32.totalorder %s28, 0
      %p207 = por %p205, %p206
      %p208 = scmp.le.s32.totalorder 1, %s22
      %p209 = scmp.lt.s32.totalorder %s22, 3
      %p210 = pnand %p208, %p209
      %p211 = pneg %p210
      // Predicated region
      $region9: #{stage_up_forward.1} parent=5 // pred_check
        _
      $region10: #{stage_up_forward.1} parent=5 // pred_check_branch
        %213 = sbr.rel (%p210) target = $region12
      $region11: #{stage_up_forward.1} parent=5 // pred_region
        %s214 = ssub.s32 %s22, 1
        // Predicated region
        $region13: #{stage_up_forward.1} parent=11 // pred_check
          %p215 = pneg %p69
        $region14: #{stage_up_forward.1} parent=11 // pred_check_branch
          %217 = sbr.rel (%p215) target = $region16
        $region15: #{stage_up_forward.1} parent=11 // pred_region
          %s219 = ssub.s32 576, 576
          %220 = vsyncadd [#allocation8], %s219
          %s221 = sshll.u32 [#allocation7], 4
          %s222 = int_to_ptr.vmem [resolvable:$true] %s221
          %227 = dma.hbm_to_vmem [thread:$0]  %s1, 576, %s222, [#allocation8], 64, 64, 4
        $region16: #{stage_up_forward.1} parent=11 // pred_fallthru
          _
        // Predicated region
        $region17: #{stage_up_forward.1} parent=11 // pred_check
          %p228 = pneg %p90
        $region18: #{stage_up_forward.1} parent=11 // pred_check_branch
          %230 = sbr.rel (%p228) target = $region20
        $region19: #{stage_up_forward.1} parent=11 // pred_region
          %s232 = ssub.s32 16, 16
          %233 = vsyncadd [#allocation8], %s232
          %s235 = sshll.u32 [#allocation9], 4
          %s236 = int_to_ptr.vmem [resolvable:$true] %s235
          %238 = dma.hbm_to_vmem [thread:$0]  %s2, 16, %s236, [#allocation8]
        $region20: #{stage_up_forward.1} parent=11 // pred_fallthru
          _
        // Predicated region
        $region21: #{stage_up_forward.1} parent=11 // pred_check
          %p239 = pneg %p111
        $region22: #{stage_up_forward.1} parent=11 // pred_check_branch
          %241 = sbr.rel (%p239) target = $region24
        $region23: #{stage_up_forward.1} parent=11 // pred_region
          %s243 = ssub.s32 320, 320
          %244 = vsyncadd [#allocation11], %s243
          %s245 = sshll.u32 [#allocation10], 4
          %s246 = int_to_ptr.vmem [resolvable:$true] %s245
          %251 = dma.hbm_to_vmem [thread:$0]  %s3, 320, %s246, [#allocation11], 64, 64, 4
        $region24: #{stage_up_forward.1} parent=11 // pred_fallthru
          _
        // Predicated region
        $region25: #{stage_up_forward.1} parent=11 // pred_check
          %p252 = pneg %p132
        $region26: #{stage_up_forward.1} parent=11 // pred_check_branch
          %254 = sbr.rel (%p252) target = $region28
        $region27: #{stage_up_forward.1} parent=11 // pred_region
          %s256 = ssub.s32 16, 16
          %257 = vsyncadd [#allocation11], %s256
          %s259 = sshll.u32 [#allocation12], 4
          %s260 = int_to_ptr.vmem [resolvable:$true] %s259
          %262 = dma.hbm_to_vmem [thread:$0]  %s4, 16, %s260, [#allocation11]
        $region28: #{stage_up_forward.1} parent=11 // pred_fallthru
          _
        // Predicated region
        $region29: #{stage_up_forward.1} parent=11 // pred_check
          %p263 = pneg %p153
        $region30: #{stage_up_forward.1} parent=11 // pred_check_branch
          %265 = sbr.rel (%p263) target = $region32
        $region31: #{stage_up_forward.1} parent=11 // pred_region
          %s267 = ssub.s32 128, 128
          %268 = vsyncadd [#allocation14], %s267
          %s269 = sshll.u32 [#allocation13], 4
          %s270 = int_to_ptr.vmem [resolvable:$true] %s269
          %275 = dma.hbm_to_vmem [thread:$0]  %s5, 128, %s270, [#allocation14], 64, 64, 4
        $region32: #{stage_up_forward.1} parent=11 // pred_fallthru
          _
        // Predicated region
        $region33: #{stage_up_forward.1} parent=11 // pred_check
          %p276 = pneg %p174
        $region34: #{stage_up_forward.1} parent=11 // pred_check_branch
          %278 = sbr.rel (%p276) target = $region36
        $region35: #{stage_up_forward.1} parent=11 // pred_region
          %s280 = ssub.s32 256, 256
          %281 = vsyncadd [#allocation14], %s280
          %s282 = sshll.u32 [#allocation15], 4
          %s283 = int_to_ptr.vmem [resolvable:$true] %s282
          %288 = dma.hbm_to_vmem [thread:$0]  %s6, 256, %s283, [#allocation14], 128, 128, 8
        $region36: #{stage_up_forward.1} parent=11 // pred_fallthru
          _
      $region12: #{stage_up_forward.1} parent=5 // pred_fallthru
        _
      %p289 = scmp.lt.s32.totalorder %s22, 2
      // Predicated region
      $region37: #{stage_up_forward.1} parent=5 // pred_check
        %p290 = pneg %p289
      $region38: #{stage_up_forward.1} parent=5 // pred_check_branch
        %292 = sbr.rel (%p290) target = $region40
      $region39: #{stage_up_forward.1} parent=5 // pred_region
        // Predicated region
        $region41: #{stage_up_forward.1} parent=39 // pred_check
          %p293 = pneg %p42
        $region42: #{stage_up_forward.1} parent=39 // pred_check_branch
          %295 = sbr.rel (%p293) target = $region44
        $region43: #{stage_up_forward.1} parent=39 // pred_region
          %s296 = sand.u32 %s32, 1
          %s297 = scalar_lea.sflag [#allocation5], %s296
          %s298 = sand.u32 %s32, 1
          %s299 = smul.addr %s298, 256
          %s300 = scalar_lea.vmem [#allocation4], %s299
          %s302 = ssub.s32 4096, 4096
          %303 = vsyncadd %s297, %s302
          %s304 = smul.addr %s22, 32
          %s305 = smul.addr %s304, 128
          %s306 = scalar_lea.hbm %s0, %s305
          %s307 = sshll.u32 %s300, 4
          %s308 = int_to_ptr.vmem [resolvable:$true] %s307
          %313 = dma.hbm_to_vmem [thread:$0]  %s306, 4096, %s308, %s297, 128, 128, 8
        $region44: #{stage_up_forward.1} parent=39 // pred_fallthru
          _
      $region40: #{stage_up_forward.1} parent=5 // pred_fallthru
        _
      %p314 = scmp.le.s32.totalorder 1, %s22
      %p315 = scmp.lt.s32.totalorder %s22, 3
      %p316 = pnand %p314, %p315
      %p317 = pneg %p316
      // Predicated region
      $region45: #{stage_up_forward.1} parent=5 // pred_check
        _
      $region46: #{stage_up_forward.1} parent=5 // pred_check_branch
        %319 = sbr.rel (%p316) target = $region48
      $region47: #{stage_up_forward.1} parent=5 // pred_region
        %s320 = ssub.s32 %s22, 1
        %s321 = sand.u32 %s35, 1
        %s322 = scalar_lea.sflag [#allocation5], %s321
        %s323 = sand.u32 %s35, 1
        %s324 = smul.addr %s323, 256
        %s325 = scalar_lea.vmem [#allocation4], %s324
        // Predicated region
        $region49: #{stage_up_forward.1} parent=47 // pred_check
          %p326 = pneg %p48
        $region50: #{stage_up_forward.1} parent=47 // pred_check_branch
          %328 = sbr.rel (%p326) target = $region52
        $region51: #{stage_up_forward.1} parent=47 // pred_region
          %329 = dma.done %s322, 4096
        $region52: #{stage_up_forward.1} parent=47 // pred_fallthru
          _
        // Predicated region
        $region53: #{stage_up_forward.1} parent=47 // pred_check
          %p330 = pneg %p69
        $region54: #{stage_up_forward.1} parent=47 // pred_check_branch
          %332 = sbr.rel (%p330) target = $region56
        $region55: #{stage_up_forward.1} parent=47 // pred_region
          %333 = dma.done [#allocation8], 576
        $region56: #{stage_up_forward.1} parent=47 // pred_fallthru
          _
        // Predicated region
        $region57: #{stage_up_forward.1} parent=47 // pred_check
          %p334 = pneg %p90
        $region58: #{stage_up_forward.1} parent=47 // pred_check_branch
          %336 = sbr.rel (%p334) target = $region60
        $region59: #{stage_up_forward.1} parent=47 // pred_region
          %337 = dma.done [#allocation8], 16
        $region60: #{stage_up_forward.1} parent=47 // pred_fallthru
          _
        // Predicated region
        $region61: #{stage_up_forward.1} parent=47 // pred_check
          %p338 = pneg %p111
        $region62: #{stage_up_forward.1} parent=47 // pred_check_branch
          %340 = sbr.rel (%p338) target = $region64
        $region63: #{stage_up_forward.1} parent=47 // pred_region
          %341 = dma.done [#allocation11], 320
        $region64: #{stage_up_forward.1} parent=47 // pred_fallthru
          _
        // Predicated region
        $region65: #{stage_up_forward.1} parent=47 // pred_check
          %p342 = pneg %p132
        $region66: #{stage_up_forward.1} parent=47 // pred_check_branch
          %344 = sbr.rel (%p342) target = $region68
        $region67: #{stage_up_forward.1} parent=47 // pred_region
          %345 = dma.done [#allocation11], 16
        $region68: #{stage_up_forward.1} parent=47 // pred_fallthru
          _
        // Predicated region
        $region69: #{stage_up_forward.1} parent=47 // pred_check
          %p346 = pneg %p153
        $region70: #{stage_up_forward.1} parent=47 // pred_check_branch
          %348 = sbr.rel (%p346) target = $region72
        $region71: #{stage_up_forward.1} parent=47 // pred_region
          %349 = dma.done [#allocation14], 128
        $region72: #{stage_up_forward.1} parent=47 // pred_fallthru
          _
        // Predicated region
        $region73: #{stage_up_forward.1} parent=47 // pred_check
          %p350 = pneg %p174
        $region74: #{stage_up_forward.1} parent=47 // pred_check_branch
          %352 = sbr.rel (%p350) target = $region76
        $region75: #{stage_up_forward.1} parent=47 // pred_region
          %353 = dma.done [#allocation14], 256
        $region76: #{stage_up_forward.1} parent=47 // pred_fallthru
          _
        %s354 = sand.u32 %s35, 1
        %s355 = scalar_lea.sflag [#allocation5], %s354
        %s356 = sand.u32 %s35, 1
        %s357 = smul.addr %s356, 256
        %s358 = scalar_lea.vmem [#allocation4], %s357
        %p359 = pneg %p48
        %p360 = pneg %p45
        %p361 = pneg %p69
        %p362 = pneg %p66
        %p363 = pneg %p90
        %p364 = pneg %p87
        %p365 = pneg %p111
        %p366 = pneg %p108
        %p367 = pneg %p132
        %p368 = pneg %p129
        %p369 = pneg %p153
        %p370 = pneg %p150
        %p371 = pneg %p174
        %p372 = pneg %p171
        %p373 = pneg %p200
        %p374 = pneg %p197
        %s375 = sand.u32 %s187, 1
        %s376 = scalar_lea.sflag [#allocation6], %s375
        %s377 = sand.u32 %s187, 1
        %s378 = smul.addr %s377, 32
        %s379 = scalar_lea.vmem [#allocation16], %s378
        %vm381 = vcmask 60416
        %382 = vst.msk [vmem:[#allocation2] sm:$0xf] %vm381, 0
        %383 = vst.msk [vmem:[#allocation2 + $0x4] sm:$0xf] %vm381, 0
        %vm384 = vcmask 57344
        %385 = vst.msk [vmem:[#allocation2 + $0x8] sm:$0x1] %vm384, 0
        %s386 = scalar_lea.vmem [#allocation2], 204
        %387 = vst.msk [vmem:[%s386] sm:$0xf] %vm381, 0
        %388 = vst.msk [vmem:[%s386 + $0x4] sm:$0xf] %vm381, 0
        %389 = vst.msk [vmem:[%s386 + $0x8] sm:$0x1] %vm384, 0
        %vm390 = vcmask 57344
        %vm391 = vsmask.f32 256
        %vm392 = vmand %vm390, %vm391
        %v393 = vld [vmem:[#allocation2] sm:$0x1]
        %v394 = vsel %vm392, 0, %v393
        %395 = vst [vmem:[#allocation2] sm:$0x1] %v394
        %v396 = vld [vmem:[#allocation2 + $0xc] sm:$0x1]
        %v397 = vsel %vm392, 0, %v396
        %398 = vst [vmem:[#allocation2 + $0xc] sm:$0x1] %v397
        %v399 = vld [vmem:[#allocation2 + $0x18] sm:$0x1]
        %v400 = vsel %vm392, 0, %v399
        %401 = vst [vmem:[#allocation2 + $0x18] sm:$0x1] %v400
        %v402 = vld [vmem:[#allocation2 + $0x24] sm:$0x1]
        %v403 = vsel %vm392, 0, %v402
        %404 = vst [vmem:[#allocation2 + $0x24] sm:$0x1] %v403
        %v405 = vld [vmem:[#allocation2 + $0x30] sm:$0x1]
        %v406 = vsel %vm392, 0, %v405
        %407 = vst [vmem:[#allocation2 + $0x30] sm:$0x1] %v406
        %v408 = vld [vmem:[#allocation2 + $0x3c] sm:$0x1]
        %v409 = vsel %vm392, 0, %v408
        %410 = vst [vmem:[#allocation2 + $0x3c] sm:$0x1] %v409
        %v411 = vld [vmem:[#allocation2 + $0x48] sm:$0x1]
        %v412 = vsel %vm392, 0, %v411
        %413 = vst [vmem:[#allocation2 + $0x48] sm:$0x1] %v412
        %v414 = vld [vmem:[#allocation2 + $0x54] sm:$0x1]
        %v415 = vsel %vm392, 0, %v414
        %416 = vst [vmem:[#allocation2 + $0x54] sm:$0x1] %v415
        %v417 = vld [vmem:[#allocation2 + $0x60] sm:$0x1]
        %v418 = vsel %vm392, 0, %v417
        %419 = vst [vmem:[#allocation2 + $0x60] sm:$0x1] %v418
        %v420 = vld [vmem:[#allocation2 + $0x6c] sm:$0x1]
        %v421 = vsel %vm392, 0, %v420
        %422 = vst [vmem:[#allocation2 + $0x6c] sm:$0x1] %v421
        %v423 = vld [vmem:[#allocation2 + $0x78] sm:$0x1]
        %v424 = vsel %vm392, 0, %v423
        %425 = vst [vmem:[#allocation2 + $0x78] sm:$0x1] %v424
        %v426 = vld [vmem:[#allocation2 + $0x84] sm:$0x1]
        %v427 = vsel %vm392, 0, %v426
        %428 = vst [vmem:[#allocation2 + $0x84] sm:$0x1] %v427
        %v429 = vld [vmem:[#allocation2 + $0x90] sm:$0x1]
        %v430 = vsel %vm392, 0, %v429
        %431 = vst [vmem:[#allocation2 + $0x90] sm:$0x1] %v430
        %v432 = vld [vmem:[#allocation2 + $0x9c] sm:$0x1]
        %v433 = vsel %vm392, 0, %v432
        %434 = vst [vmem:[#allocation2 + $0x9c] sm:$0x1] %v433
        %v435 = vld [vmem:[#allocation2 + $0xa8] sm:$0x1]
        %v436 = vsel %vm392, 0, %v435
        %437 = vst [vmem:[#allocation2 + $0xa8] sm:$0x1] %v436
        %v438 = vld [vmem:[#allocation2 + $0xb4] sm:$0x1]
        %v439 = vsel %vm392, 0, %v438
        %440 = vst [vmem:[#allocation2 + $0xb4] sm:$0x1] %v439
        %v441 = vld [vmem:[#allocation2 + $0xc0] sm:$0x1]
        %v442 = vsel %vm392, 0, %v441
        %443 = vst [vmem:[#allocation2 + $0xc0] sm:$0x1] %v442
        %v444 = vld [vmem:[#allocation2 + $0xcc] sm:$0x1]
        %v445 = vsel %vm392, 0, %v444
        %446 = vst [vmem:[#allocation2 + $0xcc] sm:$0x1] %v445
        %vm447 = vsmask.f32 7938
        %vm448 = vmand %vm390, %vm447
        %v449 = vld [vmem:[#allocation2 + $0x8] sm:$0x1]
        %v450 = vsel %vm448, 0, %v449
        %451 = vst [vmem:[#allocation2 + $0x8] sm:$0x1] %v450
        %v452 = vld [vmem:[#allocation2 + $0x14] sm:$0x1]
        %v453 = vsel %vm448, 0, %v452
        %454 = vst [vmem:[#allocation2 + $0x14] sm:$0x1] %v453
        %v455 = vld [vmem:[#allocation2 + $0x20] sm:$0x1]
        %v456 = vsel %vm448, 0, %v455
        %457 = vst [vmem:[#allocation2 + $0x20] sm:$0x1] %v456
        %v458 = vld [vmem:[#allocation2 + $0x2c] sm:$0x1]
        %v459 = vsel %vm448, 0, %v458
        %460 = vst [vmem:[#allocation2 + $0x2c] sm:$0x1] %v459
        %v461 = vld [vmem:[#allocation2 + $0x38] sm:$0x1]
        %v462 = vsel %vm448, 0, %v461
        %463 = vst [vmem:[#allocation2 + $0x38] sm:$0x1] %v462
        %v464 = vld [vmem:[#allocation2 + $0x44] sm:$0x1]
        %v465 = vsel %vm448, 0, %v464
        %466 = vst [vmem:[#allocation2 + $0x44] sm:$0x1] %v465
        %v467 = vld [vmem:[#allocation2 + $0x50] sm:$0x1]
        %v468 = vsel %vm448, 0, %v467
        %469 = vst [vmem:[#allocation2 + $0x50] sm:$0x1] %v468
        %v470 = vld [vmem:[#allocation2 + $0x5c] sm:$0x1]
        %v471 = vsel %vm448, 0, %v470
        %472 = vst [vmem:[#allocation2 + $0x5c] sm:$0x1] %v471
        %v473 = vld [vmem:[#allocation2 + $0x68] sm:$0x1]
        %v474 = vsel %vm448, 0, %v473
        %475 = vst [vmem:[#allocation2 + $0x68] sm:$0x1] %v474
        %v476 = vld [vmem:[#allocation2 + $0x74] sm:$0x1]
        %v477 = vsel %vm448, 0, %v476
        %478 = vst [vmem:[#allocation2 + $0x74] sm:$0x1] %v477
        %v479 = vld [vmem:[#allocation2 + $0x80] sm:$0x1]
        %v480 = vsel %vm448, 0, %v479
        %481 = vst [vmem:[#allocation2 + $0x80] sm:$0x1] %v480
        %v482 = vld [vmem:[#allocation2 + $0x8c] sm:$0x1]
        %v483 = vsel %vm448, 0, %v482
        %484 = vst [vmem:[#allocation2 + $0x8c] sm:$0x1] %v483
        %v485 = vld [vmem:[#allocation2 + $0x98] sm:$0x1]
        %v486 = vsel %vm448, 0, %v485
        %487 = vst [vmem:[#allocation2 + $0x98] sm:$0x1] %v486
        %v488 = vld [vmem:[#allocation2 + $0xa4] sm:$0x1]
        %v489 = vsel %vm448, 0, %v488
        %490 = vst [vmem:[#allocation2 + $0xa4] sm:$0x1] %v489
        %v491 = vld [vmem:[#allocation2 + $0xb0] sm:$0x1]
        %v492 = vsel %vm448, 0, %v491
        %493 = vst [vmem:[#allocation2 + $0xb0] sm:$0x1] %v492
        %v494 = vld [vmem:[#allocation2 + $0xbc] sm:$0x1]
        %v495 = vsel %vm448, 0, %v494
        %496 = vst [vmem:[#allocation2 + $0xbc] sm:$0x1] %v495
        %v497 = vld [vmem:[#allocation2 + $0xc8] sm:$0x1]
        %v498 = vsel %vm448, 0, %v497
        %499 = vst [vmem:[#allocation2 + $0xc8] sm:$0x1] %v498
        %v500 = vld [vmem:[#allocation2 + $0xd4] sm:$0x1]
        %v501 = vsel %vm448, 0, %v500
        %502 = vst [vmem:[#allocation2 + $0xd4] sm:$0x1] %v501
        %v503 = vld [vmem:[%s325] sm:$0xff]
        %v504 = vld [vmem:[%s325 + $0x8] sm:$0xff]
        %v505 = vld [vmem:[%s325 + $0x10] sm:$0xff]
        %v506 = vld [vmem:[%s325 + $0x18] sm:$0xff]
        %v507 = vld [vmem:[%s325 + $0x20] sm:$0xff]
        %v508 = vld [vmem:[%s325 + $0x28] sm:$0xff]
        %v509 = vld [vmem:[%s325 + $0x30] sm:$0xff]
        %v510 = vld [vmem:[%s325 + $0x38] sm:$0xff]
        %v511 = vld [vmem:[%s325 + $0x40] sm:$0xff]
        %v512 = vld [vmem:[%s325 + $0x48] sm:$0xff]
        %v513 = vld [vmem:[%s325 + $0x50] sm:$0xff]
        %v514 = vld [vmem:[%s325 + $0x58] sm:$0xff]
        %v515 = vld [vmem:[%s325 + $0x60] sm:$0xff]
        %v516 = vld [vmem:[%s325 + $0x68] sm:$0xff]
        %v517 = vld [vmem:[%s325 + $0x70] sm:$0xff]
        %v518 = vld [vmem:[%s325 + $0x78] sm:$0xff]
        %v519 = vld [vmem:[%s325 + $0x80] sm:$0xff]
        %v520 = vld [vmem:[%s325 + $0x88] sm:$0xff]
        %v521 = vld [vmem:[%s325 + $0x90] sm:$0xff]
        %v522 = vld [vmem:[%s325 + $0x98] sm:$0xff]
        %v523 = vld [vmem:[%s325 + $0xa0] sm:$0xff]
        %v524 = vld [vmem:[%s325 + $0xa8] sm:$0xff]
        %v525 = vld [vmem:[%s325 + $0xb0] sm:$0xff]
        %v526 = vld [vmem:[%s325 + $0xb8] sm:$0xff]
        %v527 = vld [vmem:[%s325 + $0xc0] sm:$0xff]
        %v528 = vld [vmem:[%s325 + $0xc8] sm:$0xff]
        %v529 = vld [vmem:[%s325 + $0xd0] sm:$0xff]
        %v530 = vld [vmem:[%s325 + $0xd8] sm:$0xff]
        %v531 = vld [vmem:[%s325 + $0xe0] sm:$0xff]
        %v532 = vld [vmem:[%s325 + $0xe8] sm:$0xff]
        %v533 = vld [vmem:[%s325 + $0xf0] sm:$0xff]
        %v534 = vld [vmem:[%s325 + $0xf8] sm:$0xff]
        %v535 = vpack.c.bf16 %v504, %v503
        %v536 = vpack.c.bf16 %v506, %v505
        %v537 = vpack.c.bf16 %v508, %v507
        %v538 = vpack.c.bf16 %v510, %v509
        %v539 = vpack.c.bf16 %v512, %v511
        %v540 = vpack.c.bf16 %v514, %v513
        %v541 = vpack.c.bf16 %v516, %v515
        %v542 = vpack.c.bf16 %v518, %v517
        %v543 = vpack.c.bf16 %v520, %v519
        %v544 = vpack.c.bf16 %v522, %v521
        %v545 = vpack.c.bf16 %v524, %v523
        %v546 = vpack.c.bf16 %v526, %v525
        %v547 = vpack.c.bf16 %v528, %v527
        %v548 = vpack.c.bf16 %v530, %v529
        %v549 = vpack.c.bf16 %v532, %v531
        %v550 = vpack.c.bf16 %v534, %v533
        %v567 = vunpack.c.l.b16 %v535
        %v568 = vunpack.c.h.b16 %v535
        %v569 = vunpack.c.l.b16 %v536
        %v570 = vunpack.c.h.b16 %v536
        %v571 = vunpack.c.l.b16 %v537
        %v572 = vunpack.c.h.b16 %v537
        %v573 = vunpack.c.l.b16 %v538
        %v574 = vunpack.c.h.b16 %v538
        %v575 = vunpack.c.l.b16 %v539
        %v576 = vunpack.c.h.b16 %v539
        %v577 = vunpack.c.l.b16 %v540
        %v578 = vunpack.c.h.b16 %v540
        %v579 = vunpack.c.l.b16 %v541
        %v580 = vunpack.c.h.b16 %v541
        %v581 = vunpack.c.l.b16 %v542
        %v582 = vunpack.c.h.b16 %v542
        %v583 = vunpack.c.l.b16 %v543
        %v584 = vunpack.c.h.b16 %v543
        %v585 = vunpack.c.l.b16 %v544
        %v586 = vunpack.c.h.b16 %v544
        %v587 = vunpack.c.l.b16 %v545
        %v588 = vunpack.c.h.b16 %v545
        %v589 = vunpack.c.l.b16 %v546
        %v590 = vunpack.c.h.b16 %v546
        %v591 = vunpack.c.l.b16 %v547
        %v592 = vunpack.c.h.b16 %v547
        %v593 = vunpack.c.l.b16 %v548
        %v594 = vunpack.c.h.b16 %v548
        %v595 = vunpack.c.l.b16 %v549
        %v596 = vunpack.c.h.b16 %v549
        %v597 = vunpack.c.l.b16 %v550
        %v598 = vunpack.c.h.b16 %v550
        %v599 = vpack.c.b16 %v567, %v567
        %v600 = vpack.c.b16 %v568, %v568
        %v601 = vpack.c.b16 %v569, %v569
        %v602 = vpack.c.b16 %v570, %v570
        %v603 = vpack.c.b16 %v571, %v571
        %v604 = vpack.c.b16 %v572, %v572
        %v605 = vpack.c.b16 %v573, %v573
        %v606 = vpack.c.b16 %v574, %v574
        %v607 = vpack.c.b16 %v575, %v575
        %v608 = vpack.c.b16 %v576, %v576
        %v609 = vpack.c.b16 %v577, %v577
        %v610 = vpack.c.b16 %v578, %v578
        %v611 = vpack.c.b16 %v579, %v579
        %v612 = vpack.c.b16 %v580, %v580
        %v613 = vpack.c.b16 %v581, %v581
        %v614 = vpack.c.b16 %v582, %v582
        %v615 = vpack.c.b16 %v583, %v583
        %v616 = vpack.c.b16 %v584, %v584
        %v617 = vpack.c.b16 %v585, %v585
        %v618 = vpack.c.b16 %v586, %v586
        %v619 = vpack.c.b16 %v587, %v587
        %v620 = vpack.c.b16 %v588, %v588
        %v621 = vpack.c.b16 %v589, %v589
        %v622 = vpack.c.b16 %v590, %v590
        %v623 = vpack.c.b16 %v591, %v591
        %v624 = vpack.c.b16 %v592, %v592
        %v625 = vpack.c.b16 %v593, %v593
        %v626 = vpack.c.b16 %v594, %v594
        %v627 = vpack.c.b16 %v595, %v595
        %v628 = vpack.c.b16 %v596, %v596
        %v629 = vpack.c.b16 %v597, %v597
        %v630 = vpack.c.b16 %v598, %v598
        %vm631 = vsmask.f32 4368
        %vm632 = vmor %vm391, %vm631
        %v634 = vshrl.u32 %v599, 16
        %v636 = vrot.slane %v634, 7
        %v637 = vshll.u32 %v599, 16
        %v639 = vor.u32 %v636, %v637
        %v640 = vrot.slane %v636, 4
        %v642 = vshrl.u32 %v600, 16
        %v644 = vrot.slane %v642, 7
        %v645 = vshll.u32 %v600, 16
        %v647 = vor.u32 %v644, %v645
        %v648 = vsel %vm632, %v640, %v647
        %v649 = vrot.slane %v644, 4
        %v651 = vshrl.u32 %v601, 16
        %v653 = vrot.slane %v651, 7
        %v654 = vshll.u32 %v601, 16
        %v656 = vor.u32 %v653, %v654
        %v657 = vrot.slane %v653, 4
        %v659 = vshrl.u32 %v602, 16
        %v661 = vrot.slane %v659, 7
        %v662 = vshll.u32 %v602, 16
        %v664 = vor.u32 %v661, %v662
        %v665 = vsel %vm632, %v657, %v664
        %v666 = vrot.slane %v661, 4
        %v668 = vshrl.u32 %v603, 16
        %v670 = vrot.slane %v668, 7
        %v671 = vshll.u32 %v603, 16
        %v673 = vor.u32 %v670, %v671
        %v674 = vrot.slane %v670, 4
        %v676 = vshrl.u32 %v604, 16
        %v678 = vrot.slane %v676, 7
        %v679 = vshll.u32 %v604, 16
        %v681 = vor.u32 %v678, %v679
        %v682 = vsel %vm632, %v674, %v681
        %v683 = vrot.slane %v678, 4
        %v685 = vshrl.u32 %v605, 16
        %v687 = vrot.slane %v685, 7
        %v688 = vshll.u32 %v605, 16
        %v690 = vor.u32 %v687, %v688
        %v691 = vrot.slane %v687, 4
        %v693 = vshrl.u32 %v606, 16
        %v695 = vrot.slane %v693, 7
        %v696 = vshll.u32 %v606, 16
        %v698 = vor.u32 %v695, %v696
        %v699 = vsel %vm632, %v691, %v698
        %v700 = vrot.slane %v695, 4
        %v702 = vshrl.u32 %v607, 16
        %v704 = vrot.slane %v702, 7
        %v705 = vshll.u32 %v607, 16
        %v707 = vor.u32 %v704, %v705
        %v708 = vrot.slane %v704, 4
        %v710 = vshrl.u32 %v608, 16
        %v712 = vrot.slane %v710, 7
        %v713 = vshll.u32 %v608, 16
        %v715 = vor.u32 %v712, %v713
        %v716 = vsel %vm632, %v708, %v715
        %v717 = vrot.slane %v712, 4
        %v719 = vshrl.u32 %v609, 16
        %v721 = vrot.slane %v719, 7
        %v722 = vshll.u32 %v609, 16
        %v724 = vor.u32 %v721, %v722
        %v725 = vrot.slane %v721, 4
        %v727 = vshrl.u32 %v610, 16
        %v729 = vrot.slane %v727, 7
        %v730 = vshll.u32 %v610, 16
        %v732 = vor.u32 %v729, %v730
        %v733 = vsel %vm632, %v725, %v732
        %v734 = vrot.slane %v729, 4
        %v736 = vshrl.u32 %v611, 16
        %v738 = vrot.slane %v736, 7
        %v739 = vshll.u32 %v611, 16
        %v741 = vor.u32 %v738, %v739
        %v742 = vrot.slane %v738, 4
        %v744 = vshrl.u32 %v612, 16
        %v746 = vrot.slane %v744, 7
        %v747 = vshll.u32 %v612, 16
        %v749 = vor.u32 %v746, %v747
        %v750 = vsel %vm632, %v742, %v749
        %v751 = vrot.slane %v746, 4
        %v753 = vshrl.u32 %v613, 16
        %v755 = vrot.slane %v753, 7
        %v756 = vshll.u32 %v613, 16
        %v758 = vor.u32 %v755, %v756
        %v759 = vrot.slane %v755, 4
        %v761 = vshrl.u32 %v614, 16
        %v763 = vrot.slane %v761, 7
        %v764 = vshll.u32 %v614, 16
        %v766 = vor.u32 %v763, %v764
        %v767 = vsel %vm632, %v759, %v766
        %v768 = vrot.slane %v763, 4
        %v770 = vshrl.u32 %v615, 16
        %v772 = vrot.slane %v770, 7
        %v773 = vshll.u32 %v615, 16
        %v775 = vor.u32 %v772, %v773
        %v776 = vrot.slane %v772, 4
        %v778 = vshrl.u32 %v616, 16
        %v780 = vrot.slane %v778, 7
        %v781 = vshll.u32 %v616, 16
        %v783 = vor.u32 %v780, %v781
        %v784 = vsel %vm632, %v776, %v783
        %v785 = vrot.slane %v780, 4
        %v787 = vshrl.u32 %v617, 16
        %v789 = vrot.slane %v787, 7
        %v790 = vshll.u32 %v617, 16
        %v792 = vor.u32 %v789, %v790
        %v793 = vrot.slane %v789, 4
        %v795 = vshrl.u32 %v618, 16
        %v797 = vrot.slane %v795, 7
        %v798 = vshll.u32 %v618, 16
        %v800 = vor.u32 %v797, %v798
        %v801 = vsel %vm632, %v793, %v800
        %v802 = vrot.slane %v797, 4
        %v804 = vshrl.u32 %v619, 16
        %v806 = vrot.slane %v804, 7
        %v807 = vshll.u32 %v619, 16
        %v809 = vor.u32 %v806, %v807
        %v810 = vrot.slane %v806, 4
        %v812 = vshrl.u32 %v620, 16
        %v814 = vrot.slane %v812, 7
        %v815 = vshll.u32 %v620, 16
        %v817 = vor.u32 %v814, %v815
        %v818 = vsel %vm632, %v810, %v817
        %v819 = vrot.slane %v814, 4
        %v821 = vshrl.u32 %v621, 16
        %v823 = vrot.slane %v821, 7
        %v824 = vshll.u32 %v621, 16
        %v826 = vor.u32 %v823, %v824
        %v827 = vrot.slane %v823, 4
        %v829 = vshrl.u32 %v622, 16
        %v831 = vrot.slane %v829, 7
        %v832 = vshll.u32 %v622, 16
        %v834 = vor.u32 %v831, %v832
        %v835 = vsel %vm632, %v827, %v834
        %v836 = vrot.slane %v831, 4
        %v838 = vshrl.u32 %v623, 16
        %v840 = vrot.slane %v838, 7
        %v841 = vshll.u32 %v623, 16
        %v843 = vor.u32 %v840, %v841
        %v844 = vrot.slane %v840, 4
        %v846 = vshrl.u32 %v624, 16
        %v848 = vrot.slane %v846, 7
        %v849 = vshll.u32 %v624, 16
        %v851 = vor.u32 %v848, %v849
        %v852 = vsel %vm632, %v844, %v851
        %v853 = vrot.slane %v848, 4
        %v855 = vshrl.u32 %v625, 16
        %v857 = vrot.slane %v855, 7
        %v858 = vshll.u32 %v625, 16
        %v860 = vor.u32 %v857, %v858
        %v861 = vrot.slane %v857, 4
        %v863 = vshrl.u32 %v626, 16
        %v865 = vrot.slane %v863, 7
        %v866 = vshll.u32 %v626, 16
        %v868 = vor.u32 %v865, %v866
        %v869 = vsel %vm632, %v861, %v868
        %v870 = vrot.slane %v865, 4
        %v872 = vshrl.u32 %v627, 16
        %v874 = vrot.slane %v872, 7
        %v875 = vshll.u32 %v627, 16
        %v877 = vor.u32 %v874, %v875
        %v878 = vrot.slane %v874, 4
        %v880 = vshrl.u32 %v628, 16
        %v882 = vrot.slane %v880, 7
        %v883 = vshll.u32 %v628, 16
        %v885 = vor.u32 %v882, %v883
        %v886 = vsel %vm632, %v878, %v885
        %v887 = vrot.slane %v882, 4
        %v889 = vshrl.u32 %v629, 16
        %v891 = vrot.slane %v889, 7
        %v892 = vshll.u32 %v629, 16
        %v894 = vor.u32 %v891, %v892
        %v895 = vrot.slane %v891, 4
        %v897 = vshrl.u32 %v630, 16
        %v899 = vrot.slane %v897, 7
        %v900 = vshll.u32 %v630, 16
        %v902 = vor.u32 %v899, %v900
        %v903 = vsel %vm632, %v895, %v902
        %v904 = vrot.slane %v899, 4
        %s953 = scalar_lea.vmem [#allocation2], 12
        %vm954 = vcmask 60416
        %vm955 = vmand %vm954, %vm447
        %v956 = vld [vmem:[%s953] sm:$0xf]
        %v957 = vsel %vm955, %v639, %v956
        %958 = vst [vmem:[%s953] sm:$0xf] %v957
        %959 = vst.msk [vmem:[%s953 + $0x4] sm:$0xf] %vm381, %v648
        %v960 = vld [vmem:[%s953 + $0x8] sm:$0x1]
        %v961 = vsel %vm392, %v649, %v960
        %962 = vst [vmem:[%s953 + $0x8] sm:$0x1] %v961
        %v963 = vld [vmem:[%s953 + $0xc] sm:$0xf]
        %v964 = vsel %vm955, %v656, %v963
        %965 = vst [vmem:[%s953 + $0xc] sm:$0xf] %v964
        %966 = vst.msk [vmem:[%s953 + $0x10] sm:$0xf] %vm381, %v665
        %v967 = vld [vmem:[%s953 + $0x14] sm:$0x1]
        %v968 = vsel %vm392, %v666, %v967
        %969 = vst [vmem:[%s953 + $0x14] sm:$0x1] %v968
        %v970 = vld [vmem:[%s953 + $0x18] sm:$0xf]
        %v971 = vsel %vm955, %v673, %v970
        %972 = vst [vmem:[%s953 + $0x18] sm:$0xf] %v971
        %973 = vst.msk [vmem:[%s953 + $0x1c] sm:$0xf] %vm381, %v682
        %v974 = vld [vmem:[%s953 + $0x20] sm:$0x1]
        %v975 = vsel %vm392, %v683, %v974
        %976 = vst [vmem:[%s953 + $0x20] sm:$0x1] %v975
        %v977 = vld [vmem:[%s953 + $0x24] sm:$0xf]
        %v978 = vsel %vm955, %v690, %v977
        %979 = vst [vmem:[%s953 + $0x24] sm:$0xf] %v978
        %980 = vst.msk [vmem:[%s953 + $0x28] sm:$0xf] %vm381, %v699
        %v981 = vld [vmem:[%s953 + $0x2c] sm:$0x1]
        %v982 = vsel %vm392, %v700, %v981
        %983 = vst [vmem:[%s953 + $0x2c] sm:$0x1] %v982
        %v984 = vld [vmem:[%s953 + $0x30] sm:$0xf]
        %v985 = vsel %vm955, %v707, %v984
        %986 = vst [vmem:[%s953 + $0x30] sm:$0xf] %v985
        %987 = vst.msk [vmem:[%s953 + $0x34] sm:$0xf] %vm381, %v716
        %v988 = vld [vmem:[%s953 + $0x38] sm:$0x1]
        %v989 = vsel %vm392, %v717, %v988
        %990 = vst [vmem:[%s953 + $0x38] sm:$0x1] %v989
        %v991 = vld [vmem:[%s953 + $0x3c] sm:$0xf]
        %v992 = vsel %vm955, %v724, %v991
        %993 = vst [vmem:[%s953 + $0x3c] sm:$0xf] %v992
        %994 = vst.msk [vmem:[%s953 + $0x40] sm:$0xf] %vm381, %v733
        %v995 = vld [vmem:[%s953 + $0x44] sm:$0x1]
        %v996 = vsel %vm392, %v734, %v995
        %997 = vst [vmem:[%s953 + $0x44] sm:$0x1] %v996
        %v998 = vld [vmem:[%s953 + $0x48] sm:$0xf]
        %v999 = vsel %vm955, %v741, %v998
        %1000 = vst [vmem:[%s953 + $0x48] sm:$0xf] %v999
        %1001 = vst.msk [vmem:[%s953 + $0x4c] sm:$0xf] %vm381, %v750
        %v1002 = vld [vmem:[%s953 + $0x50] sm:$0x1]
        %v1003 = vsel %vm392, %v751, %v1002
        %1004 = vst [vmem:[%s953 + $0x50] sm:$0x1] %v1003
        %v1005 = vld [vmem:[%s953 + $0x54] sm:$0xf]
        %v1006 = vsel %vm955, %v758, %v1005
        %1007 = vst [vmem:[%s953 + $0x54] sm:$0xf] %v1006
        %1008 = vst.msk [vmem:[%s953 + $0x58] sm:$0xf] %vm381, %v767
        %v1009 = vld [vmem:[%s953 + $0x5c] sm:$0x1]
        %v1010 = vsel %vm392, %v768, %v1009
        %1011 = vst [vmem:[%s953 + $0x5c] sm:$0x1] %v1010
        %v1012 = vld [vmem:[%s953 + $0x60] sm:$0xf]
        %v1013 = vsel %vm955, %v775, %v1012
        %1014 = vst [vmem:[%s953 + $0x60] sm:$0xf] %v1013
        %1015 = vst.msk [vmem:[%s953 + $0x64] sm:$0xf] %vm381, %v784
        %v1016 = vld [vmem:[%s953 + $0x68] sm:$0x1]
        %v1017 = vsel %vm392, %v785, %v1016
        %1018 = vst [vmem:[%s953 + $0x68] sm:$0x1] %v1017
        %v1019 = vld [vmem:[%s953 + $0x6c] sm:$0xf]
        %v1020 = vsel %vm955, %v792, %v1019
        %1021 = vst [vmem:[%s953 + $0x6c] sm:$0xf] %v1020
        %1022 = vst.msk [vmem:[%s953 + $0x70] sm:$0xf] %vm381, %v801
        %v1023 = vld [vmem:[%s953 + $0x74] sm:$0x1]
        %v1024 = vsel %vm392, %v802, %v1023
        %1025 = vst [vmem:[%s953 + $0x74] sm:$0x1] %v1024
        %v1026 = vld [vmem:[%s953 + $0x78] sm:$0xf]
        %v1027 = vsel %vm955, %v809, %v1026
        %1028 = vst [vmem:[%s953 + $0x78] sm:$0xf] %v1027
        %1029 = vst.msk [vmem:[%s953 + $0x7c] sm:$0xf] %vm381, %v818
        %v1030 = vld [vmem:[%s953 + $0x80] sm:$0x1]
        %v1031 = vsel %vm392, %v819, %v1030
        %1032 = vst [vmem:[%s953 + $0x80] sm:$0x1] %v1031
        %v1033 = vld [vmem:[%s953 + $0x84] sm:$0xf]
        %v1034 = vsel %vm955, %v826, %v1033
        %1035 = vst [vmem:[%s953 + $0x84] sm:$0xf] %v1034
        %1036 = vst.msk [vmem:[%s953 + $0x88] sm:$0xf] %vm381, %v835
        %v1037 = vld [vmem:[%s953 + $0x8c] sm:$0x1]
        %v1038 = vsel %vm392, %v836, %v1037
        %1039 = vst [vmem:[%s953 + $0x8c] sm:$0x1] %v1038
        %v1040 = vld [vmem:[%s953 + $0x90] sm:$0xf]
        %v1041 = vsel %vm955, %v843, %v1040
        %1042 = vst [vmem:[%s953 + $0x90] sm:$0xf] %v1041
        %1043 = vst.msk [vmem:[%s953 + $0x94] sm:$0xf] %vm381, %v852
        %v1044 = vld [vmem:[%s953 + $0x98] sm:$0x1]
        %v1045 = vsel %vm392, %v853, %v1044
        %1046 = vst [vmem:[%s953 + $0x98] sm:$0x1] %v1045
        %v1047 = vld [vmem:[%s953 + $0x9c] sm:$0xf]
        %v1048 = vsel %vm955, %v860, %v1047
        %1049 = vst [vmem:[%s953 + $0x9c] sm:$0xf] %v1048
        %1050 = vst.msk [vmem:[%s953 + $0xa0] sm:$0xf] %vm381, %v869
        %v1051 = vld [vmem:[%s953 + $0xa4] sm:$0x1]
        %v1052 = vsel %vm392, %v870, %v1051
        %1053 = vst [vmem:[%s953 + $0xa4] sm:$0x1] %v1052
        %v1054 = vld [vmem:[%s953 + $0xa8] sm:$0xf]
        %v1055 = vsel %vm955, %v877, %v1054
        %1056 = vst [vmem:[%s953 + $0xa8] sm:$0xf] %v1055
        %1057 = vst.msk [vmem:[%s953 + $0xac] sm:$0xf] %vm381, %v886
        %v1058 = vld [vmem:[%s953 + $0xb0] sm:$0x1]
        %v1059 = vsel %vm392, %v887, %v1058
        %1060 = vst [vmem:[%s953 + $0xb0] sm:$0x1] %v1059
        %v1061 = vld [vmem:[%s953 + $0xb4] sm:$0xf]
        %v1062 = vsel %vm955, %v894, %v1061
        %1063 = vst [vmem:[%s953 + $0xb4] sm:$0xf] %v1062
        %1064 = vst.msk [vmem:[%s953 + $0xb8] sm:$0xf] %vm381, %v903
        %v1065 = vld [vmem:[%s953 + $0xbc] sm:$0x1]
        %v1066 = vsel %vm392, %v904, %v1065
        %1067 = vst [vmem:[%s953 + $0xbc] sm:$0x1] %v1066
        %v1068 = vld [vmem:[#allocation2] sm:$0xf]
        %v1069 = vld [vmem:[#allocation2 + $0x4] sm:$0xf]
        %v1070 = vld [vmem:[#allocation2 + $0xc] sm:$0xf]
        %v1071 = vld [vmem:[#allocation2 + $0x10] sm:$0xf]
        %v1072 = vld [vmem:[#allocation2 + $0x18] sm:$0xf]
        %v1073 = vld [vmem:[#allocation2 + $0x1c] sm:$0xf]
        %v1074 = vld [vmem:[#allocation2 + $0x24] sm:$0xf]
        %v1075 = vld [vmem:[#allocation2 + $0x28] sm:$0xf]
        %v1076 = vld [vmem:[#allocation2 + $0x30] sm:$0xf]
        %v1077 = vld [vmem:[#allocation2 + $0x34] sm:$0xf]
        %v1078 = vld [vmem:[#allocation2 + $0x3c] sm:$0xf]
        %v1079 = vld [vmem:[#allocation2 + $0x40] sm:$0xf]
        %v1080 = vld [vmem:[#allocation2 + $0x48] sm:$0xf]
        %v1081 = vld [vmem:[#allocation2 + $0x4c] sm:$0xf]
        %v1082 = vld [vmem:[#allocation2 + $0x54] sm:$0xf]
        %v1083 = vld [vmem:[#allocation2 + $0x58] sm:$0xf]
        %v1084 = vld [vmem:[#allocation2 + $0x60] sm:$0xf]
        %v1085 = vld [vmem:[#allocation2 + $0x64] sm:$0xf]
        %v1086 = vld [vmem:[#allocation2 + $0x6c] sm:$0xf]
        %v1087 = vld [vmem:[#allocation2 + $0x70] sm:$0xf]
        %v1088 = vld [vmem:[#allocation2 + $0x78] sm:$0xf]
        %v1089 = vld [vmem:[#allocation2 + $0x7c] sm:$0xf]
        %v1090 = vld [vmem:[#allocation2 + $0x84] sm:$0xf]
        %v1091 = vld [vmem:[#allocation2 + $0x88] sm:$0xf]
        %v1092 = vld [vmem:[#allocation2 + $0x90] sm:$0xf]
        %v1093 = vld [vmem:[#allocation2 + $0x94] sm:$0xf]
        %v1094 = vld [vmem:[#allocation2 + $0x9c] sm:$0xf]
        %v1095 = vld [vmem:[#allocation2 + $0xa0] sm:$0xf]
        %v1096 = vld [vmem:[#allocation2 + $0xa8] sm:$0xf]
        %v1097 = vld [vmem:[#allocation2 + $0xac] sm:$0xf]
        %v1098 = vld [vmem:[#allocation2 + $0xb4] sm:$0xf]
        %v1099 = vld [vmem:[#allocation2 + $0xb8] sm:$0xf]
        %v1100 = vld [vmem:[#allocation2 + $0xc0] sm:$0xf]
        %v1101 = vld [vmem:[#allocation2 + $0xc4] sm:$0xf]
        %v1102 = vld [vmem:[#allocation2 + $0xcc] sm:$0xf]
        %v1103 = vld [vmem:[#allocation2 + $0xd0] sm:$0xf]
        %v1104 = vld [vmem:[#allocation2 + $0x8] sm:$0x1]
        %v1105 = vld [vmem:[#allocation2 + $0x14] sm:$0x1]
        %v1106 = vld [vmem:[#allocation2 + $0x20] sm:$0x1]
        %v1107 = vld [vmem:[#allocation2 + $0x2c] sm:$0x1]
        %v1108 = vld [vmem:[#allocation2 + $0x38] sm:$0x1]
        %v1109 = vld [vmem:[#allocation2 + $0x44] sm:$0x1]
        %v1110 = vld [vmem:[#allocation2 + $0x50] sm:$0x1]
        %v1111 = vld [vmem:[#allocation2 + $0x5c] sm:$0x1]
        %v1112 = vld [vmem:[#allocation2 + $0x68] sm:$0x1]
        %v1113 = vld [vmem:[#allocation2 + $0x74] sm:$0x1]
        %v1114 = vld [vmem:[#allocation2 + $0x80] sm:$0x1]
        %v1115 = vld [vmem:[#allocation2 + $0x8c] sm:$0x1]
        %v1116 = vld [vmem:[#allocation2 + $0x98] sm:$0x1]
        %v1117 = vld [vmem:[#allocation2 + $0xa4] sm:$0x1]
        %v1118 = vld [vmem:[#allocation2 + $0xb0] sm:$0x1]
        %v1119 = vld [vmem:[#allocation2 + $0xbc] sm:$0x1]
        %v1120 = vld [vmem:[#allocation2 + $0xc8] sm:$0x1]
        %v1121 = vld [vmem:[#allocation2 + $0xd4] sm:$0x1]
        %v1122 = vld [vmem:[#allocation2] sm:$0xe]
        %v1123 = vld [vmem:[#allocation2 + $0xc] sm:$0xe]
        %v1124 = vld [vmem:[#allocation2 + $0x18] sm:$0xe]
        %v1125 = vld [vmem:[#allocation2 + $0x24] sm:$0xe]
        %v1126 = vld [vmem:[#allocation2 + $0x30] sm:$0xe]
        %v1127 = vld [vmem:[#allocation2 + $0x3c] sm:$0xe]
        %v1128 = vld [vmem:[#allocation2 + $0x48] sm:$0xe]
        %v1129 = vld [vmem:[#allocation2 + $0x54] sm:$0xe]
        %v1130 = vld [vmem:[#allocation2 + $0x60] sm:$0xe]
        %v1131 = vld [vmem:[#allocation2 + $0x6c] sm:$0xe]
        %v1132 = vld [vmem:[#allocation2 + $0x78] sm:$0xe]
        %v1133 = vld [vmem:[#allocation2 + $0x84] sm:$0xe]
        %v1134 = vld [vmem:[#allocation2 + $0x90] sm:$0xe]
        %v1135 = vld [vmem:[#allocation2 + $0x9c] sm:$0xe]
        %v1136 = vld [vmem:[#allocation2 + $0xa8] sm:$0xe]
        %v1137 = vld [vmem:[#allocation2 + $0xb4] sm:$0xe]
        %v1138 = vld [vmem:[#allocation2 + $0xc0] sm:$0xe]
        %v1139 = vld [vmem:[#allocation2 + $0xcc] sm:$0xe]
        %v1176 = vunpack.c.l.b16 %v1068
        %v1177 = vunpack.c.l.b16 %v1069
        %v1178 = vunpack.c.l.b16 %v1070
        %v1179 = vunpack.c.l.b16 %v1071
        %v1180 = vunpack.c.l.b16 %v1072
        %v1181 = vunpack.c.l.b16 %v1073
        %v1182 = vunpack.c.l.b16 %v1074
        %v1183 = vunpack.c.l.b16 %v1075
        %v1184 = vunpack.c.l.b16 %v1076
        %v1185 = vunpack.c.l.b16 %v1077
        %v1186 = vunpack.c.l.b16 %v1078
        %v1187 = vunpack.c.l.b16 %v1079
        %v1188 = vunpack.c.l.b16 %v1080
        %v1189 = vunpack.c.l.b16 %v1081
        %v1190 = vunpack.c.l.b16 %v1082
        %v1191 = vunpack.c.l.b16 %v1083
        %v1192 = vunpack.c.l.b16 %v1084
        %v1193 = vunpack.c.l.b16 %v1085
        %v1194 = vunpack.c.l.b16 %v1086
        %v1195 = vunpack.c.l.b16 %v1087
        %v1196 = vunpack.c.l.b16 %v1088
        %v1197 = vunpack.c.l.b16 %v1089
        %v1198 = vunpack.c.l.b16 %v1090
        %v1199 = vunpack.c.l.b16 %v1091
        %v1200 = vunpack.c.l.b16 %v1092
        %v1201 = vunpack.c.l.b16 %v1093
        %v1202 = vunpack.c.l.b16 %v1094
        %v1203 = vunpack.c.l.b16 %v1095
        %v1204 = vunpack.c.l.b16 %v1096
        %v1205 = vunpack.c.l.b16 %v1097
        %v1206 = vunpack.c.l.b16 %v1098
        %v1207 = vunpack.c.l.b16 %v1099
        %v1208 = vunpack.c.l.b16 %v1100
        %v1209 = vunpack.c.l.b16 %v1101
        %v1210 = vunpack.c.l.b16 %v1102
        %v1211 = vunpack.c.l.b16 %v1103
        %v1212 = vpack.c.b16 %v1177, %v1176
        %v1213 = vpack.c.b16 %v1179, %v1178
        %v1214 = vpack.c.b16 %v1181, %v1180
        %v1215 = vpack.c.b16 %v1183, %v1182
        %v1216 = vpack.c.b16 %v1185, %v1184
        %v1217 = vpack.c.b16 %v1187, %v1186
        %v1218 = vpack.c.b16 %v1189, %v1188
        %v1219 = vpack.c.b16 %v1191, %v1190
        %v1220 = vpack.c.b16 %v1193, %v1192
        %v1221 = vpack.c.b16 %v1195, %v1194
        %v1222 = vpack.c.b16 %v1197, %v1196
        %v1223 = vpack.c.b16 %v1199, %v1198
        %v1224 = vpack.c.b16 %v1201, %v1200
        %v1225 = vpack.c.b16 %v1203, %v1202
        %v1226 = vpack.c.b16 %v1205, %v1204
        %v1227 = vpack.c.b16 %v1207, %v1206
        %v1228 = vpack.c.b16 %v1209, %v1208
        %v1229 = vpack.c.b16 %v1211, %v1210
        %v1248 = vunpack.c.l.b16 %v1104
        %v1249 = vunpack.c.l.b16 %v1105
        %v1250 = vunpack.c.l.b16 %v1106
        %v1251 = vunpack.c.l.b16 %v1107
        %v1252 = vunpack.c.l.b16 %v1108
        %v1253 = vunpack.c.l.b16 %v1109
        %v1254 = vunpack.c.l.b16 %v1110
        %v1255 = vunpack.c.l.b16 %v1111
        %v1256 = vunpack.c.l.b16 %v1112
        %v1257 = vunpack.c.l.b16 %v1113
        %v1258 = vunpack.c.l.b16 %v1114
        %v1259 = vunpack.c.l.b16 %v1115
        %v1260 = vunpack.c.l.b16 %v1116
        %v1261 = vunpack.c.l.b16 %v1117
        %v1262 = vunpack.c.l.b16 %v1118
        %v1263 = vunpack.c.l.b16 %v1119
        %v1264 = vunpack.c.l.b16 %v1120
        %v1265 = vunpack.c.l.b16 %v1121
        %v1266 = vpack.c.b16 %v1248, %v1248
        %v1267 = vpack.c.b16 %v1249, %v1249
        %v1268 = vpack.c.b16 %v1250, %v1250
        %v1269 = vpack.c.b16 %v1251, %v1251
        %v1270 = vpack.c.b16 %v1252, %v1252
        %v1271 = vpack.c.b16 %v1253, %v1253
        %v1272 = vpack.c.b16 %v1254, %v1254
        %v1273 = vpack.c.b16 %v1255, %v1255
        %v1274 = vpack.c.b16 %v1256, %v1256
        %v1275 = vpack.c.b16 %v1257, %v1257
        %v1276 = vpack.c.b16 %v1258, %v1258
        %v1277 = vpack.c.b16 %v1259, %v1259
        %v1278 = vpack.c.b16 %v1260, %v1260
        %v1279 = vpack.c.b16 %v1261, %v1261
        %v1280 = vpack.c.b16 %v1262, %v1262
        %v1281 = vpack.c.b16 %v1263, %v1263
        %v1282 = vpack.c.b16 %v1264, %v1264
        %v1283 = vpack.c.b16 %v1265, %v1265
        %vm1284 = vsmask.f32 7424
        %v1286 = vshrl.u32 %v1212, 16
        %v1288 = vshll.u32 %v1212, 16
        %v1290 = vrot.slane %v1288, 1
        %v1291 = vor.u32 %v1286, %v1290
        %v1293 = vshll.u32 %v1266, 16
        %v1295 = vrot.slane %v1293, 1
        %v1296 = vsel %vm1284, %v1291, %v1295
        %v1298 = vshrl.u32 %v1213, 16
        %v1300 = vshll.u32 %v1213, 16
        %v1302 = vrot.slane %v1300, 1
        %v1303 = vor.u32 %v1298, %v1302
        %v1305 = vshll.u32 %v1267, 16
        %v1307 = vrot.slane %v1305, 1
        %v1308 = vsel %vm1284, %v1303, %v1307
        %v1310 = vshrl.u32 %v1214, 16
        %v1312 = vshll.u32 %v1214, 16
        %v1314 = vrot.slane %v1312, 1
        %v1315 = vor.u32 %v1310, %v1314
        %v1317 = vshll.u32 %v1268, 16
        %v1319 = vrot.slane %v1317, 1
        %v1320 = vsel %vm1284, %v1315, %v1319
        %v1322 = vshrl.u32 %v1215, 16
        %v1324 = vshll.u32 %v1215, 16
        %v1326 = vrot.slane %v1324, 1
        %v1327 = vor.u32 %v1322, %v1326
        %v1329 = vshll.u32 %v1269, 16
        %v1331 = vrot.slane %v1329, 1
        %v1332 = vsel %vm1284, %v1327, %v1331
        %v1334 = vshrl.u32 %v1216, 16
        %v1336 = vshll.u32 %v1216, 16
        %v1338 = vrot.slane %v1336, 1
        %v1339 = vor.u32 %v1334, %v1338
        %v1341 = vshll.u32 %v1270, 16
        %v1343 = vrot.slane %v1341, 1
        %v1344 = vsel %vm1284, %v1339, %v1343
        %v1346 = vshrl.u32 %v1217, 16
        %v1348 = vshll.u32 %v1217, 16
        %v1350 = vrot.slane %v1348, 1
        %v1351 = vor.u32 %v1346, %v1350
        %v1353 = vshll.u32 %v1271, 16
        %v1355 = vrot.slane %v1353, 1
        %v1356 = vsel %vm1284, %v1351, %v1355
        %v1358 = vshrl.u32 %v1218, 16
        %v1360 = vshll.u32 %v1218, 16
        %v1362 = vrot.slane %v1360, 1
        %v1363 = vor.u32 %v1358, %v1362
        %v1365 = vshll.u32 %v1272, 16
        %v1367 = vrot.slane %v1365, 1
        %v1368 = vsel %vm1284, %v1363, %v1367
        %v1370 = vshrl.u32 %v1219, 16
        %v1372 = vshll.u32 %v1219, 16
        %v1374 = vrot.slane %v1372, 1
        %v1375 = vor.u32 %v1370, %v1374
        %v1377 = vshll.u32 %v1273, 16
        %v1379 = vrot.slane %v1377, 1
        %v1380 = vsel %vm1284, %v1375, %v1379
        %v1382 = vshrl.u32 %v1220, 16
        %v1384 = vshll.u32 %v1220, 16
        %v1386 = vrot.slane %v1384, 1
        %v1387 = vor.u32 %v1382, %v1386
        %v1389 = vshll.u32 %v1274, 16
        %v1391 = vrot.slane %v1389, 1
        %v1392 = vsel %vm1284, %v1387, %v1391
        %v1394 = vshrl.u32 %v1221, 16
        %v1396 = vshll.u32 %v1221, 16
        %v1398 = vrot.slane %v1396, 1
        %v1399 = vor.u32 %v1394, %v1398
        %v1401 = vshll.u32 %v1275, 16
        %v1403 = vrot.slane %v1401, 1
        %v1404 = vsel %vm1284, %v1399, %v1403
        %v1406 = vshrl.u32 %v1222, 16
        %v1408 = vshll.u32 %v1222, 16
        %v1410 = vrot.slane %v1408, 1
        %v1411 = vor.u32 %v1406, %v1410
        %v1413 = vshll.u32 %v1276, 16
        %v1415 = vrot.slane %v1413, 1
        %v1416 = vsel %vm1284, %v1411, %v1415
        %v1418 = vshrl.u32 %v1223, 16
        %v1420 = vshll.u32 %v1223, 16
        %v1422 = vrot.slane %v1420, 1
        %v1423 = vor.u32 %v1418, %v1422
        %v1425 = vshll.u32 %v1277, 16
        %v1427 = vrot.slane %v1425, 1
        %v1428 = vsel %vm1284, %v1423, %v1427
        %v1430 = vshrl.u32 %v1224, 16
        %v1432 = vshll.u32 %v1224, 16
        %v1434 = vrot.slane %v1432, 1
        %v1435 = vor.u32 %v1430, %v1434
        %v1437 = vshll.u32 %v1278, 16
        %v1439 = vrot.slane %v1437, 1
        %v1440 = vsel %vm1284, %v1435, %v1439
        %v1442 = vshrl.u32 %v1225, 16
        %v1444 = vshll.u32 %v1225, 16
        %v1446 = vrot.slane %v1444, 1
        %v1447 = vor.u32 %v1442, %v1446
        %v1449 = vshll.u32 %v1279, 16
        %v1451 = vrot.slane %v1449, 1
        %v1452 = vsel %vm1284, %v1447, %v1451
        %v1454 = vshrl.u32 %v1226, 16
        %v1456 = vshll.u32 %v1226, 16
        %v1458 = vrot.slane %v1456, 1
        %v1459 = vor.u32 %v1454, %v1458
        %v1461 = vshll.u32 %v1280, 16
        %v1463 = vrot.slane %v1461, 1
        %v1464 = vsel %vm1284, %v1459, %v1463
        %v1466 = vshrl.u32 %v1227, 16
        %v1468 = vshll.u32 %v1227, 16
        %v1470 = vrot.slane %v1468, 1
        %v1471 = vor.u32 %v1466, %v1470
        %v1473 = vshll.u32 %v1281, 16
        %v1475 = vrot.slane %v1473, 1
        %v1476 = vsel %vm1284, %v1471, %v1475
        %v1478 = vshrl.u32 %v1228, 16
        %v1480 = vshll.u32 %v1228, 16
        %v1482 = vrot.slane %v1480, 1
        %v1483 = vor.u32 %v1478, %v1482
        %v1485 = vshll.u32 %v1282, 16
        %v1487 = vrot.slane %v1485, 1
        %v1488 = vsel %vm1284, %v1483, %v1487
        %v1490 = vshrl.u32 %v1229, 16
        %v1492 = vshll.u32 %v1229, 16
        %v1494 = vrot.slane %v1492, 1
        %v1495 = vor.u32 %v1490, %v1494
        %v1497 = vshll.u32 %v1283, 16
        %v1499 = vrot.slane %v1497, 1
        %v1500 = vsel %vm1284, %v1495, %v1499
        %1501 = vrot.lane.b32.xlu0 %v1296, 8
        %v1502 = vpop.permute.xlu0 %1501
        %1503 = vrot.lane.b32.xlu0 %v1308, 8
        %v1504 = vpop.permute.xlu0 %1503
        %1505 = vrot.lane.b32.xlu0 %v1320, 8
        %v1506 = vpop.permute.xlu0 %1505
        %1507 = vrot.lane.b32.xlu0 %v1332, 8
        %v1508 = vpop.permute.xlu0 %1507
        %1509 = vrot.lane.b32.xlu0 %v1344, 8
        %v1510 = vpop.permute.xlu0 %1509
        %1511 = vrot.lane.b32.xlu0 %v1356, 8
        %v1512 = vpop.permute.xlu0 %1511
        %1513 = vrot.lane.b32.xlu0 %v1368, 8
        %v1514 = vpop.permute.xlu0 %1513
        %1515 = vrot.lane.b32.xlu0 %v1380, 8
        %v1516 = vpop.permute.xlu0 %1515
        %1517 = vrot.lane.b32.xlu0 %v1392, 8
        %v1518 = vpop.permute.xlu0 %1517
        %1519 = vrot.lane.b32.xlu0 %v1404, 8
        %v1520 = vpop.permute.xlu0 %1519
        %1521 = vrot.lane.b32.xlu0 %v1416, 8
        %v1522 = vpop.permute.xlu0 %1521
        %1523 = vrot.lane.b32.xlu0 %v1428, 8
        %v1524 = vpop.permute.xlu0 %1523
        %1525 = vrot.lane.b32.xlu0 %v1440, 8
        %v1526 = vpop.permute.xlu0 %1525
        %1527 = vrot.lane.b32.xlu0 %v1452, 8
        %v1528 = vpop.permute.xlu0 %1527
        %1529 = vrot.lane.b32.xlu0 %v1464, 8
        %v1530 = vpop.permute.xlu0 %1529
        %1531 = vrot.lane.b32.xlu0 %v1476, 8
        %v1532 = vpop.permute.xlu0 %1531
        %1533 = vrot.lane.b32.xlu0 %v1488, 8
        %v1534 = vpop.permute.xlu0 %1533
        %1535 = vrot.lane.b32.xlu0 %v1500, 8
        %v1536 = vpop.permute.xlu0 %1535
        %v1555 = vunpack.c.l.b16 %v1122
        %v1556 = vunpack.c.l.b16 %v1123
        %v1557 = vunpack.c.l.b16 %v1124
        %v1558 = vunpack.c.l.b16 %v1125
        %v1559 = vunpack.c.l.b16 %v1126
        %v1560 = vunpack.c.l.b16 %v1127
        %v1561 = vunpack.c.l.b16 %v1128
        %v1562 = vunpack.c.l.b16 %v1129
        %v1563 = vunpack.c.l.b16 %v1130
        %v1564 = vunpack.c.l.b16 %v1131
        %v1565 = vunpack.c.l.b16 %v1132
        %v1566 = vunpack.c.l.b16 %v1133
        %v1567 = vunpack.c.l.b16 %v1134
        %v1568 = vunpack.c.l.b16 %v1135
        %v1569 = vunpack.c.l.b16 %v1136
        %v1570 = vunpack.c.l.b16 %v1137
        %v1571 = vunpack.c.l.b16 %v1138
        %v1572 = vunpack.c.l.b16 %v1139
        %v1573 = vpack.c.b16 %v1177, %v1555
        %v1574 = vpack.c.b16 %v1179, %v1556
        %v1575 = vpack.c.b16 %v1181, %v1557
        %v1576 = vpack.c.b16 %v1183, %v1558
        %v1577 = vpack.c.b16 %v1185, %v1559
        %v1578 = vpack.c.b16 %v1187, %v1560
        %v1579 = vpack.c.b16 %v1189, %v1561
        %v1580 = vpack.c.b16 %v1191, %v1562
        %v1581 = vpack.c.b16 %v1193, %v1563
        %v1582 = vpack.c.b16 %v1195, %v1564
        %v1583 = vpack.c.b16 %v1197, %v1565
        %v1584 = vpack.c.b16 %v1199, %v1566
        %v1585 = vpack.c.b16 %v1201, %v1567
        %v1586 = vpack.c.b16 %v1203, %v1568
        %v1587 = vpack.c.b16 %v1205, %v1569
        %v1588 = vpack.c.b16 %v1207, %v1570
        %v1589 = vpack.c.b16 %v1209, %v1571
        %v1590 = vpack.c.b16 %v1211, %v1572
        %vm1591 = vcmask 1046528
        %v1592 = vrot.slane %v1573, 1
        %v1593 = vrot.slane %v1266, 1
        %v1594 = vsel %vm1591, %v1592, %v1593
        %v1595 = vrot.slane %v1574, 1
        %v1596 = vrot.slane %v1267, 1
        %v1597 = vsel %vm1591, %v1595, %v1596
        %v1598 = vrot.slane %v1575, 1
        %v1599 = vrot.slane %v1268, 1
        %v1600 = vsel %vm1591, %v1598, %v1599
        %v1601 = vrot.slane %v1576, 1
        %v1602 = vrot.slane %v1269, 1
        %v1603 = vsel %vm1591, %v1601, %v1602
        %v1604 = vrot.slane %v1577, 1
        %v1605 = vrot.slane %v1270, 1
        %v1606 = vsel %vm1591, %v1604, %v1605
        %v1607 = vrot.slane %v1578, 1
        %v1608 = vrot.slane %v1271, 1
        %v1609 = vsel %vm1591, %v1607, %v1608
        %v1610 = vrot.slane %v1579, 1
        %v1611 = vrot.slane %v1272, 1
        %v1612 = vsel %vm1591, %v1610, %v1611
        %v1613 = vrot.slane %v1580, 1
        %v1614 = vrot.slane %v1273, 1
        %v1615 = vsel %vm1591, %v1613, %v1614
        %v1616 = vrot.slane %v1581, 1
        %v1617 = vrot.slane %v1274, 1
        %v1618 = vsel %vm1591, %v1616, %v1617
        %v1619 = vrot.slane %v1582, 1
        %v1620 = vrot.slane %v1275, 1
        %v1621 = vsel %vm1591, %v1619, %v1620
        %v1622 = vrot.slane %v1583, 1
        %v1623 = vrot.slane %v1276, 1
        %v1624 = vsel %vm1591, %v1622, %v1623
        %v1625 = vrot.slane %v1584, 1
        %v1626 = vrot.slane %v1277, 1
        %v1627 = vsel %vm1591, %v1625, %v1626
        %v1628 = vrot.slane %v1585, 1
        %v1629 = vrot.slane %v1278, 1
        %v1630 = vsel %vm1591, %v1628, %v1629
        %v1631 = vrot.slane %v1586, 1
        %v1632 = vrot.slane %v1279, 1
        %v1633 = vsel %vm1591, %v1631, %v1632
        %v1634 = vrot.slane %v1587, 1
        %v1635 = vrot.slane %v1280, 1
        %v1636 = vsel %vm1591, %v1634, %v1635
        %v1637 = vrot.slane %v1588, 1
        %v1638 = vrot.slane %v1281, 1
        %v1639 = vsel %vm1591, %v1637, %v1638
        %v1640 = vrot.slane %v1589, 1
        %v1641 = vrot.slane %v1282, 1
        %v1642 = vsel %vm1591, %v1640, %v1641
        %v1643 = vrot.slane %v1590, 1
        %v1644 = vrot.slane %v1283, 1
        %v1645 = vsel %vm1591, %v1643, %v1644
        %1646 = vrot.lane.b32.xlu0 %v1594, 16
        %v1647 = vpop.permute.xlu0 %1646
        %1648 = vrot.lane.b32.xlu0 %v1597, 16
        %v1649 = vpop.permute.xlu0 %1648
        %1650 = vrot.lane.b32.xlu0 %v1600, 16
        %v1651 = vpop.permute.xlu0 %1650
        %1652 = vrot.lane.b32.xlu0 %v1603, 16
        %v1653 = vpop.permute.xlu0 %1652
        %1654 = vrot.lane.b32.xlu0 %v1606, 16
        %v1655 = vpop.permute.xlu0 %1654
        %1656 = vrot.lane.b32.xlu0 %v1609, 16
        %v1657 = vpop.permute.xlu0 %1656
        %1658 = vrot.lane.b32.xlu0 %v1612, 16
        %v1659 = vpop.permute.xlu0 %1658
        %1660 = vrot.lane.b32.xlu0 %v1615, 16
        %v1661 = vpop.permute.xlu0 %1660
        %1662 = vrot.lane.b32.xlu0 %v1618, 16
        %v1663 = vpop.permute.xlu0 %1662
        %1664 = vrot.lane.b32.xlu0 %v1621, 16
        %v1665 = vpop.permute.xlu0 %1664
        %1666 = vrot.lane.b32.xlu0 %v1624, 16
        %v1667 = vpop.permute.xlu0 %1666
        %1668 = vrot.lane.b32.xlu0 %v1627, 16
        %v1669 = vpop.permute.xlu0 %1668
        %1670 = vrot.lane.b32.xlu0 %v1630, 16
        %v1671 = vpop.permute.xlu0 %1670
        %1672 = vrot.lane.b32.xlu0 %v1633, 16
        %v1673 = vpop.permute.xlu0 %1672
        %1674 = vrot.lane.b32.xlu0 %v1636, 16
        %v1675 = vpop.permute.xlu0 %1674
        %1676 = vrot.lane.b32.xlu0 %v1639, 16
        %v1677 = vpop.permute.xlu0 %1676
        %1678 = vrot.lane.b32.xlu0 %v1642, 16
        %v1679 = vpop.permute.xlu0 %1678
        %1680 = vrot.lane.b32.xlu0 %v1645, 16
        %v1681 = vpop.permute.xlu0 %1680
        %vm1682 = vcmask 64512
        %v1684 = vsel %vm1682, %v1212, %v1502
        %v1686 = vsel %vm1682, %v1213, %v1504
        %v1688 = vsel %vm1682, %v1214, %v1506
        %v1690 = vsel %vm1682, %v1215, %v1508
        %v1692 = vsel %vm1682, %v1216, %v1510
        %v1694 = vsel %vm1682, %v1217, %v1512
        %v1696 = vsel %vm1682, %v1218, %v1514
        %v1698 = vsel %vm1682, %v1219, %v1516
        %v1700 = vsel %vm1682, %v1220, %v1518
        %v1702 = vsel %vm1682, %v1221, %v1520
        %v1704 = vsel %vm1682, %v1222, %v1522
        %v1706 = vsel %vm1682, %v1223, %v1524
        %v1708 = vsel %vm1682, %v1224, %v1526
        %v1710 = vsel %vm1682, %v1225, %v1528
        %v1712 = vsel %vm1682, %v1226, %v1530
        %v1714 = vsel %vm1682, %v1227, %v1532
        %v1716 = vsel %vm1682, %v1228, %v1534
        %v1718 = vsel %vm1682, %v1229, %v1536
        %vm1719 = vcmask 130048
        %v1721 = vsel %vm1719, %v1684, %v1647
        %v1723 = vsel %vm1719, %v1686, %v1649
        %v1725 = vsel %vm1719, %v1688, %v1651
        %v1727 = vsel %vm1719, %v1690, %v1653
        %v1729 = vsel %vm1719, %v1692, %v1655
        %v1731 = vsel %vm1719, %v1694, %v1657
        %v1733 = vsel %vm1719, %v1696, %v1659
        %v1735 = vsel %vm1719, %v1698, %v1661
        %v1737 = vsel %vm1719, %v1700, %v1663
        %v1739 = vsel %vm1719, %v1702, %v1665
        %v1741 = vsel %vm1719, %v1704, %v1667
        %v1743 = vsel %vm1719, %v1706, %v1669
        %v1745 = vsel %vm1719, %v1708, %v1671
        %v1747 = vsel %vm1719, %v1710, %v1673
        %v1749 = vsel %vm1719, %v1712, %v1675
        %v1751 = vsel %vm1719, %v1714, %v1677
        %v1753 = vsel %vm1719, %v1716, %v1679
        %v1755 = vsel %vm1719, %v1718, %v1681
        %v1756 = vld [vmem:[#allocation7] sm:$0xf]
        %v1757 = vld [vmem:[#allocation7 + $0x4] sm:$0xf]
        %v1758 = vld [vmem:[#allocation7 + $0x8] sm:$0xf]
        %v1759 = vld [vmem:[#allocation7 + $0xc] sm:$0xf]
        %v1760 = vld [vmem:[#allocation7 + $0x10] sm:$0xf]
        %v1761 = vld [vmem:[#allocation7 + $0x14] sm:$0xf]
        %v1765 = vunpack.c.l.b16 %v1759
        %v1766 = vunpack.c.l.b16 %v1760
        %v1767 = vunpack.c.l.b16 %v1761
        %v1768 = vpack.c.b16 %v1766, %v1765
        %v1769 = vpack.c.b16 %v1767, %v1767
        %vm1771 = vcmask 195584
        %v1772 = vsel %vm1771, %v1723, 0
        %v1774 = vsel %vm1771, %v1725, 0
        %v1776 = vsel %vm1771, %v1727, 0
        %v1778 = vsel %vm1771, %v1729, 0
        %v1780 = vsel %vm1771, %v1731, 0
        %v1782 = vsel %vm1771, %v1733, 0
        %v1784 = vsel %vm1771, %v1735, 0
        %v1786 = vsel %vm1771, %v1737, 0
        %v1788 = vsel %vm1771, %v1739, 0
        %v1790 = vsel %vm1771, %v1741, 0
        %v1792 = vsel %vm1771, %v1743, 0
        %v1794 = vsel %vm1771, %v1745, 0
        %v1796 = vsel %vm1771, %v1747, 0
        %v1798 = vsel %vm1771, %v1749, 0
        %v1800 = vsel %vm1771, %v1751, 0
        %v1802 = vsel %vm1771, %v1753, 0
        %vm1804 = vcmask 1043456
        %v1806 = vsel %vm1804, %v1769, 0
        %1808 = vmatprep.subr.bf16.mxu0 0
        %1809 = vmatpush1.bf16.msra.mxu0 %v1768
        %1810 = vmatprep.subr.bf16.mxu0 0
        %1811 = vmatpush1.bf16.msra.mxu0 %v1806
        %1812 = vmatprep.subr.bf16.mxu0 0
        %1813 = vmatpush1.bf16.msra.mxu0 0
        %1814 = vmatprep.subr.bf16.mxu0 0
        %1815 = vmatpush1.bf16.msra.mxu0 0
        %1816 = vmatprep.subr.bf16.mxu0 0
        %1817 = vmatpush1.bf16.msra.mxu0 0
        %1818 = vmatprep.subr.bf16.mxu0 0
        %1819 = vmatpush1.bf16.msra.mxu0 0
        %1820 = vmatprep.subr.bf16.mxu0 0
        %1821 = vmatpush1.bf16.msra.mxu0 0
        %1822 = vmatprep.subr.bf16.mxu0 0
        %1823 = vmatpush1.bf16.msra.mxu0 0
        %1824 = vmatprep.subr.bf16.mxu0 0
        %1825 = vmatpush1.bf16.msra.mxu0 0
        %1826 = vmatprep.subr.bf16.mxu0 0
        %1827 = vmatpush1.bf16.msra.mxu0 0
        %1828 = vmatprep.subr.bf16.mxu0 0
        %1829 = vmatpush1.bf16.msra.mxu0 0
        %1830 = vmatprep.subr.bf16.mxu0 0
        %1831 = vmatpush1.bf16.msra.mxu0 0
        %1832 = vmatprep.subr.bf16.mxu0 0
        %1833 = vmatpush1.bf16.msra.mxu0 0
        %1834 = vmatprep.subr.bf16.mxu0 0
        %1835 = vmatpush1.bf16.msra.mxu0 0
        %1836 = vmatprep.subr.bf16.mxu0 0
        %1837 = vmatpush1.bf16.msra.mxu0 0
        %1838 = vmatprep.subr.bf16.mxu0 0
        %1839 = vmatpush1.bf16.msra.mxu0 0
        %1840 = vmatprep.mubr.bf16.mxu0 0
        %1841 = vmatmul.mubr.bf16.gmra.mrb[0].mxu0 %v1772
        %v1842 = vpop.f32.mrb[0].mxu0
        %v1843 = vadd.f32 0.0, %v1842
        %v1844 = vpop.f32.mrb[0].mxu0
        %v1845 = vpop.f32.mrb[0].mxu0
        %v1846 = vadd.f32 0.0, %v1845
        %v1847 = vpop.f32.mrb[0].mxu0
        %1848 = vmatprep.mubr.bf16.mxu0 0
        %1849 = vmatmul.mubr.bf16.gmra.mrb[0].mxu0 %v1774
        %v1850 = vpop.f32.mrb[0].mxu0
        %v1851 = vadd.f32 0.0, %v1850
        %v1852 = vpop.f32.mrb[0].mxu0
        %v1853 = vpop.f32.mrb[0].mxu0
        %v1854 = vadd.f32 0.0, %v1853
        %v1855 = vpop.f32.mrb[0].mxu0
        %1856 = vmatprep.mubr.bf16.mxu0 0
        %1857 = vmatmul.mubr.bf16.gmra.mrb[0].mxu0 %v1776
        %v1858 = vpop.f32.mrb[0].mxu0
        %v1859 = vadd.f32 0.0, %v1858
        %v1860 = vpop.f32.mrb[0].mxu0
        %v1861 = vpop.f32.mrb[0].mxu0
        %v1862 = vadd.f32 0.0, %v1861
        %v1863 = vpop.f32.mrb[0].mxu0
        %1864 = vmatprep.mubr.bf16.mxu0 0
        %1865 = vmatmul.mubr.bf16.gmra.mrb[0].mxu0 %v1778
        %v1866 = vpop.f32.mrb[0].mxu0
        %v1867 = vadd.f32 0.0, %v1866
        %v1868 = vpop.f32.mrb[0].mxu0
        %v1869 = vpop.f32.mrb[0].mxu0
        %v1870 = vadd.f32 0.0, %v1869
        %v1871 = vpop.f32.mrb[0].mxu0
        %1872 = vmatprep.mubr.bf16.mxu0 0
        %1873 = vmatmul.mubr.bf16.gmra.mrb[0].mxu0 %v1780
        %v1874 = vpop.f32.mrb[0].mxu0
        %v1875 = vadd.f32 0.0, %v1874
        %v1876 = vpop.f32.mrb[0].mxu0
        %v1877 = vpop.f32.mrb[0].mxu0
        %v1878 = vadd.f32 0.0, %v1877
        %v1879 = vpop.f32.mrb[0].mxu0
        %1880 = vmatprep.mubr.bf16.mxu0 0
        %1881 = vmatmul.mubr.bf16.gmra.mrb[0].mxu0 %v1782
        %v1882 = vpop.f32.mrb[0].mxu0
        %v1883 = vadd.f32 0.0, %v1882
        %v1884 = vpop.f32.mrb[0].mxu0
        %v1885 = vpop.f32.mrb[0].mxu0
        %v1886 = vadd.f32 0.0, %v1885
        %v1887 = vpop.f32.mrb[0].mxu0
        %1888 = vmatprep.mubr.bf16.mxu0 0
        %1889 = vmatmul.mubr.bf16.gmra.mrb[0].mxu0 %v1784
        %v1890 = vpop.f32.mrb[0].mxu0
        %v1891 = vadd.f32 0.0, %v1890
        %v1892 = vpop.f32.mrb[0].mxu0
        %v1893 = vpop.f32.mrb[0].mxu0
        %v1894 = vadd.f32 0.0, %v1893
        %v1895 = vpop.f32.mrb[0].mxu0
        %1896 = vmatprep.mubr.bf16.mxu0 0
        %1897 = vmatmul.mubr.bf16.gmra.mrb[0].mxu0 %v1786
        %v1898 = vpop.f32.mrb[0].mxu0
        %v1899 = vadd.f32 0.0, %v1898
        %v1900 = vpop.f32.mrb[0].mxu0
        %v1901 = vpop.f32.mrb[0].mxu0
        %v1902 = vadd.f32 0.0, %v1901
        %v1903 = vpop.f32.mrb[0].mxu0
        %1904 = vmatprep.mubr.bf16.mxu0 0
        %1905 = vmatmul.mubr.bf16.gmra.mrb[0].mxu0 %v1788
        %v1906 = vpop.f32.mrb[0].mxu0
        %v1907 = vadd.f32 0.0, %v1906
        %v1908 = vpop.f32.mrb[0].mxu0
        %v1909 = vpop.f32.mrb[0].mxu0
        %v1910 = vadd.f32 0.0, %v1909
        %v1911 = vpop.f32.mrb[0].mxu0
        %1912 = vmatprep.mubr.bf16.mxu0 0
        %1913 = vmatmul.mubr.bf16.gmra.mrb[0].mxu0 %v1790
        %v1914 = vpop.f32.mrb[0].mxu0
        %v1915 = vadd.f32 0.0, %v1914
        %v1916 = vpop.f32.mrb[0].mxu0
        %v1917 = vpop.f32.mrb[0].mxu0
        %v1918 = vadd.f32 0.0, %v1917
        %v1919 = vpop.f32.mrb[0].mxu0
        %1920 = vmatprep.mubr.bf16.mxu0 0
        %1921 = vmatmul.mubr.bf16.gmra.mrb[0].mxu0 %v1792
        %v1922 = vpop.f32.mrb[0].mxu0
        %v1923 = vadd.f32 0.0, %v1922
        %v1924 = vpop.f32.mrb[0].mxu0
        %v1925 = vpop.f32.mrb[0].mxu0
        %v1926 = vadd.f32 0.0, %v1925
        %v1927 = vpop.f32.mrb[0].mxu0
        %1928 = vmatprep.mubr.bf16.mxu0 0
        %1929 = vmatmul.mubr.bf16.gmra.mrb[0].mxu0 %v1794
        %v1930 = vpop.f32.mrb[0].mxu0
        %v1931 = vadd.f32 0.0, %v1930
        %v1932 = vpop.f32.mrb[0].mxu0
        %v1933 = vpop.f32.mrb[0].mxu0
        %v1934 = vadd.f32 0.0, %v1933
        %v1935 = vpop.f32.mrb[0].mxu0
        %1936 = vmatprep.mubr.bf16.mxu0 0
        %1937 = vmatmul.mubr.bf16.gmra.mrb[0].mxu0 %v1796
        %v1938 = vpop.f32.mrb[0].mxu0
        %v1939 = vadd.f32 0.0, %v1938
        %v1940 = vpop.f32.mrb[0].mxu0
        %v1941 = vpop.f32.mrb[0].mxu0
        %v1942 = vadd.f32 0.0, %v1941
        %v1943 = vpop.f32.mrb[0].mxu0
        %1944 = vmatprep.mubr.bf16.mxu0 0
        %1945 = vmatmul.mubr.bf16.gmra.mrb[0].mxu0 %v1798
        %v1946 = vpop.f32.mrb[0].mxu0
        %v1947 = vadd.f32 0.0, %v1946
        %v1948 = vpop.f32.mrb[0].mxu0
        %v1949 = vpop.f32.mrb[0].mxu0
        %v1950 = vadd.f32 0.0, %v1949
        %v1951 = vpop.f32.mrb[0].mxu0
        %1952 = vmatprep.mubr.bf16.mxu0 0
        %1953 = vmatmul.mubr.bf16.gmra.mrb[0].mxu0 %v1800
        %v1954 = vpop.f32.mrb[0].mxu0
        %v1955 = vadd.f32 0.0, %v1954
        %v1956 = vpop.f32.mrb[0].mxu0
        %v1957 = vpop.f32.mrb[0].mxu0
        %v1958 = vadd.f32 0.0, %v1957
        %v1959 = vpop.f32.mrb[0].mxu0
        %1960 = vmatprep.mubr.bf16.mxu0 0
        %1961 = vmatmul.mubr.bf16.gmra.mrb[0].mxu0 %v1802
        %v1962 = vpop.f32.mrb[0].mxu0
        %v1963 = vadd.f32 0.0, %v1962
        %v1964 = vpop.f32.mrb[0].mxu0
        %v1965 = vpop.f32.mrb[0].mxu0
        %v1966 = vadd.f32 0.0, %v1965
        %v1967 = vpop.f32.mrb[0].mxu0
        %1968 = vdwg.mxu0
        %v1972 = vunpack.c.l.b16 %v1756
        %v1973 = vunpack.c.l.b16 %v1757
        %v1974 = vunpack.c.l.b16 %v1758
        %v1975 = vpack.c.b16 %v1973, %v1972
        %v1976 = vpack.c.b16 %v1974, %v1974
        %v1978 = vsel %vm1771, %v1721, 0
        %v1981 = vsel %vm1804, %v1976, 0
        %1983 = vmatprep.subr.bf16.mxu0 0
        %1984 = vmatpush1.bf16.msra.mxu0 %v1975
        %1985 = vmatprep.subr.bf16.mxu0 0
        %1986 = vmatpush1.bf16.msra.mxu0 %v1981
        %1987 = vmatprep.subr.bf16.mxu0 0
        %1988 = vmatpush1.bf16.msra.mxu0 0
        %1989 = vmatprep.subr.bf16.mxu0 0
        %1990 = vmatpush1.bf16.msra.mxu0 0
        %1991 = vmatprep.subr.bf16.mxu0 0
        %1992 = vmatpush1.bf16.msra.mxu0 0
        %1993 = vmatprep.subr.bf16.mxu0 0
        %1994 = vmatpush1.bf16.msra.mxu0 0
        %1995 = vmatprep.subr.bf16.mxu0 0
        %1996 = vmatpush1.bf16.msra.mxu0 0
        %1997 = vmatprep.subr.bf16.mxu0 0
        %1998 = vmatpush1.bf16.msra.mxu0 0
        %1999 = vmatprep.subr.bf16.mxu0 0
        %2000 = vmatpush1.bf16.msra.mxu0 0
        %2001 = vmatprep.subr.bf16.mxu0 0
        %2002 = vmatpush1.bf16.msra.mxu0 0
        %2003 = vmatprep.subr.bf16.mxu0 0
        %2004 = vmatpush1.bf16.msra.mxu0 0
        %2005 = vmatprep.subr.bf16.mxu0 0
        %2006 = vmatpush1.bf16.msra.mxu0 0
        %2007 = vmatprep.subr.bf16.mxu0 0
        %2008 = vmatpush1.bf16.msra.mxu0 0
        %2009 = vmatprep.subr.bf16.mxu0 0
        %2010 = vmatpush1.bf16.msra.mxu0 0
        %2011 = vmatprep.subr.bf16.mxu0 0
        %2012 = vmatpush1.bf16.msra.mxu0 0
        %2013 = vmatprep.subr.bf16.mxu0 0
        %2014 = vmatpush1.bf16.msra.mxu0 0
        %2015 = vmatprep.mubr.bf16.mxu0 0
        %2016 = vmatmul.mubr.bf16.gmra.mrb[0].mxu0 %v1978
        %v2017 = vpop.f32.mrb[0].mxu0
        %v2018 = vadd.f32 %v1843, %v2017
        %v2019 = vpop.f32.mrb[0].mxu0
        %v2020 = vpop.f32.mrb[0].mxu0
        %v2021 = vadd.f32 %v1846, %v2020
        %v2022 = vpop.f32.mrb[0].mxu0
        %2023 = vmatprep.mubr.bf16.mxu0 0
        %2024 = vmatmul.mubr.bf16.gmra.mrb[0].mxu0 %v1772
        %v2025 = vpop.f32.mrb[0].mxu0
        %v2026 = vadd.f32 %v1851, %v2025
        %v2027 = vpop.f32.mrb[0].mxu0
        %v2028 = vpop.f32.mrb[0].mxu0
        %v2029 = vadd.f32 %v1854, %v2028
        %v2030 = vpop.f32.mrb[0].mxu0
        %2031 = vmatprep.mubr.bf16.mxu0 0
        %2032 = vmatmul.mubr.bf16.gmra.mrb[0].mxu0 %v1774
        %v2033 = vpop.f32.mrb[0].mxu0
        %v2034 = vadd.f32 %v1859, %v2033
        %v2035 = vpop.f32.mrb[0].mxu0
        %v2036 = vpop.f32.mrb[0].mxu0
        %v2037 = vadd.f32 %v1862, %v2036
        %v2038 = vpop.f32.mrb[0].mxu0
        %2039 = vmatprep.mubr.bf16.mxu0 0
        %2040 = vmatmul.mubr.bf16.gmra.mrb[0].mxu0 %v1776
        %v2041 = vpop.f32.mrb[0].mxu0
        %v2042 = vadd.f32 %v1867, %v2041
        %v2043 = vpop.f32.mrb[0].mxu0
        %v2044 = vpop.f32.mrb[0].mxu0
        %v2045 = vadd.f32 %v1870, %v2044
        %v2046 = vpop.f32.mrb[0].mxu0
        %2047 = vmatprep.mubr.bf16.mxu0 0
        %2048 = vmatmul.mubr.bf16.gmra.mrb[0].mxu0 %v1778
        %v2049 = vpop.f32.mrb[0].mxu0
        %v2050 = vadd.f32 %v1875, %v2049
        %v2051 = vpop.f32.mrb[0].mxu0
        %v2052 = vpop.f32.mrb[0].mxu0
        %v2053 = vadd.f32 %v1878, %v2052
        %v2054 = vpop.f32.mrb[0].mxu0
        %2055 = vmatprep.mubr.bf16.mxu0 0
        %2056 = vmatmul.mubr.bf16.gmra.mrb[0].mxu0 %v1780
        %v2057 = vpop.f32.mrb[0].mxu0
        %v2058 = vadd.f32 %v1883, %v2057
        %v2059 = vpop.f32.mrb[0].mxu0
        %v2060 = vpop.f32.mrb[0].mxu0
        %v2061 = vadd.f32 %v1886, %v2060
        %v2062 = vpop.f32.mrb[0].mxu0
        %2063 = vmatprep.mubr.bf16.mxu0 0
        %2064 = vmatmul.mubr.bf16.gmra.mrb[0].mxu0 %v1782
        %v2065 = vpop.f32.mrb[0].mxu0
        %v2066 = vadd.f32 %v1891, %v2065
        %v2067 = vpop.f32.mrb[0].mxu0
        %v2068 = vpop.f32.mrb[0].mxu0
        %v2069 = vadd.f32 %v1894, %v2068
        %v2070 = vpop.f32.mrb[0].mxu0
        %2071 = vmatprep.mubr.bf16.mxu0 0
        %2072 = vmatmul.mubr.bf16.gmra.mrb[0].mxu0 %v1784
        %v2073 = vpop.f32.mrb[0].mxu0
        %v2074 = vadd.f32 %v1899, %v2073
        %v2075 = vpop.f32.mrb[0].mxu0
        %v2076 = vpop.f32.mrb[0].mxu0
        %v2077 = vadd.f32 %v1902, %v2076
        %v2078 = vpop.f32.mrb[0].mxu0
        %2079 = vmatprep.mubr.bf16.mxu0 0
        %2080 = vmatmul.mubr.bf16.gmra.mrb[0].mxu0 %v1786
        %v2081 = vpop.f32.mrb[0].mxu0
        %v2082 = vadd.f32 %v1907, %v2081
        %v2083 = vpop.f32.mrb[0].mxu0
        %v2084 = vpop.f32.mrb[0].mxu0
        %v2085 = vadd.f32 %v1910, %v2084
        %v2086 = vpop.f32.mrb[0].mxu0
        %2087 = vmatprep.mubr.bf16.mxu0 0
        %2088 = vmatmul.mubr.bf16.gmra.mrb[0].mxu0 %v1788
        %v2089 = vpop.f32.mrb[0].mxu0
        %v2090 = vadd.f32 %v1915, %v2089
        %v2091 = vpop.f32.mrb[0].mxu0
        %v2092 = vpop.f32.mrb[0].mxu0
        %v2093 = vadd.f32 %v1918, %v2092
        %v2094 = vpop.f32.mrb[0].mxu0
        %2095 = vmatprep.mubr.bf16.mxu0 0
        %2096 = vmatmul.mubr.bf16.gmra.mrb[0].mxu0 %v1790
        %v2097 = vpop.f32.mrb[0].mxu0
        %v2098 = vadd.f32 %v1923, %v2097
        %v2099 = vpop.f32.mrb[0].mxu0
        %v2100 = vpop.f32.mrb[0].mxu0
        %v2101 = vadd.f32 %v1926, %v2100
        %v2102 = vpop.f32.mrb[0].mxu0
        %2103 = vmatprep.mubr.bf16.mxu0 0
        %2104 = vmatmul.mubr.bf16.gmra.mrb[0].mxu0 %v1792
        %v2105 = vpop.f32.mrb[0].mxu0
        %v2106 = vadd.f32 %v1931, %v2105
        %v2107 = vpop.f32.mrb[0].mxu0
        %v2108 = vpop.f32.mrb[0].mxu0
        %v2109 = vadd.f32 %v1934, %v2108
        %v2110 = vpop.f32.mrb[0].mxu0
        %2111 = vmatprep.mubr.bf16.mxu0 0
        %2112 = vmatmul.mubr.bf16.gmra.mrb[0].mxu0 %v1794
        %v2113 = vpop.f32.mrb[0].mxu0
        %v2114 = vadd.f32 %v1939, %v2113
        %v2115 = vpop.f32.mrb[0].mxu0
        %v2116 = vpop.f32.mrb[0].mxu0
        %v2117 = vadd.f32 %v1942, %v2116
        %v2118 = vpop.f32.mrb[0].mxu0
        %2119 = vmatprep.mubr.bf16.mxu0 0
        %2120 = vmatmul.mubr.bf16.gmra.mrb[0].mxu0 %v1796
        %v2121 = vpop.f32.mrb[0].mxu0
        %v2122 = vadd.f32 %v1947, %v2121
        %v2123 = vpop.f32.mrb[0].mxu0
        %v2124 = vpop.f32.mrb[0].mxu0
        %v2125 = vadd.f32 %v1950, %v2124
        %v2126 = vpop.f32.mrb[0].mxu0
        %2127 = vmatprep.mubr.bf16.mxu0 0
        %2128 = vmatmul.mubr.bf16.gmra.mrb[0].mxu0 %v1798
        %v2129 = vpop.f32.mrb[0].mxu0
        %v2130 = vadd.f32 %v1955, %v2129
        %v2131 = vpop.f32.mrb[0].mxu0
        %v2132 = vpop.f32.mrb[0].mxu0
        %v2133 = vadd.f32 %v1958, %v2132
        %v2134 = vpop.f32.mrb[0].mxu0
        %2135 = vmatprep.mubr.bf16.mxu0 0
        %2136 = vmatmul.mubr.bf16.gmra.mrb[0].mxu0 %v1800
        %v2137 = vpop.f32.mrb[0].mxu0
        %v2138 = vadd.f32 %v1963, %v2137
        %v2139 = vpop.f32.mrb[0].mxu0
        %v2140 = vpop.f32.mrb[0].mxu0
        %v2141 = vadd.f32 %v1966, %v2140
        %v2142 = vpop.f32.mrb[0].mxu0
        %2143 = vdwg.mxu0
        %v2144 = vld [vmem:[#allocation7 + $0x18] sm:$0xf]
        %v2145 = vld [vmem:[#allocation7 + $0x1c] sm:$0xf]
        %v2146 = vld [vmem:[#allocation7 + $0x20] sm:$0xf]
        %v2150 = vunpack.c.l.b16 %v2144
        %v2151 = vunpack.c.l.b16 %v2145
        %v2152 = vunpack.c.l.b16 %v2146
        %v2153 = vpack.c.b16 %v2151, %v2150
        %v2154 = vpack.c.b16 %v2152, %v2152
        %v2156 = vsel %vm1771, %v1755, 0
        %v2159 = vsel %vm1804, %v2154, 0
        %2161 = vmatprep.subr.bf16.mxu0 0
        %2162 = vmatpush1.bf16.msra.mxu0 %v2153
        %2163 = vmatprep.subr.bf16.mxu0 0
        %2164 = vmatpush1.bf16.msra.mxu0 %v2159
        %2165 = vmatprep.subr.bf16.mxu0 0
        %2166 = vmatpush1.bf16.msra.mxu0 0
        %2167 = vmatprep.subr.bf16.mxu0 0
        %2168 = vmatpush1.bf16.msra.mxu0 0
        %2169 = vmatprep.subr.bf16.mxu0 0
        %2170 = vmatpush1.bf16.msra.mxu0 0
        %2171 = vmatprep.subr.bf16.mxu0 0
        %2172 = vmatpush1.bf16.msra.mxu0 0
        %2173 = vmatprep.subr.bf16.mxu0 0
        %2174 = vmatpush1.bf16.msra.mxu0 0
        %2175 = vmatprep.subr.bf16.mxu0 0
        %2176 = vmatpush1.bf16.msra.mxu0 0
        %2177 = vmatprep.subr.bf16.mxu0 0
        %2178 = vmatpush1.bf16.msra.mxu0 0
        %2179 = vmatprep.subr.bf16.mxu0 0
        %2180 = vmatpush1.bf16.msra.mxu0 0
        %2181 = vmatprep.subr.bf16.mxu0 0
        %2182 = vmatpush1.bf16.msra.mxu0 0
        %2183 = vmatprep.subr.bf16.mxu0 0
        %2184 = vmatpush1.bf16.msra.mxu0 0
        %2185 = vmatprep.subr.bf16.mxu0 0
        %2186 = vmatpush1.bf16.msra.mxu0 0
        %2187 = vmatprep.subr.bf16.mxu0 0
        %2188 = vmatpush1.bf16.msra.mxu0 0
        %2189 = vmatprep.subr.bf16.mxu0 0
        %2190 = vmatpush1.bf16.msra.mxu0 0
        %2191 = vmatprep.subr.bf16.mxu0 0
        %2192 = vmatpush1.bf16.msra.mxu0 0
        %2193 = vmatprep.mubr.bf16.mxu0 0
        %2194 = vmatmul.mubr.bf16.gmra.mrb[0].mxu0 %v1774
        %v2195 = vpop.f32.mrb[0].mxu0
        %v2196 = vadd.f32 0.0, %v2195
        %v2197 = vpop.f32.mrb[0].mxu0
        %v2198 = vpop.f32.mrb[0].mxu0
        %v2199 = vadd.f32 0.0, %v2198
        %v2200 = vpop.f32.mrb[0].mxu0
        %2201 = vmatprep.mubr.bf16.mxu0 0
        %2202 = vmatmul.mubr.bf16.gmra.mrb[0].mxu0 %v1776
        %v2203 = vpop.f32.mrb[0].mxu0
        %v2204 = vadd.f32 0.0, %v2203
        %v2205 = vpop.f32.mrb[0].mxu0
        %v2206 = vpop.f32.mrb[0].mxu0
        %v2207 = vadd.f32 0.0, %v2206
        %v2208 = vpop.f32.mrb[0].mxu0
        %2209 = vmatprep.mubr.bf16.mxu0 0
        %2210 = vmatmul.mubr.bf16.gmra.mrb[0].mxu0 %v1778
        %v2211 = vpop.f32.mrb[0].mxu0
        %v2212 = vadd.f32 0.0, %v2211
        %v2213 = vpop.f32.mrb[0].mxu0
        %v2214 = vpop.f32.mrb[0].mxu0
        %v2215 = vadd.f32 0.0, %v2214
        %v2216 = vpop.f32.mrb[0].mxu0
        %2217 = vmatprep.mubr.bf16.mxu0 0
        %2218 = vmatmul.mubr.bf16.gmra.mrb[0].mxu0 %v1780
        %v2219 = vpop.f32.mrb[0].mxu0
        %v2220 = vadd.f32 0.0, %v2219
        %v2221 = vpop.f32.mrb[0].mxu0
        %v2222 = vpop.f32.mrb[0].mxu0
        %v2223 = vadd.f32 0.0, %v2222
        %v2224 = vpop.f32.mrb[0].mxu0
        %2225 = vmatprep.mubr.bf16.mxu0 0
        %2226 = vmatmul.mubr.bf16.gmra.mrb[0].mxu0 %v1782
        %v2227 = vpop.f32.mrb[0].mxu0
        %v2228 = vadd.f32 0.0, %v2227
        %v2229 = vpop.f32.mrb[0].mxu0
        %v2230 = vpop.f32.mrb[0].mxu0
        %v2231 = vadd.f32 0.0, %v2230
        %v2232 = vpop.f32.mrb[0].mxu0
        %2233 = vmatprep.mubr.bf16.mxu0 0
        %2234 = vmatmul.mubr.bf16.gmra.mrb[0].mxu0 %v1784
        %v2235 = vpop.f32.mrb[0].mxu0
        %v2236 = vadd.f32 0.0, %v2235
        %v2237 = vpop.f32.mrb[0].mxu0
        %v2238 = vpop.f32.mrb[0].mxu0
        %v2239 = vadd.f32 0.0, %v2238
        %v2240 = vpop.f32.mrb[0].mxu0
        %2241 = vmatprep.mubr.bf16.mxu0 0
        %2242 = vmatmul.mubr.bf16.gmra.mrb[0].mxu0 %v1786
        %v2243 = vpop.f32.mrb[0].mxu0
        %v2244 = vadd.f32 0.0, %v2243
        %v2245 = vpop.f32.mrb[0].mxu0
        %v2246 = vpop.f32.mrb[0].mxu0
        %v2247 = vadd.f32 0.0, %v2246
        %v2248 = vpop.f32.mrb[0].mxu0
        %2249 = vmatprep.mubr.bf16.mxu0 0
        %2250 = vmatmul.mubr.bf16.gmra.mrb[0].mxu0 %v1788
        %v2251 = vpop.f32.mrb[0].mxu0
        %v2252 = vadd.f32 0.0, %v2251
        %v2253 = vpop.f32.mrb[0].mxu0
        %v2254 = vpop.f32.mrb[0].mxu0
        %v2255 = vadd.f32 0.0, %v2254
        %v2256 = vpop.f32.mrb[0].mxu0
        %2257 = vmatprep.mubr.bf16.mxu0 0
        %2258 = vmatmul.mubr.bf16.gmra.mrb[0].mxu0 %v1790
        %v2259 = vpop.f32.mrb[0].mxu0
        %v2260 = vadd.f32 0.0, %v2259
        %v2261 = vpop.f32.mrb[0].mxu0
        %v2262 = vpop.f32.mrb[0].mxu0
        %v2263 = vadd.f32 0.0, %v2262
        %v2264 = vpop.f32.mrb[0].mxu0
        %2265 = vmatprep.mubr.bf16.mxu0 0
        %2266 = vmatmul.mubr.bf16.gmra.mrb[0].mxu0 %v1792
        %v2267 = vpop.f32.mrb[0].mxu0
        %v2268 = vadd.f32 0.0, %v2267
        %v2269 = vpop.f32.mrb[0].mxu0
        %v2270 = vpop.f32.mrb[0].mxu0
        %v2271 = vadd.f32 0.0, %v2270
        %v2272 = vpop.f32.mrb[0].mxu0
        %2273 = vmatprep.mubr.bf16.mxu0 0
        %2274 = vmatmul.mubr.bf16.gmra.mrb[0].mxu0 %v1794
        %v2275 = vpop.f32.mrb[0].mxu0
        %v2276 = vadd.f32 0.0, %v2275
        %v2277 = vpop.f32.mrb[0].mxu0
        %v2278 = vpop.f32.mrb[0].mxu0
        %v2279 = vadd.f32 0.0, %v2278
        %v2280 = vpop.f32.mrb[0].mxu0
        %2281 = vmatprep.mubr.bf16.mxu0 0
        %2282 = vmatmul.mubr.bf16.gmra.mrb[0].mxu0 %v1796
        %v2283 = vpop.f32.mrb[0].mxu0
        %v2284 = vadd.f32 0.0, %v2283
        %v2285 = vpop.f32.mrb[0].mxu0
        %v2286 = vpop.f32.mrb[0].mxu0
        %v2287 = vadd.f32 0.0, %v2286
        %v2288 = vpop.f32.mrb[0].mxu0
        %2289 = vmatprep.mubr.bf16.mxu0 0
        %2290 = vmatmul.mubr.bf16.gmra.mrb[0].mxu0 %v1798
        %v2291 = vpop.f32.mrb[0].mxu0
        %v2292 = vadd.f32 0.0, %v2291
        %v2293 = vpop.f32.mrb[0].mxu0
        %v2294 = vpop.f32.mrb[0].mxu0
        %v2295 = vadd.f32 0.0, %v2294
        %v2296 = vpop.f32.mrb[0].mxu0
        %2297 = vmatprep.mubr.bf16.mxu0 0
        %2298 = vmatmul.mubr.bf16.gmra.mrb[0].mxu0 %v1800
        %v2299 = vpop.f32.mrb[0].mxu0
        %v2300 = vadd.f32 0.0, %v2299
        %v2301 = vpop.f32.mrb[0].mxu0
        %v2302 = vpop.f32.mrb[0].mxu0
        %v2303 = vadd.f32 0.0, %v2302
        %v2304 = vpop.f32.mrb[0].mxu0
        %2305 = vmatprep.mubr.bf16.mxu0 0
        %2306 = vmatmul.mubr.bf16.gmra.mrb[0].mxu0 %v1802
        %v2307 = vpop.f32.mrb[0].mxu0
        %v2308 = vadd.f32 0.0, %v2307
        %v2309 = vpop.f32.mrb[0].mxu0
        %v2310 = vpop.f32.mrb[0].mxu0
        %v2311 = vadd.f32 0.0, %v2310
        %v2312 = vpop.f32.mrb[0].mxu0
        %2313 = vmatprep.mubr.bf16.mxu0 0
        %2314 = vmatmul.mubr.bf16.gmra.mrb[0].mxu0 %v2156
        %v2315 = vpop.f32.mrb[0].mxu0
        %v2316 = vadd.f32 0.0, %v2315
        %v2317 = vpop.f32.mrb[0].mxu0
        %v2318 = vpop.f32.mrb[0].mxu0
        %v2319 = vadd.f32 0.0, %v2318
        %v2320 = vpop.f32.mrb[0].mxu0
        %2321 = vdwg.mxu0
        %v2322 = vadd.f32 %v2018, %v2196
        %v2323 = vadd.f32 %v2021, %v2199
        %v2324 = vadd.f32 %v2026, %v2204
        %v2325 = vadd.f32 %v2029, %v2207
        %v2326 = vadd.f32 %v2034, %v2212
        %v2327 = vadd.f32 %v2037, %v2215
        %v2328 = vadd.f32 %v2042, %v2220
        %v2329 = vadd.f32 %v2045, %v2223
        %v2330 = vadd.f32 %v2050, %v2228
        %v2331 = vadd.f32 %v2053, %v2231
        %v2332 = vadd.f32 %v2058, %v2236
        %v2333 = vadd.f32 %v2061, %v2239
        %v2334 = vadd.f32 %v2066, %v2244
        %v2335 = vadd.f32 %v2069, %v2247
        %v2336 = vadd.f32 %v2074, %v2252
        %v2337 = vadd.f32 %v2077, %v2255
        %v2338 = vadd.f32 %v2082, %v2260
        %v2339 = vadd.f32 %v2085, %v2263
        %v2340 = vadd.f32 %v2090, %v2268
        %v2341 = vadd.f32 %v2093, %v2271
        %v2342 = vadd.f32 %v2098, %v2276
        %v2343 = vadd.f32 %v2101, %v2279
        %v2344 = vadd.f32 %v2106, %v2284
        %v2345 = vadd.f32 %v2109, %v2287
        %v2346 = vadd.f32 %v2114, %v2292
        %v2347 = vadd.f32 %v2117, %v2295
        %v2348 = vadd.f32 %v2122, %v2300
        %v2349 = vadd.f32 %v2125, %v2303
        %v2350 = vadd.f32 %v2130, %v2308
        %v2351 = vadd.f32 %v2133, %v2311
        %v2352 = vadd.f32 %v2138, %v2316
        %v2353 = vadd.f32 %v2141, %v2319
        %v2354 = vld [vmem:[#allocation9] sm:$0x1]
        %v2356 = vlaneseq
        %v2357 = vshrl.u32 %v2356, 7
        %v2358 = vsub.s32 0, %v2357
        %v2359 = vrot.slane %v2354, %v2358
        %v2361 = vadd.f32 %v2322, %v2359
        %v2362 = vadd.f32 %v2323, %v2359
        %v2363 = vadd.f32 %v2324, %v2359
        %v2364 = vadd.f32 %v2325, %v2359
        %v2365 = vadd.f32 %v2326, %v2359
        %v2366 = vadd.f32 %v2327, %v2359
        %v2367 = vadd.f32 %v2328, %v2359
        %v2368 = vadd.f32 %v2329, %v2359
        %v2369 = vadd.f32 %v2330, %v2359
        %v2370 = vadd.f32 %v2331, %v2359
        %v2371 = vadd.f32 %v2332, %v2359
        %v2372 = vadd.f32 %v2333, %v2359
        %v2373 = vadd.f32 %v2334, %v2359
        %v2374 = vadd.f32 %v2335, %v2359
        %v2375 = vadd.f32 %v2336, %v2359
        %v2376 = vadd.f32 %v2337, %v2359
        %v2377 = vadd.f32 %v2338, %v2359
        %v2378 = vadd.f32 %v2339, %v2359
        %v2379 = vadd.f32 %v2340, %v2359
        %v2380 = vadd.f32 %v2341, %v2359
        %v2381 = vadd.f32 %v2342, %v2359
        %v2382 = vadd.f32 %v2343, %v2359
        %v2383 = vadd.f32 %v2344, %v2359
        %v2384 = vadd.f32 %v2345, %v2359
        %v2385 = vadd.f32 %v2346, %v2359
        %v2386 = vadd.f32 %v2347, %v2359
        %v2387 = vadd.f32 %v2348, %v2359
        %v2388 = vadd.f32 %v2349, %v2359
        %v2389 = vadd.f32 %v2350, %v2359
        %v2390 = vadd.f32 %v2351, %v2359
        %v2391 = vadd.f32 %v2352, %v2359
        %v2392 = vadd.f32 %v2353, %v2359
        %v2393 = vmax.f32 %v2361, 0.0
        %v2394 = vmax.f32 %v2362, 0.0
        %v2395 = vmax.f32 %v2363, 0.0
        %v2396 = vmax.f32 %v2364, 0.0
        %v2397 = vmax.f32 %v2365, 0.0
        %v2398 = vmax.f32 %v2366, 0.0
        %v2399 = vmax.f32 %v2367, 0.0
        %v2400 = vmax.f32 %v2368, 0.0
        %v2401 = vmax.f32 %v2369, 0.0
        %v2402 = vmax.f32 %v2370, 0.0
        %v2403 = vmax.f32 %v2371, 0.0
        %v2404 = vmax.f32 %v2372, 0.0
        %v2405 = vmax.f32 %v2373, 0.0
        %v2406 = vmax.f32 %v2374, 0.0
        %v2407 = vmax.f32 %v2375, 0.0
        %v2408 = vmax.f32 %v2376, 0.0
        %v2409 = vmax.f32 %v2377, 0.0
        %v2410 = vmax.f32 %v2378, 0.0
        %v2411 = vmax.f32 %v2379, 0.0
        %v2412 = vmax.f32 %v2380, 0.0
        %v2413 = vmax.f32 %v2381, 0.0
        %v2414 = vmax.f32 %v2382, 0.0
        %v2415 = vmax.f32 %v2383, 0.0
        %v2416 = vmax.f32 %v2384, 0.0
        %v2417 = vmax.f32 %v2385, 0.0
        %v2418 = vmax.f32 %v2386, 0.0
        %v2419 = vmax.f32 %v2387, 0.0
        %v2420 = vmax.f32 %v2388, 0.0
        %v2421 = vmax.f32 %v2389, 0.0
        %v2422 = vmax.f32 %v2390, 0.0
        %v2423 = vmax.f32 %v2391, 0.0
        %v2424 = vmax.f32 %v2392, 0.0
        %vm2425 = vcmask 27648
        %2426 = vst.msk [vmem:[#allocation3] sm:$0xf] %vm2425, 0
        %2427 = vst.msk [vmem:[#allocation3 + $0x4] sm:$0xf] %vm2425, 0
        %vm2428 = vcmask 24576
        %2429 = vst.msk [vmem:[#allocation3 + $0x8] sm:$0x1] %vm2428, 0
        %s2430 = scalar_lea.vmem [#allocation3], 204
        %2431 = vst.msk [vmem:[%s2430] sm:$0xf] %vm2425, 0
        %2432 = vst.msk [vmem:[%s2430 + $0x4] sm:$0xf] %vm2425, 0
        %2433 = vst.msk [vmem:[%s2430 + $0x8] sm:$0x1] %vm2428, 0
        %vm2434 = vcmask 24576
        %vm2435 = vmand %vm2434, %vm391
        %v2436 = vld [vmem:[#allocation3] sm:$0x1]
        %v2437 = vsel %vm2435, 0, %v2436
        %2438 = vst [vmem:[#allocation3] sm:$0x1] %v2437
        %v2439 = vld [vmem:[#allocation3 + $0xc] sm:$0x1]
        %v2440 = vsel %vm2435, 0, %v2439
        %2441 = vst [vmem:[#allocation3 + $0xc] sm:$0x1] %v2440
        %v2442 = vld [vmem:[#allocation3 + $0x18] sm:$0x1]
        %v2443 = vsel %vm2435, 0, %v2442
        %2444 = vst [vmem:[#allocation3 + $0x18] sm:$0x1] %v2443
        %v2445 = vld [vmem:[#allocation3 + $0x24] sm:$0x1]
        %v2446 = vsel %vm2435, 0, %v2445
        %2447 = vst [vmem:[#allocation3 + $0x24] sm:$0x1] %v2446
        %v2448 = vld [vmem:[#allocation3 + $0x30] sm:$0x1]
        %v2449 = vsel %vm2435, 0, %v2448
        %2450 = vst [vmem:[#allocation3 + $0x30] sm:$0x1] %v2449
        %v2451 = vld [vmem:[#allocation3 + $0x3c] sm:$0x1]
        %v2452 = vsel %vm2435, 0, %v2451
        %2453 = vst [vmem:[#allocation3 + $0x3c] sm:$0x1] %v2452
        %v2454 = vld [vmem:[#allocation3 + $0x48] sm:$0x1]
        %v2455 = vsel %vm2435, 0, %v2454
        %2456 = vst [vmem:[#allocation3 + $0x48] sm:$0x1] %v2455
        %v2457 = vld [vmem:[#allocation3 + $0x54] sm:$0x1]
        %v2458 = vsel %vm2435, 0, %v2457
        %2459 = vst [vmem:[#allocation3 + $0x54] sm:$0x1] %v2458
        %v2460 = vld [vmem:[#allocation3 + $0x60] sm:$0x1]
        %v2461 = vsel %vm2435, 0, %v2460
        %2462 = vst [vmem:[#allocation3 + $0x60] sm:$0x1] %v2461
        %v2463 = vld [vmem:[#allocation3 + $0x6c] sm:$0x1]
        %v2464 = vsel %vm2435, 0, %v2463
        %2465 = vst [vmem:[#allocation3 + $0x6c] sm:$0x1] %v2464
        %v2466 = vld [vmem:[#allocation3 + $0x78] sm:$0x1]
        %v2467 = vsel %vm2435, 0, %v2466
        %2468 = vst [vmem:[#allocation3 + $0x78] sm:$0x1] %v2467
        %v2469 = vld [vmem:[#allocation3 + $0x84] sm:$0x1]
        %v2470 = vsel %vm2435, 0, %v2469
        %2471 = vst [vmem:[#allocation3 + $0x84] sm:$0x1] %v2470
        %v2472 = vld [vmem:[#allocation3 + $0x90] sm:$0x1]
        %v2473 = vsel %vm2435, 0, %v2472
        %2474 = vst [vmem:[#allocation3 + $0x90] sm:$0x1] %v2473
        %v2475 = vld [vmem:[#allocation3 + $0x9c] sm:$0x1]
        %v2476 = vsel %vm2435, 0, %v2475
        %2477 = vst [vmem:[#allocation3 + $0x9c] sm:$0x1] %v2476
        %v2478 = vld [vmem:[#allocation3 + $0xa8] sm:$0x1]
        %v2479 = vsel %vm2435, 0, %v2478
        %2480 = vst [vmem:[#allocation3 + $0xa8] sm:$0x1] %v2479
        %v2481 = vld [vmem:[#allocation3 + $0xb4] sm:$0x1]
        %v2482 = vsel %vm2435, 0, %v2481
        %2483 = vst [vmem:[#allocation3 + $0xb4] sm:$0x1] %v2482
        %v2484 = vld [vmem:[#allocation3 + $0xc0] sm:$0x1]
        %v2485 = vsel %vm2435, 0, %v2484
        %2486 = vst [vmem:[#allocation3 + $0xc0] sm:$0x1] %v2485
        %v2487 = vld [vmem:[#allocation3 + $0xcc] sm:$0x1]
        %v2488 = vsel %vm2435, 0, %v2487
        %2489 = vst [vmem:[#allocation3 + $0xcc] sm:$0x1] %v2488
        %vm2490 = vmand %vm2434, %vm447
        %v2491 = vld [vmem:[#allocation3 + $0x8] sm:$0x1]
        %v2492 = vsel %vm2490, 0, %v2491
        %2493 = vst [vmem:[#allocation3 + $0x8] sm:$0x1] %v2492
        %v2494 = vld [vmem:[#allocation3 + $0x14] sm:$0x1]
        %v2495 = vsel %vm2490, 0, %v2494
        %2496 = vst [vmem:[#allocation3 + $0x14] sm:$0x1] %v2495
        %v2497 = vld [vmem:[#allocation3 + $0x20] sm:$0x1]
        %v2498 = vsel %vm2490, 0, %v2497
        %2499 = vst [vmem:[#allocation3 + $0x20] sm:$0x1] %v2498
        %v2500 = vld [vmem:[#allocation3 + $0x2c] sm:$0x1]
        %v2501 = vsel %vm2490, 0, %v2500
        %2502 = vst [vmem:[#allocation3 + $0x2c] sm:$0x1] %v2501
        %v2503 = vld [vmem:[#allocation3 + $0x38] sm:$0x1]
        %v2504 = vsel %vm2490, 0, %v2503
        %2505 = vst [vmem:[#allocation3 + $0x38] sm:$0x1] %v2504
        %v2506 = vld [vmem:[#allocation3 + $0x44] sm:$0x1]
        %v2507 = vsel %vm2490, 0, %v2506
        %2508 = vst [vmem:[#allocation3 + $0x44] sm:$0x1] %v2507
        %v2509 = vld [vmem:[#allocation3 + $0x50] sm:$0x1]
        %v2510 = vsel %vm2490, 0, %v2509
        %2511 = vst [vmem:[#allocation3 + $0x50] sm:$0x1] %v2510
        %v2512 = vld [vmem:[#allocation3 + $0x5c] sm:$0x1]
        %v2513 = vsel %vm2490, 0, %v2512
        %2514 = vst [vmem:[#allocation3 + $0x5c] sm:$0x1] %v2513
        %v2515 = vld [vmem:[#allocation3 + $0x68] sm:$0x1]
        %v2516 = vsel %vm2490, 0, %v2515
        %2517 = vst [vmem:[#allocation3 + $0x68] sm:$0x1] %v2516
        %v2518 = vld [vmem:[#allocation3 + $0x74] sm:$0x1]
        %v2519 = vsel %vm2490, 0, %v2518
        %2520 = vst [vmem:[#allocation3 + $0x74] sm:$0x1] %v2519
        %v2521 = vld [vmem:[#allocation3 + $0x80] sm:$0x1]
        %v2522 = vsel %vm2490, 0, %v2521
        %2523 = vst [vmem:[#allocation3 + $0x80] sm:$0x1] %v2522
        %v2524 = vld [vmem:[#allocation3 + $0x8c] sm:$0x1]
        %v2525 = vsel %vm2490, 0, %v2524
        %2526 = vst [vmem:[#allocation3 + $0x8c] sm:$0x1] %v2525
        %v2527 = vld [vmem:[#allocation3 + $0x98] sm:$0x1]
        %v2528 = vsel %vm2490, 0, %v2527
        %2529 = vst [vmem:[#allocation3 + $0x98] sm:$0x1] %v2528
        %v2530 = vld [vmem:[#allocation3 + $0xa4] sm:$0x1]
        %v2531 = vsel %vm2490, 0, %v2530
        %2532 = vst [vmem:[#allocation3 + $0xa4] sm:$0x1] %v2531
        %v2533 = vld [vmem:[#allocation3 + $0xb0] sm:$0x1]
        %v2534 = vsel %vm2490, 0, %v2533
        %2535 = vst [vmem:[#allocation3 + $0xb0] sm:$0x1] %v2534
        %v2536 = vld [vmem:[#allocation3 + $0xbc] sm:$0x1]
        %v2537 = vsel %vm2490, 0, %v2536
        %2538 = vst [vmem:[#allocation3 + $0xbc] sm:$0x1] %v2537
        %v2539 = vld [vmem:[#allocation3 + $0xc8] sm:$0x1]
        %v2540 = vsel %vm2490, 0, %v2539
        %2541 = vst [vmem:[#allocation3 + $0xc8] sm:$0x1] %v2540
        %v2542 = vld [vmem:[#allocation3 + $0xd4] sm:$0x1]
        %v2543 = vsel %vm2490, 0, %v2542
        %2544 = vst [vmem:[#allocation3 + $0xd4] sm:$0x1] %v2543
        %v2545 = vpack.c.bf16 %v2394, %v2393
        %v2546 = vpack.c.bf16 %v2396, %v2395
        %v2547 = vpack.c.bf16 %v2398, %v2397
        %v2548 = vpack.c.bf16 %v2400, %v2399
        %v2549 = vpack.c.bf16 %v2402, %v2401
        %v2550 = vpack.c.bf16 %v2404, %v2403
        %v2551 = vpack.c.bf16 %v2406, %v2405
        %v2552 = vpack.c.bf16 %v2408, %v2407
        %v2553 = vpack.c.bf16 %v2410, %v2409
        %v2554 = vpack.c.bf16 %v2412, %v2411
        %v2555 = vpack.c.bf16 %v2414, %v2413
        %v2556 = vpack.c.bf16 %v2416, %v2415
        %v2557 = vpack.c.bf16 %v2418, %v2417
        %v2558 = vpack.c.bf16 %v2420, %v2419
        %v2559 = vpack.c.bf16 %v2422, %v2421
        %v2560 = vpack.c.bf16 %v2424, %v2423
        %v2577 = vunpack.c.l.b16 %v2545
        %v2578 = vunpack.c.h.b16 %v2545
        %v2579 = vunpack.c.l.b16 %v2546
        %v2580 = vunpack.c.h.b16 %v2546
        %v2581 = vunpack.c.l.b16 %v2547
        %v2582 = vunpack.c.h.b16 %v2547
        %v2583 = vunpack.c.l.b16 %v2548
        %v2584 = vunpack.c.h.b16 %v2548
        %v2585 = vunpack.c.l.b16 %v2549
        %v2586 = vunpack.c.h.b16 %v2549
        %v2587 = vunpack.c.l.b16 %v2550
        %v2588 = vunpack.c.h.b16 %v2550
        %v2589 = vunpack.c.l.b16 %v2551
        %v2590 = vunpack.c.h.b16 %v2551
        %v2591 = vunpack.c.l.b16 %v2552
        %v2592 = vunpack.c.h.b16 %v2552
        %v2593 = vunpack.c.l.b16 %v2553
        %v2594 = vunpack.c.h.b16 %v2553
        %v2595 = vunpack.c.l.b16 %v2554
        %v2596 = vunpack.c.h.b16 %v2554
        %v2597 = vunpack.c.l.b16 %v2555
        %v2598 = vunpack.c.h.b16 %v2555
        %v2599 = vunpack.c.l.b16 %v2556
        %v2600 = vunpack.c.h.b16 %v2556
        %v2601 = vunpack.c.l.b16 %v2557
        %v2602 = vunpack.c.h.b16 %v2557
        %v2603 = vunpack.c.l.b16 %v2558
        %v2604 = vunpack.c.h.b16 %v2558
        %v2605 = vunpack.c.l.b16 %v2559
        %v2606 = vunpack.c.h.b16 %v2559
        %v2607 = vunpack.c.l.b16 %v2560
        %v2608 = vunpack.c.h.b16 %v2560
        %v2609 = vpack.c.b16 %v2577, %v2577
        %v2610 = vpack.c.b16 %v2578, %v2578
        %v2611 = vpack.c.b16 %v2579, %v2579
        %v2612 = vpack.c.b16 %v2580, %v2580
        %v2613 = vpack.c.b16 %v2581, %v2581
        %v2614 = vpack.c.b16 %v2582, %v2582
        %v2615 = vpack.c.b16 %v2583, %v2583
        %v2616 = vpack.c.b16 %v2584, %v2584
        %v2617 = vpack.c.b16 %v2585, %v2585
        %v2618 = vpack.c.b16 %v2586, %v2586
        %v2619 = vpack.c.b16 %v2587, %v2587
        %v2620 = vpack.c.b16 %v2588, %v2588
        %v2621 = vpack.c.b16 %v2589, %v2589
        %v2622 = vpack.c.b16 %v2590, %v2590
        %v2623 = vpack.c.b16 %v2591, %v2591
        %v2624 = vpack.c.b16 %v2592, %v2592
        %v2625 = vpack.c.b16 %v2593, %v2593
        %v2626 = vpack.c.b16 %v2594, %v2594
        %v2627 = vpack.c.b16 %v2595, %v2595
        %v2628 = vpack.c.b16 %v2596, %v2596
        %v2629 = vpack.c.b16 %v2597, %v2597
        %v2630 = vpack.c.b16 %v2598, %v2598
        %v2631 = vpack.c.b16 %v2599, %v2599
        %v2632 = vpack.c.b16 %v2600, %v2600
        %v2633 = vpack.c.b16 %v2601, %v2601
        %v2634 = vpack.c.b16 %v2602, %v2602
        %v2635 = vpack.c.b16 %v2603, %v2603
        %v2636 = vpack.c.b16 %v2604, %v2604
        %v2637 = vpack.c.b16 %v2605, %v2605
        %v2638 = vpack.c.b16 %v2606, %v2606
        %v2639 = vpack.c.b16 %v2607, %v2607
        %v2640 = vpack.c.b16 %v2608, %v2608
        %v2642 = vshrl.u32 %v2609, 16
        %v2644 = vrot.slane %v2642, 7
        %v2645 = vshll.u32 %v2609, 16
        %v2647 = vor.u32 %v2644, %v2645
        %v2648 = vrot.slane %v2644, 4
        %v2650 = vshrl.u32 %v2610, 16
        %v2652 = vrot.slane %v2650, 7
        %v2653 = vshll.u32 %v2610, 16
        %v2655 = vor.u32 %v2652, %v2653
        %v2656 = vsel %vm632, %v2648, %v2655
        %v2657 = vrot.slane %v2652, 4
        %v2659 = vshrl.u32 %v2611, 16
        %v2661 = vrot.slane %v2659, 7
        %v2662 = vshll.u32 %v2611, 16
        %v2664 = vor.u32 %v2661, %v2662
        %v2665 = vrot.slane %v2661, 4
        %v2667 = vshrl.u32 %v2612, 16
        %v2669 = vrot.slane %v2667, 7
        %v2670 = vshll.u32 %v2612, 16
        %v2672 = vor.u32 %v2669, %v2670
        %v2673 = vsel %vm632, %v2665, %v2672
        %v2674 = vrot.slane %v2669, 4
        %v2676 = vshrl.u32 %v2613, 16
        %v2678 = vrot.slane %v2676, 7
        %v2679 = vshll.u32 %v2613, 16
        %v2681 = vor.u32 %v2678, %v2679
        %v2682 = vrot.slane %v2678, 4
        %v2684 = vshrl.u32 %v2614, 16
        %v2686 = vrot.slane %v2684, 7
        %v2687 = vshll.u32 %v2614, 16
        %v2689 = vor.u32 %v2686, %v2687
        %v2690 = vsel %vm632, %v2682, %v2689
        %v2691 = vrot.slane %v2686, 4
        %v2693 = vshrl.u32 %v2615, 16
        %v2695 = vrot.slane %v2693, 7
        %v2696 = vshll.u32 %v2615, 16
        %v2698 = vor.u32 %v2695, %v2696
        %v2699 = vrot.slane %v2695, 4
        %v2701 = vshrl.u32 %v2616, 16
        %v2703 = vrot.slane %v2701, 7
        %v2704 = vshll.u32 %v2616, 16
        %v2706 = vor.u32 %v2703, %v2704
        %v2707 = vsel %vm632, %v2699, %v2706
        %v2708 = vrot.slane %v2703, 4
        %v2710 = vshrl.u32 %v2617, 16
        %v2712 = vrot.slane %v2710, 7
        %v2713 = vshll.u32 %v2617, 16
        %v2715 = vor.u32 %v2712, %v2713
        %v2716 = vrot.slane %v2712, 4
        %v2718 = vshrl.u32 %v2618, 16
        %v2720 = vrot.slane %v2718, 7
        %v2721 = vshll.u32 %v2618, 16
        %v2723 = vor.u32 %v2720, %v2721
        %v2724 = vsel %vm632, %v2716, %v2723
        %v2725 = vrot.slane %v2720, 4
        %v2727 = vshrl.u32 %v2619, 16
        %v2729 = vrot.slane %v2727, 7
        %v2730 = vshll.u32 %v2619, 16
        %v2732 = vor.u32 %v2729, %v2730
        %v2733 = vrot.slane %v2729, 4
        %v2735 = vshrl.u32 %v2620, 16
        %v2737 = vrot.slane %v2735, 7
        %v2738 = vshll.u32 %v2620, 16
        %v2740 = vor.u32 %v2737, %v2738
        %v2741 = vsel %vm632, %v2733, %v2740
        %v2742 = vrot.slane %v2737, 4
        %v2744 = vshrl.u32 %v2621, 16
        %v2746 = vrot.slane %v2744, 7
        %v2747 = vshll.u32 %v2621, 16
        %v2749 = vor.u32 %v2746, %v2747
        %v2750 = vrot.slane %v2746, 4
        %v2752 = vshrl.u32 %v2622, 16
        %v2754 = vrot.slane %v2752, 7
        %v2755 = vshll.u32 %v2622, 16
        %v2757 = vor.u32 %v2754, %v2755
        %v2758 = vsel %vm632, %v2750, %v2757
        %v2759 = vrot.slane %v2754, 4
        %v2761 = vshrl.u32 %v2623, 16
        %v2763 = vrot.slane %v2761, 7
        %v2764 = vshll.u32 %v2623, 16
        %v2766 = vor.u32 %v2763, %v2764
        %v2767 = vrot.slane %v2763, 4
        %v2769 = vshrl.u32 %v2624, 16
        %v2771 = vrot.slane %v2769, 7
        %v2772 = vshll.u32 %v2624, 16
        %v2774 = vor.u32 %v2771, %v2772
        %v2775 = vsel %vm632, %v2767, %v2774
        %v2776 = vrot.slane %v2771, 4
        %v2778 = vshrl.u32 %v2625, 16
        %v2780 = vrot.slane %v2778, 7
        %v2781 = vshll.u32 %v2625, 16
        %v2783 = vor.u32 %v2780, %v2781
        %v2784 = vrot.slane %v2780, 4
        %v2786 = vshrl.u32 %v2626, 16
        %v2788 = vrot.slane %v2786, 7
        %v2789 = vshll.u32 %v2626, 16
        %v2791 = vor.u32 %v2788, %v2789
        %v2792 = vsel %vm632, %v2784, %v2791
        %v2793 = vrot.slane %v2788, 4
        %v2795 = vshrl.u32 %v2627, 16
        %v2797 = vrot.slane %v2795, 7
        %v2798 = vshll.u32 %v2627, 16
        %v2800 = vor.u32 %v2797, %v2798
        %v2801 = vrot.slane %v2797, 4
        %v2803 = vshrl.u32 %v2628, 16
        %v2805 = vrot.slane %v2803, 7
        %v2806 = vshll.u32 %v2628, 16
        %v2808 = vor.u32 %v2805, %v2806
        %v2809 = vsel %vm632, %v2801, %v2808
        %v2810 = vrot.slane %v2805, 4
        %v2812 = vshrl.u32 %v2629, 16
        %v2814 = vrot.slane %v2812, 7
        %v2815 = vshll.u32 %v2629, 16
        %v2817 = vor.u32 %v2814, %v2815
        %v2818 = vrot.slane %v2814, 4
        %v2820 = vshrl.u32 %v2630, 16
        %v2822 = vrot.slane %v2820, 7
        %v2823 = vshll.u32 %v2630, 16
        %v2825 = vor.u32 %v2822, %v2823
        %v2826 = vsel %vm632, %v2818, %v2825
        %v2827 = vrot.slane %v2822, 4
        %v2829 = vshrl.u32 %v2631, 16
        %v2831 = vrot.slane %v2829, 7
        %v2832 = vshll.u32 %v2631, 16
        %v2834 = vor.u32 %v2831, %v2832
        %v2835 = vrot.slane %v2831, 4
        %v2837 = vshrl.u32 %v2632, 16
        %v2839 = vrot.slane %v2837, 7
        %v2840 = vshll.u32 %v2632, 16
        %v2842 = vor.u32 %v2839, %v2840
        %v2843 = vsel %vm632, %v2835, %v2842
        %v2844 = vrot.slane %v2839, 4
        %v2846 = vshrl.u32 %v2633, 16
        %v2848 = vrot.slane %v2846, 7
        %v2849 = vshll.u32 %v2633, 16
        %v2851 = vor.u32 %v2848, %v2849
        %v2852 = vrot.slane %v2848, 4
        %v2854 = vshrl.u32 %v2634, 16
        %v2856 = vrot.slane %v2854, 7
        %v2857 = vshll.u32 %v2634, 16
        %v2859 = vor.u32 %v2856, %v2857
        %v2860 = vsel %vm632, %v2852, %v2859
        %v2861 = vrot.slane %v2856, 4
        %v2863 = vshrl.u32 %v2635, 16
        %v2865 = vrot.slane %v2863, 7
        %v2866 = vshll.u32 %v2635, 16
        %v2868 = vor.u32 %v2865, %v2866
        %v2869 = vrot.slane %v2865, 4
        %v2871 = vshrl.u32 %v2636, 16
        %v2873 = vrot.slane %v2871, 7
        %v2874 = vshll.u32 %v2636, 16
        %v2876 = vor.u32 %v2873, %v2874
        %v2877 = vsel %vm632, %v2869, %v2876
        %v2878 = vrot.slane %v2873, 4
        %v2880 = vshrl.u32 %v2637, 16
        %v2882 = vrot.slane %v2880, 7
        %v2883 = vshll.u32 %v2637, 16
        %v2885 = vor.u32 %v2882, %v2883
        %v2886 = vrot.slane %v2882, 4
        %v2888 = vshrl.u32 %v2638, 16
        %v2890 = vrot.slane %v2888, 7
        %v2891 = vshll.u32 %v2638, 16
        %v2893 = vor.u32 %v2890, %v2891
        %v2894 = vsel %vm632, %v2886, %v2893
        %v2895 = vrot.slane %v2890, 4
        %v2897 = vshrl.u32 %v2639, 16
        %v2899 = vrot.slane %v2897, 7
        %v2900 = vshll.u32 %v2639, 16
        %v2902 = vor.u32 %v2899, %v2900
        %v2903 = vrot.slane %v2899, 4
        %v2905 = vshrl.u32 %v2640, 16
        %v2907 = vrot.slane %v2905, 7
        %v2908 = vshll.u32 %v2640, 16
        %v2910 = vor.u32 %v2907, %v2908
        %v2911 = vsel %vm632, %v2903, %v2910
        %v2912 = vrot.slane %v2907, 4
        %s2961 = scalar_lea.vmem [#allocation3], 12
        %vm2962 = vcmask 27648
        %vm2963 = vmand %vm2962, %vm447
        %v2964 = vld [vmem:[%s2961] sm:$0xf]
        %v2965 = vsel %vm2963, %v2647, %v2964
        %2966 = vst [vmem:[%s2961] sm:$0xf] %v2965
        %2967 = vst.msk [vmem:[%s2961 + $0x4] sm:$0xf] %vm2425, %v2656
        %v2968 = vld [vmem:[%s2961 + $0x8] sm:$0x1]
        %v2969 = vsel %vm2435, %v2657, %v2968
        %2970 = vst [vmem:[%s2961 + $0x8] sm:$0x1] %v2969
        %v2971 = vld [vmem:[%s2961 + $0xc] sm:$0xf]
        %v2972 = vsel %vm2963, %v2664, %v2971
        %2973 = vst [vmem:[%s2961 + $0xc] sm:$0xf] %v2972
        %2974 = vst.msk [vmem:[%s2961 + $0x10] sm:$0xf] %vm2425, %v2673
        %v2975 = vld [vmem:[%s2961 + $0x14] sm:$0x1]
        %v2976 = vsel %vm2435, %v2674, %v2975
        %2977 = vst [vmem:[%s2961 + $0x14] sm:$0x1] %v2976
        %v2978 = vld [vmem:[%s2961 + $0x18] sm:$0xf]
        %v2979 = vsel %vm2963, %v2681, %v2978
        %2980 = vst [vmem:[%s2961 + $0x18] sm:$0xf] %v2979
        %2981 = vst.msk [vmem:[%s2961 + $0x1c] sm:$0xf] %vm2425, %v2690
        %v2982 = vld [vmem:[%s2961 + $0x20] sm:$0x1]
        %v2983 = vsel %vm2435, %v2691, %v2982
        %2984 = vst [vmem:[%s2961 + $0x20] sm:$0x1] %v2983
        %v2985 = vld [vmem:[%s2961 + $0x24] sm:$0xf]
        %v2986 = vsel %vm2963, %v2698, %v2985
        %2987 = vst [vmem:[%s2961 + $0x24] sm:$0xf] %v2986
        %2988 = vst.msk [vmem:[%s2961 + $0x28] sm:$0xf] %vm2425, %v2707
        %v2989 = vld [vmem:[%s2961 + $0x2c] sm:$0x1]
        %v2990 = vsel %vm2435, %v2708, %v2989
        %2991 = vst [vmem:[%s2961 + $0x2c] sm:$0x1] %v2990
        %v2992 = vld [vmem:[%s2961 + $0x30] sm:$0xf]
        %v2993 = vsel %vm2963, %v2715, %v2992
        %2994 = vst [vmem:[%s2961 + $0x30] sm:$0xf] %v2993
        %2995 = vst.msk [vmem:[%s2961 + $0x34] sm:$0xf] %vm2425, %v2724
        %v2996 = vld [vmem:[%s2961 + $0x38] sm:$0x1]
        %v2997 = vsel %vm2435, %v2725, %v2996
        %2998 = vst [vmem:[%s2961 + $0x38] sm:$0x1] %v2997
        %v2999 = vld [vmem:[%s2961 + $0x3c] sm:$0xf]
        %v3000 = vsel %vm2963, %v2732, %v2999
        %3001 = vst [vmem:[%s2961 + $0x3c] sm:$0xf] %v3000
        %3002 = vst.msk [vmem:[%s2961 + $0x40] sm:$0xf] %vm2425, %v2741
        %v3003 = vld [vmem:[%s2961 + $0x44] sm:$0x1]
        %v3004 = vsel %vm2435, %v2742, %v3003
        %3005 = vst [vmem:[%s2961 + $0x44] sm:$0x1] %v3004
        %v3006 = vld [vmem:[%s2961 + $0x48] sm:$0xf]
        %v3007 = vsel %vm2963, %v2749, %v3006
        %3008 = vst [vmem:[%s2961 + $0x48] sm:$0xf] %v3007
        %3009 = vst.msk [vmem:[%s2961 + $0x4c] sm:$0xf] %vm2425, %v2758
        %v3010 = vld [vmem:[%s2961 + $0x50] sm:$0x1]
        %v3011 = vsel %vm2435, %v2759, %v3010
        %3012 = vst [vmem:[%s2961 + $0x50] sm:$0x1] %v3011
        %v3013 = vld [vmem:[%s2961 + $0x54] sm:$0xf]
        %v3014 = vsel %vm2963, %v2766, %v3013
        %3015 = vst [vmem:[%s2961 + $0x54] sm:$0xf] %v3014
        %3016 = vst.msk [vmem:[%s2961 + $0x58] sm:$0xf] %vm2425, %v2775
        %v3017 = vld [vmem:[%s2961 + $0x5c] sm:$0x1]
        %v3018 = vsel %vm2435, %v2776, %v3017
        %3019 = vst [vmem:[%s2961 + $0x5c] sm:$0x1] %v3018
        %v3020 = vld [vmem:[%s2961 + $0x60] sm:$0xf]
        %v3021 = vsel %vm2963, %v2783, %v3020
        %3022 = vst [vmem:[%s2961 + $0x60] sm:$0xf] %v3021
        %3023 = vst.msk [vmem:[%s2961 + $0x64] sm:$0xf] %vm2425, %v2792
        %v3024 = vld [vmem:[%s2961 + $0x68] sm:$0x1]
        %v3025 = vsel %vm2435, %v2793, %v3024
        %3026 = vst [vmem:[%s2961 + $0x68] sm:$0x1] %v3025
        %v3027 = vld [vmem:[%s2961 + $0x6c] sm:$0xf]
        %v3028 = vsel %vm2963, %v2800, %v3027
        %3029 = vst [vmem:[%s2961 + $0x6c] sm:$0xf] %v3028
        %3030 = vst.msk [vmem:[%s2961 + $0x70] sm:$0xf] %vm2425, %v2809
        %v3031 = vld [vmem:[%s2961 + $0x74] sm:$0x1]
        %v3032 = vsel %vm2435, %v2810, %v3031
        %3033 = vst [vmem:[%s2961 + $0x74] sm:$0x1] %v3032
        %v3034 = vld [vmem:[%s2961 + $0x78] sm:$0xf]
        %v3035 = vsel %vm2963, %v2817, %v3034
        %3036 = vst [vmem:[%s2961 + $0x78] sm:$0xf] %v3035
        %3037 = vst.msk [vmem:[%s2961 + $0x7c] sm:$0xf] %vm2425, %v2826
        %v3038 = vld [vmem:[%s2961 + $0x80] sm:$0x1]
        %v3039 = vsel %vm2435, %v2827, %v3038
        %3040 = vst [vmem:[%s2961 + $0x80] sm:$0x1] %v3039
        %v3041 = vld [vmem:[%s2961 + $0x84] sm:$0xf]
        %v3042 = vsel %vm2963, %v2834, %v3041
        %3043 = vst [vmem:[%s2961 + $0x84] sm:$0xf] %v3042
        %3044 = vst.msk [vmem:[%s2961 + $0x88] sm:$0xf] %vm2425, %v2843
        %v3045 = vld [vmem:[%s2961 + $0x8c] sm:$0x1]
        %v3046 = vsel %vm2435, %v2844, %v3045
        %3047 = vst [vmem:[%s2961 + $0x8c] sm:$0x1] %v3046
        %v3048 = vld [vmem:[%s2961 + $0x90] sm:$0xf]
        %v3049 = vsel %vm2963, %v2851, %v3048
        %3050 = vst [vmem:[%s2961 + $0x90] sm:$0xf] %v3049
        %3051 = vst.msk [vmem:[%s2961 + $0x94] sm:$0xf] %vm2425, %v2860
        %v3052 = vld [vmem:[%s2961 + $0x98] sm:$0x1]
        %v3053 = vsel %vm2435, %v2861, %v3052
        %3054 = vst [vmem:[%s2961 + $0x98] sm:$0x1] %v3053
        %v3055 = vld [vmem:[%s2961 + $0x9c] sm:$0xf]
        %v3056 = vsel %vm2963, %v2868, %v3055
        %3057 = vst [vmem:[%s2961 + $0x9c] sm:$0xf] %v3056
        %3058 = vst.msk [vmem:[%s2961 + $0xa0] sm:$0xf] %vm2425, %v2877
        %v3059 = vld [vmem:[%s2961 + $0xa4] sm:$0x1]
        %v3060 = vsel %vm2435, %v2878, %v3059
        %3061 = vst [vmem:[%s2961 + $0xa4] sm:$0x1] %v3060
        %v3062 = vld [vmem:[%s2961 + $0xa8] sm:$0xf]
        %v3063 = vsel %vm2963, %v2885, %v3062
        %3064 = vst [vmem:[%s2961 + $0xa8] sm:$0xf] %v3063
        %3065 = vst.msk [vmem:[%s2961 + $0xac] sm:$0xf] %vm2425, %v2894
        %v3066 = vld [vmem:[%s2961 + $0xb0] sm:$0x1]
        %v3067 = vsel %vm2435, %v2895, %v3066
        %3068 = vst [vmem:[%s2961 + $0xb0] sm:$0x1] %v3067
        %v3069 = vld [vmem:[%s2961 + $0xb4] sm:$0xf]
        %v3070 = vsel %vm2963, %v2902, %v3069
        %3071 = vst [vmem:[%s2961 + $0xb4] sm:$0xf] %v3070
        %3072 = vst.msk [vmem:[%s2961 + $0xb8] sm:$0xf] %vm2425, %v2911
        %v3073 = vld [vmem:[%s2961 + $0xbc] sm:$0x1]
        %v3074 = vsel %vm2435, %v2912, %v3073
        %3075 = vst [vmem:[%s2961 + $0xbc] sm:$0x1] %v3074
        %v3076 = vld [vmem:[#allocation3] sm:$0xf]
        %v3077 = vld [vmem:[#allocation3 + $0x4] sm:$0xf]
        %v3078 = vld [vmem:[#allocation3 + $0xc] sm:$0xf]
        %v3079 = vld [vmem:[#allocation3 + $0x10] sm:$0xf]
        %v3080 = vld [vmem:[#allocation3 + $0x18] sm:$0xf]
        %v3081 = vld [vmem:[#allocation3 + $0x1c] sm:$0xf]
        %v3082 = vld [vmem:[#allocation3 + $0x24] sm:$0xf]
        %v3083 = vld [vmem:[#allocation3 + $0x28] sm:$0xf]
        %v3084 = vld [vmem:[#allocation3 + $0x30] sm:$0xf]
        %v3085 = vld [vmem:[#allocation3 + $0x34] sm:$0xf]
        %v3086 = vld [vmem:[#allocation3 + $0x3c] sm:$0xf]
        %v3087 = vld [vmem:[#allocation3 + $0x40] sm:$0xf]
        %v3088 = vld [vmem:[#allocation3 + $0x48] sm:$0xf]
        %v3089 = vld [vmem:[#allocation3 + $0x4c] sm:$0xf]
        %v3090 = vld [vmem:[#allocation3 + $0x54] sm:$0xf]
        %v3091 = vld [vmem:[#allocation3 + $0x58] sm:$0xf]
        %v3092 = vld [vmem:[#allocation3 + $0x60] sm:$0xf]
        %v3093 = vld [vmem:[#allocation3 + $0x64] sm:$0xf]
        %v3094 = vld [vmem:[#allocation3 + $0x6c] sm:$0xf]
        %v3095 = vld [vmem:[#allocation3 + $0x70] sm:$0xf]
        %v3096 = vld [vmem:[#allocation3 + $0x78] sm:$0xf]
        %v3097 = vld [vmem:[#allocation3 + $0x7c] sm:$0xf]
        %v3098 = vld [vmem:[#allocation3 + $0x84] sm:$0xf]
        %v3099 = vld [vmem:[#allocation3 + $0x88] sm:$0xf]
        %v3100 = vld [vmem:[#allocation3 + $0x90] sm:$0xf]
        %v3101 = vld [vmem:[#allocation3 + $0x94] sm:$0xf]
        %v3102 = vld [vmem:[#allocation3 + $0x9c] sm:$0xf]
        %v3103 = vld [vmem:[#allocation3 + $0xa0] sm:$0xf]
        %v3104 = vld [vmem:[#allocation3 + $0xa8] sm:$0xf]
        %v3105 = vld [vmem:[#allocation3 + $0xac] sm:$0xf]
        %v3106 = vld [vmem:[#allocation3 + $0xb4] sm:$0xf]
        %v3107 = vld [vmem:[#allocation3 + $0xb8] sm:$0xf]
        %v3108 = vld [vmem:[#allocation3 + $0xc0] sm:$0xf]
        %v3109 = vld [vmem:[#allocation3 + $0xc4] sm:$0xf]
        %v3110 = vld [vmem:[#allocation3 + $0xcc] sm:$0xf]
        %v3111 = vld [vmem:[#allocation3 + $0xd0] sm:$0xf]
        %v3112 = vld [vmem:[#allocation3 + $0x8] sm:$0x1]
        %v3113 = vld [vmem:[#allocation3 + $0x14] sm:$0x1]
        %v3114 = vld [vmem:[#allocation3 + $0x20] sm:$0x1]
        %v3115 = vld [vmem:[#allocation3 + $0x2c] sm:$0x1]
        %v3116 = vld [vmem:[#allocation3 + $0x38] sm:$0x1]
        %v3117 = vld [vmem:[#allocation3 + $0x44] sm:$0x1]
        %v3118 = vld [vmem:[#allocation3 + $0x50] sm:$0x1]
        %v3119 = vld [vmem:[#allocation3 + $0x5c] sm:$0x1]
        %v3120 = vld [vmem:[#allocation3 + $0x68] sm:$0x1]
        %v3121 = vld [vmem:[#allocation3 + $0x74] sm:$0x1]
        %v3122 = vld [vmem:[#allocation3 + $0x80] sm:$0x1]
        %v3123 = vld [vmem:[#allocation3 + $0x8c] sm:$0x1]
        %v3124 = vld [vmem:[#allocation3 + $0x98] sm:$0x1]
        %v3125 = vld [vmem:[#allocation3 + $0xa4] sm:$0x1]
        %v3126 = vld [vmem:[#allocation3 + $0xb0] sm:$0x1]
        %v3127 = vld [vmem:[#allocation3 + $0xbc] sm:$0x1]
        %v3128 = vld [vmem:[#allocation3 + $0xc8] sm:$0x1]
        %v3129 = vld [vmem:[#allocation3 + $0xd4] sm:$0x1]
        %v3130 = vld [vmem:[#allocation3] sm:$0xe]
        %v3131 = vld [vmem:[#allocation3 + $0xc] sm:$0xe]
        %v3132 = vld [vmem:[#allocation3 + $0x18] sm:$0xe]
        %v3133 = vld [vmem:[#allocation3 + $0x24] sm:$0xe]
        %v3134 = vld [vmem:[#allocation3 + $0x30] sm:$0xe]
        %v3135 = vld [vmem:[#allocation3 + $0x3c] sm:$0xe]
        %v3136 = vld [vmem:[#allocation3 + $0x48] sm:$0xe]
        %v3137 = vld [vmem:[#allocation3 + $0x54] sm:$0xe]
        %v3138 = vld [vmem:[#allocation3 + $0x60] sm:$0xe]
        %v3139 = vld [vmem:[#allocation3 + $0x6c] sm:$0xe]
        %v3140 = vld [vmem:[#allocation3 + $0x78] sm:$0xe]
        %v3141 = vld [vmem:[#allocation3 + $0x84] sm:$0xe]
        %v3142 = vld [vmem:[#allocation3 + $0x90] sm:$0xe]
        %v3143 = vld [vmem:[#allocation3 + $0x9c] sm:$0xe]
        %v3144 = vld [vmem:[#allocation3 + $0xa8] sm:$0xe]
        %v3145 = vld [vmem:[#allocation3 + $0xb4] sm:$0xe]
        %v3146 = vld [vmem:[#allocation3 + $0xc0] sm:$0xe]
        %v3147 = vld [vmem:[#allocation3 + $0xcc] sm:$0xe]
        %v3184 = vunpack.c.l.b16 %v3076
        %v3185 = vunpack.c.l.b16 %v3077
        %v3186 = vunpack.c.l.b16 %v3078
        %v3187 = vunpack.c.l.b16 %v3079
        %v3188 = vunpack.c.l.b16 %v3080
        %v3189 = vunpack.c.l.b16 %v3081
        %v3190 = vunpack.c.l.b16 %v3082
        %v3191 = vunpack.c.l.b16 %v3083
        %v3192 = vunpack.c.l.b16 %v3084
        %v3193 = vunpack.c.l.b16 %v3085
        %v3194 = vunpack.c.l.b16 %v3086
        %v3195 = vunpack.c.l.b16 %v3087
        %v3196 = vunpack.c.l.b16 %v3088
        %v3197 = vunpack.c.l.b16 %v3089
        %v3198 = vunpack.c.l.b16 %v3090
        %v3199 = vunpack.c.l.b16 %v3091
        %v3200 = vunpack.c.l.b16 %v3092
        %v3201 = vunpack.c.l.b16 %v3093
        %v3202 = vunpack.c.l.b16 %v3094
        %v3203 = vunpack.c.l.b16 %v3095
        %v3204 = vunpack.c.l.b16 %v3096
        %v3205 = vunpack.c.l.b16 %v3097
        %v3206 = vunpack.c.l.b16 %v3098
        %v3207 = vunpack.c.l.b16 %v3099
        %v3208 = vunpack.c.l.b16 %v3100
        %v3209 = vunpack.c.l.b16 %v3101
        %v3210 = vunpack.c.l.b16 %v3102
        %v3211 = vunpack.c.l.b16 %v3103
        %v3212 = vunpack.c.l.b16 %v3104
        %v3213 = vunpack.c.l.b16 %v3105
        %v3214 = vunpack.c.l.b16 %v3106
        %v3215 = vunpack.c.l.b16 %v3107
        %v3216 = vunpack.c.l.b16 %v3108
        %v3217 = vunpack.c.l.b16 %v3109
        %v3218 = vunpack.c.l.b16 %v3110
        %v3219 = vunpack.c.l.b16 %v3111
        %v3220 = vpack.c.b16 %v3185, %v3184
        %v3221 = vpack.c.b16 %v3187, %v3186
        %v3222 = vpack.c.b16 %v3189, %v3188
        %v3223 = vpack.c.b16 %v3191, %v3190
        %v3224 = vpack.c.b16 %v3193, %v3192
        %v3225 = vpack.c.b16 %v3195, %v3194
        %v3226 = vpack.c.b16 %v3197, %v3196
        %v3227 = vpack.c.b16 %v3199, %v3198
        %v3228 = vpack.c.b16 %v3201, %v3200
        %v3229 = vpack.c.b16 %v3203, %v3202
        %v3230 = vpack.c.b16 %v3205, %v3204
        %v3231 = vpack.c.b16 %v3207, %v3206
        %v3232 = vpack.c.b16 %v3209, %v3208
        %v3233 = vpack.c.b16 %v3211, %v3210
        %v3234 = vpack.c.b16 %v3213, %v3212
        %v3235 = vpack.c.b16 %v3215, %v3214
        %v3236 = vpack.c.b16 %v3217, %v3216
        %v3237 = vpack.c.b16 %v3219, %v3218
        %v3256 = vunpack.c.l.b16 %v3112
        %v3257 = vunpack.c.l.b16 %v3113
        %v3258 = vunpack.c.l.b16 %v3114
        %v3259 = vunpack.c.l.b16 %v3115
        %v3260 = vunpack.c.l.b16 %v3116
        %v3261 = vunpack.c.l.b16 %v3117
        %v3262 = vunpack.c.l.b16 %v3118
        %v3263 = vunpack.c.l.b16 %v3119
        %v3264 = vunpack.c.l.b16 %v3120
        %v3265 = vunpack.c.l.b16 %v3121
        %v3266 = vunpack.c.l.b16 %v3122
        %v3267 = vunpack.c.l.b16 %v3123
        %v3268 = vunpack.c.l.b16 %v3124
        %v3269 = vunpack.c.l.b16 %v3125
        %v3270 = vunpack.c.l.b16 %v3126
        %v3271 = vunpack.c.l.b16 %v3127
        %v3272 = vunpack.c.l.b16 %v3128
        %v3273 = vunpack.c.l.b16 %v3129
        %v3274 = vpack.c.b16 %v3256, %v3256
        %v3275 = vpack.c.b16 %v3257, %v3257
        %v3276 = vpack.c.b16 %v3258, %v3258
        %v3277 = vpack.c.b16 %v3259, %v3259
        %v3278 = vpack.c.b16 %v3260, %v3260
        %v3279 = vpack.c.b16 %v3261, %v3261
        %v3280 = vpack.c.b16 %v3262, %v3262
        %v3281 = vpack.c.b16 %v3263, %v3263
        %v3282 = vpack.c.b16 %v3264, %v3264
        %v3283 = vpack.c.b16 %v3265, %v3265
        %v3284 = vpack.c.b16 %v3266, %v3266
        %v3285 = vpack.c.b16 %v3267, %v3267
        %v3286 = vpack.c.b16 %v3268, %v3268
        %v3287 = vpack.c.b16 %v3269, %v3269
        %v3288 = vpack.c.b16 %v3270, %v3270
        %v3289 = vpack.c.b16 %v3271, %v3271
        %v3290 = vpack.c.b16 %v3272, %v3272
        %v3291 = vpack.c.b16 %v3273, %v3273
        %v3293 = vshrl.u32 %v3220, 16
        %v3295 = vshll.u32 %v3220, 16
        %v3297 = vrot.slane %v3295, 1
        %v3298 = vor.u32 %v3293, %v3297
        %v3300 = vshll.u32 %v3274, 16
        %v3302 = vrot.slane %v3300, 1
        %v3303 = vsel %vm1284, %v3298, %v3302
        %v3305 = vshrl.u32 %v3221, 16
        %v3307 = vshll.u32 %v3221, 16
        %v3309 = vrot.slane %v3307, 1
        %v3310 = vor.u32 %v3305, %v3309
        %v3312 = vshll.u32 %v3275, 16
        %v3314 = vrot.slane %v3312, 1
        %v3315 = vsel %vm1284, %v3310, %v3314
        %v3317 = vshrl.u32 %v3222, 16
        %v3319 = vshll.u32 %v3222, 16
        %v3321 = vrot.slane %v3319, 1
        %v3322 = vor.u32 %v3317, %v3321
        %v3324 = vshll.u32 %v3276, 16
        %v3326 = vrot.slane %v3324, 1
        %v3327 = vsel %vm1284, %v3322, %v3326
        %v3329 = vshrl.u32 %v3223, 16
        %v3331 = vshll.u32 %v3223, 16
        %v3333 = vrot.slane %v3331, 1
        %v3334 = vor.u32 %v3329, %v3333
        %v3336 = vshll.u32 %v3277, 16
        %v3338 = vrot.slane %v3336, 1
        %v3339 = vsel %vm1284, %v3334, %v3338
        %v3341 = vshrl.u32 %v3224, 16
        %v3343 = vshll.u32 %v3224, 16
        %v3345 = vrot.slane %v3343, 1
        %v3346 = vor.u32 %v3341, %v3345
        %v3348 = vshll.u32 %v3278, 16
        %v3350 = vrot.slane %v3348, 1
        %v3351 = vsel %vm1284, %v3346, %v3350
        %v3353 = vshrl.u32 %v3225, 16
        %v3355 = vshll.u32 %v3225, 16
        %v3357 = vrot.slane %v3355, 1
        %v3358 = vor.u32 %v3353, %v3357
        %v3360 = vshll.u32 %v3279, 16
        %v3362 = vrot.slane %v3360, 1
        %v3363 = vsel %vm1284, %v3358, %v3362
        %v3365 = vshrl.u32 %v3226, 16
        %v3367 = vshll.u32 %v3226, 16
        %v3369 = vrot.slane %v3367, 1
        %v3370 = vor.u32 %v3365, %v3369
        %v3372 = vshll.u32 %v3280, 16
        %v3374 = vrot.slane %v3372, 1
        %v3375 = vsel %vm1284, %v3370, %v3374
        %v3377 = vshrl.u32 %v3227, 16
        %v3379 = vshll.u32 %v3227, 16
        %v3381 = vrot.slane %v3379, 1
        %v3382 = vor.u32 %v3377, %v3381
        %v3384 = vshll.u32 %v3281, 16
        %v3386 = vrot.slane %v3384, 1
        %v3387 = vsel %vm1284, %v3382, %v3386
        %v3389 = vshrl.u32 %v3228, 16
        %v3391 = vshll.u32 %v3228, 16
        %v3393 = vrot.slane %v3391, 1
        %v3394 = vor.u32 %v3389, %v3393
        %v3396 = vshll.u32 %v3282, 16
        %v3398 = vrot.slane %v3396, 1
        %v3399 = vsel %vm1284, %v3394, %v3398
        %v3401 = vshrl.u32 %v3229, 16
        %v3403 = vshll.u32 %v3229, 16
        %v3405 = vrot.slane %v3403, 1
        %v3406 = vor.u32 %v3401, %v3405
        %v3408 = vshll.u32 %v3283, 16
        %v3410 = vrot.slane %v3408, 1
        %v3411 = vsel %vm1284, %v3406, %v3410
        %v3413 = vshrl.u32 %v3230, 16
        %v3415 = vshll.u32 %v3230, 16
        %v3417 = vrot.slane %v3415, 1
        %v3418 = vor.u32 %v3413, %v3417
        %v3420 = vshll.u32 %v3284, 16
        %v3422 = vrot.slane %v3420, 1
        %v3423 = vsel %vm1284, %v3418, %v3422
        %v3425 = vshrl.u32 %v3231, 16
        %v3427 = vshll.u32 %v3231, 16
        %v3429 = vrot.slane %v3427, 1
        %v3430 = vor.u32 %v3425, %v3429
        %v3432 = vshll.u32 %v3285, 16
        %v3434 = vrot.slane %v3432, 1
        %v3435 = vsel %vm1284, %v3430, %v3434
        %v3437 = vshrl.u32 %v3232, 16
        %v3439 = vshll.u32 %v3232, 16
        %v3441 = vrot.slane %v3439, 1
        %v3442 = vor.u32 %v3437, %v3441
        %v3444 = vshll.u32 %v3286, 16
        %v3446 = vrot.slane %v3444, 1
        %v3447 = vsel %vm1284, %v3442, %v3446
        %v3449 = vshrl.u32 %v3233, 16
        %v3451 = vshll.u32 %v3233, 16
        %v3453 = vrot.slane %v3451, 1
        %v3454 = vor.u32 %v3449, %v3453
        %v3456 = vshll.u32 %v3287, 16
        %v3458 = vrot.slane %v3456, 1
        %v3459 = vsel %vm1284, %v3454, %v3458
        %v3461 = vshrl.u32 %v3234, 16
        %v3463 = vshll.u32 %v3234, 16
        %v3465 = vrot.slane %v3463, 1
        %v3466 = vor.u32 %v3461, %v3465
        %v3468 = vshll.u32 %v3288, 16
        %v3470 = vrot.slane %v3468, 1
        %v3471 = vsel %vm1284, %v3466, %v3470
        %v3473 = vshrl.u32 %v3235, 16
        %v3475 = vshll.u32 %v3235, 16
        %v3477 = vrot.slane %v3475, 1
        %v3478 = vor.u32 %v3473, %v3477
        %v3480 = vshll.u32 %v3289, 16
        %v3482 = vrot.slane %v3480, 1
        %v3483 = vsel %vm1284, %v3478, %v3482
        %v3485 = vshrl.u32 %v3236, 16
        %v3487 = vshll.u32 %v3236, 16
        %v3489 = vrot.slane %v3487, 1
        %v3490 = vor.u32 %v3485, %v3489
        %v3492 = vshll.u32 %v3290, 16
        %v3494 = vrot.slane %v3492, 1
        %v3495 = vsel %vm1284, %v3490, %v3494
        %v3497 = vshrl.u32 %v3237, 16
        %v3499 = vshll.u32 %v3237, 16
        %v3501 = vrot.slane %v3499, 1
        %v3502 = vor.u32 %v3497, %v3501
        %v3504 = vshll.u32 %v3291, 16
        %v3506 = vrot.slane %v3504, 1
        %v3507 = vsel %vm1284, %v3502, %v3506
        %3508 = vrot.lane.b32.xlu0 %v3303, 4
        %v3509 = vpop.permute.xlu0 %3508
        %3510 = vrot.lane.b32.xlu0 %v3315, 4
        %v3511 = vpop.permute.xlu0 %3510
        %3512 = vrot.lane.b32.xlu0 %v3327, 4
        %v3513 = vpop.permute.xlu0 %3512
        %3514 = vrot.lane.b32.xlu0 %v3339, 4
        %v3515 = vpop.permute.xlu0 %3514
        %3516 = vrot.lane.b32.xlu0 %v3351, 4
        %v3517 = vpop.permute.xlu0 %3516
        %3518 = vrot.lane.b32.xlu0 %v3363, 4
        %v3519 = vpop.permute.xlu0 %3518
        %3520 = vrot.lane.b32.xlu0 %v3375, 4
        %v3521 = vpop.permute.xlu0 %3520
        %3522 = vrot.lane.b32.xlu0 %v3387, 4
        %v3523 = vpop.permute.xlu0 %3522
        %3524 = vrot.lane.b32.xlu0 %v3399, 4
        %v3525 = vpop.permute.xlu0 %3524
        %3526 = vrot.lane.b32.xlu0 %v3411, 4
        %v3527 = vpop.permute.xlu0 %3526
        %3528 = vrot.lane.b32.xlu0 %v3423, 4
        %v3529 = vpop.permute.xlu0 %3528
        %3530 = vrot.lane.b32.xlu0 %v3435, 4
        %v3531 = vpop.permute.xlu0 %3530
        %3532 = vrot.lane.b32.xlu0 %v3447, 4
        %v3533 = vpop.permute.xlu0 %3532
        %3534 = vrot.lane.b32.xlu0 %v3459, 4
        %v3535 = vpop.permute.xlu0 %3534
        %3536 = vrot.lane.b32.xlu0 %v3471, 4
        %v3537 = vpop.permute.xlu0 %3536
        %3538 = vrot.lane.b32.xlu0 %v3483, 4
        %v3539 = vpop.permute.xlu0 %3538
        %3540 = vrot.lane.b32.xlu0 %v3495, 4
        %v3541 = vpop.permute.xlu0 %3540
        %3542 = vrot.lane.b32.xlu0 %v3507, 4
        %v3543 = vpop.permute.xlu0 %3542
        %v3562 = vunpack.c.l.b16 %v3130
        %v3563 = vunpack.c.l.b16 %v3131
        %v3564 = vunpack.c.l.b16 %v3132
        %v3565 = vunpack.c.l.b16 %v3133
        %v3566 = vunpack.c.l.b16 %v3134
        %v3567 = vunpack.c.l.b16 %v3135
        %v3568 = vunpack.c.l.b16 %v3136
        %v3569 = vunpack.c.l.b16 %v3137
        %v3570 = vunpack.c.l.b16 %v3138
        %v3571 = vunpack.c.l.b16 %v3139
        %v3572 = vunpack.c.l.b16 %v3140
        %v3573 = vunpack.c.l.b16 %v3141
        %v3574 = vunpack.c.l.b16 %v3142
        %v3575 = vunpack.c.l.b16 %v3143
        %v3576 = vunpack.c.l.b16 %v3144
        %v3577 = vunpack.c.l.b16 %v3145
        %v3578 = vunpack.c.l.b16 %v3146
        %v3579 = vunpack.c.l.b16 %v3147
        %v3580 = vpack.c.b16 %v3185, %v3562
        %v3581 = vpack.c.b16 %v3187, %v3563
        %v3582 = vpack.c.b16 %v3189, %v3564
        %v3583 = vpack.c.b16 %v3191, %v3565
        %v3584 = vpack.c.b16 %v3193, %v3566
        %v3585 = vpack.c.b16 %v3195, %v3567
        %v3586 = vpack.c.b16 %v3197, %v3568
        %v3587 = vpack.c.b16 %v3199, %v3569
        %v3588 = vpack.c.b16 %v3201, %v3570
        %v3589 = vpack.c.b16 %v3203, %v3571
        %v3590 = vpack.c.b16 %v3205, %v3572
        %v3591 = vpack.c.b16 %v3207, %v3573
        %v3592 = vpack.c.b16 %v3209, %v3574
        %v3593 = vpack.c.b16 %v3211, %v3575
        %v3594 = vpack.c.b16 %v3213, %v3576
        %v3595 = vpack.c.b16 %v3215, %v3577
        %v3596 = vpack.c.b16 %v3217, %v3578
        %v3597 = vpack.c.b16 %v3219, %v3579
        %v3598 = vrot.slane %v3580, 1
        %v3599 = vrot.slane %v3274, 1
        %v3600 = vsel %vm1591, %v3598, %v3599
        %v3601 = vrot.slane %v3581, 1
        %v3602 = vrot.slane %v3275, 1
        %v3603 = vsel %vm1591, %v3601, %v3602
        %v3604 = vrot.slane %v3582, 1
        %v3605 = vrot.slane %v3276, 1
        %v3606 = vsel %vm1591, %v3604, %v3605
        %v3607 = vrot.slane %v3583, 1
        %v3608 = vrot.slane %v3277, 1
        %v3609 = vsel %vm1591, %v3607, %v3608
        %v3610 = vrot.slane %v3584, 1
        %v3611 = vrot.slane %v3278, 1
        %v3612 = vsel %vm1591, %v3610, %v3611
        %v3613 = vrot.slane %v3585, 1
        %v3614 = vrot.slane %v3279, 1
        %v3615 = vsel %vm1591, %v3613, %v3614
        %v3616 = vrot.slane %v3586, 1
        %v3617 = vrot.slane %v3280, 1
        %v3618 = vsel %vm1591, %v3616, %v3617
        %v3619 = vrot.slane %v3587, 1
        %v3620 = vrot.slane %v3281, 1
        %v3621 = vsel %vm1591, %v3619, %v3620
        %v3622 = vrot.slane %v3588, 1
        %v3623 = vrot.slane %v3282, 1
        %v3624 = vsel %vm1591, %v3622, %v3623
        %v3625 = vrot.slane %v3589, 1
        %v3626 = vrot.slane %v3283, 1
        %v3627 = vsel %vm1591, %v3625, %v3626
        %v3628 = vrot.slane %v3590, 1
        %v3629 = vrot.slane %v3284, 1
        %v3630 = vsel %vm1591, %v3628, %v3629
        %v3631 = vrot.slane %v3591, 1
        %v3632 = vrot.slane %v3285, 1
        %v3633 = vsel %vm1591, %v3631, %v3632
        %v3634 = vrot.slane %v3592, 1
        %v3635 = vrot.slane %v3286, 1
        %v3636 = vsel %vm1591, %v3634, %v3635
        %v3637 = vrot.slane %v3593, 1
        %v3638 = vrot.slane %v3287, 1
        %v3639 = vsel %vm1591, %v3637, %v3638
        %v3640 = vrot.slane %v3594, 1
        %v3641 = vrot.slane %v3288, 1
        %v3642 = vsel %vm1591, %v3640, %v3641
        %v3643 = vrot.slane %v3595, 1
        %v3644 = vrot.slane %v3289, 1
        %v3645 = vsel %vm1591, %v3643, %v3644
        %v3646 = vrot.slane %v3596, 1
        %v3647 = vrot.slane %v3290, 1
        %v3648 = vsel %vm1591, %v3646, %v3647
        %v3649 = vrot.slane %v3597, 1
        %v3650 = vrot.slane %v3291, 1
        %v3651 = vsel %vm1591, %v3649, %v3650
        %3652 = vrot.lane.b32.xlu0 %v3600, 8
        %v3653 = vpop.permute.xlu0 %3652
        %3654 = vrot.lane.b32.xlu0 %v3603, 8
        %v3655 = vpop.permute.xlu0 %3654
        %3656 = vrot.lane.b32.xlu0 %v3606, 8
        %v3657 = vpop.permute.xlu0 %3656
        %3658 = vrot.lane.b32.xlu0 %v3609, 8
        %v3659 = vpop.permute.xlu0 %3658
        %3660 = vrot.lane.b32.xlu0 %v3612, 8
        %v3661 = vpop.permute.xlu0 %3660
        %3662 = vrot.lane.b32.xlu0 %v3615, 8
        %v3663 = vpop.permute.xlu0 %3662
        %3664 = vrot.lane.b32.xlu0 %v3618, 8
        %v3665 = vpop.permute.xlu0 %3664
        %3666 = vrot.lane.b32.xlu0 %v3621, 8
        %v3667 = vpop.permute.xlu0 %3666
        %3668 = vrot.lane.b32.xlu0 %v3624, 8
        %v3669 = vpop.permute.xlu0 %3668
        %3670 = vrot.lane.b32.xlu0 %v3627, 8
        %v3671 = vpop.permute.xlu0 %3670
        %3672 = vrot.lane.b32.xlu0 %v3630, 8
        %v3673 = vpop.permute.xlu0 %3672
        %3674 = vrot.lane.b32.xlu0 %v3633, 8
        %v3675 = vpop.permute.xlu0 %3674
        %3676 = vrot.lane.b32.xlu0 %v3636, 8
        %v3677 = vpop.permute.xlu0 %3676
        %3678 = vrot.lane.b32.xlu0 %v3639, 8
        %v3679 = vpop.permute.xlu0 %3678
        %3680 = vrot.lane.b32.xlu0 %v3642, 8
        %v3681 = vpop.permute.xlu0 %3680
        %3682 = vrot.lane.b32.xlu0 %v3645, 8
        %v3683 = vpop.permute.xlu0 %3682
        %3684 = vrot.lane.b32.xlu0 %v3648, 8
        %v3685 = vpop.permute.xlu0 %3684
        %3686 = vrot.lane.b32.xlu0 %v3651, 8
        %v3687 = vpop.permute.xlu0 %3686
        %vm3688 = vcmask 31744
        %v3690 = vsel %vm3688, %v3220, %v3509
        %v3692 = vsel %vm3688, %v3221, %v3511
        %v3694 = vsel %vm3688, %v3222, %v3513
        %v3696 = vsel %vm3688, %v3223, %v3515
        %v3698 = vsel %vm3688, %v3224, %v3517
        %v3700 = vsel %vm3688, %v3225, %v3519
        %v3702 = vsel %vm3688, %v3226, %v3521
        %v3704 = vsel %vm3688, %v3227, %v3523
        %v3706 = vsel %vm3688, %v3228, %v3525
        %v3708 = vsel %vm3688, %v3229, %v3527
        %v3710 = vsel %vm3688, %v3230, %v3529
        %v3712 = vsel %vm3688, %v3231, %v3531
        %v3714 = vsel %vm3688, %v3232, %v3533
        %v3716 = vsel %vm3688, %v3233, %v3535
        %v3718 = vsel %vm3688, %v3234, %v3537
        %v3720 = vsel %vm3688, %v3235, %v3539
        %v3722 = vsel %vm3688, %v3236, %v3541
        %v3724 = vsel %vm3688, %v3237, %v3543
        %v3726 = vsel %vm1682, %v3690, %v3653
        %v3728 = vsel %vm1682, %v3692, %v3655
        %v3730 = vsel %vm1682, %v3694, %v3657
        %v3732 = vsel %vm1682, %v3696, %v3659
        %v3734 = vsel %vm1682, %v3698, %v3661
        %v3736 = vsel %vm1682, %v3700, %v3663
        %v3738 = vsel %vm1682, %v3702, %v3665
        %v3740 = vsel %vm1682, %v3704, %v3667
        %v3742 = vsel %vm1682, %v3706, %v3669
        %v3744 = vsel %vm1682, %v3708, %v3671
        %v3746 = vsel %vm1682, %v3710, %v3673
        %v3748 = vsel %vm1682, %v3712, %v3675
        %v3750 = vsel %vm1682, %v3714, %v3677
        %v3752 = vsel %vm1682, %v3716, %v3679
        %v3754 = vsel %vm1682, %v3718, %v3681
        %v3756 = vsel %vm1682, %v3720, %v3683
        %v3758 = vsel %vm1682, %v3722, %v3685
        %v3760 = vsel %vm1682, %v3724, %v3687
        %v3761 = vld [vmem:[#allocation10] sm:$0xf]
        %v3762 = vld [vmem:[#allocation10 + $0x4] sm:$0x3]
        %v3763 = vld [vmem:[#allocation10 + $0x4] sm:$0xc]
        %v3764 = vld [vmem:[#allocation10 + $0x8] sm:$0xf]
        %v3767 = vunpack.c.l.b16 %v3763
        %v3768 = vunpack.c.l.b16 %v3764
        %v3769 = vpack.c.b16 %v3768, %v3767
        %v3770 = vrot.slane %v3769, 2
        %vm3771 = vcmask 97280
        %v3772 = vsel %vm3771, %v3728, 0
        %v3774 = vsel %vm3771, %v3730, 0
        %v3776 = vsel %vm3771, %v3732, 0
        %v3778 = vsel %vm3771, %v3734, 0
        %v3780 = vsel %vm3771, %v3736, 0
        %v3782 = vsel %vm3771, %v3738, 0
        %v3784 = vsel %vm3771, %v3740, 0
        %v3786 = vsel %vm3771, %v3742, 0
        %v3788 = vsel %vm3771, %v3744, 0
        %v3790 = vsel %vm3771, %v3746, 0
        %v3792 = vsel %vm3771, %v3748, 0
        %v3794 = vsel %vm3771, %v3750, 0
        %v3796 = vsel %vm3771, %v3752, 0
        %v3798 = vsel %vm3771, %v3754, 0
        %v3800 = vsel %vm3771, %v3756, 0
        %v3802 = vsel %vm3771, %v3758, 0
        %vm3804 = vcmask 1045504
        %v3806 = vsel %vm3804, %v3770, 0
        %3808 = vmatprep.subr.bf16.mxu0 0
        %3809 = vmatpush1.bf16.msra.mxu0 %v3806
        %3810 = vmatprep.subr.bf16.mxu0 0
        %3811 = vmatpush1.bf16.msra.mxu0 0
        %3812 = vmatprep.subr.bf16.mxu0 0
        %3813 = vmatpush1.bf16.msra.mxu0 0
        %3814 = vmatprep.subr.bf16.mxu0 0
        %3815 = vmatpush1.bf16.msra.mxu0 0
        %3816 = vmatprep.subr.bf16.mxu0 0
        %3817 = vmatpush1.bf16.msra.mxu0 0
        %3818 = vmatprep.subr.bf16.mxu0 0
        %3819 = vmatpush1.bf16.msra.mxu0 0
        %3820 = vmatprep.subr.bf16.mxu0 0
        %3821 = vmatpush1.bf16.msra.mxu0 0
        %3822 = vmatprep.subr.bf16.mxu0 0
        %3823 = vmatpush1.bf16.msra.mxu0 0
        %3824 = vmatprep.subr.bf16.mxu0 0
        %3825 = vmatpush1.bf16.msra.mxu0 0
        %3826 = vmatprep.subr.bf16.mxu0 0
        %3827 = vmatpush1.bf16.msra.mxu0 0
        %3828 = vmatprep.subr.bf16.mxu0 0
        %3829 = vmatpush1.bf16.msra.mxu0 0
        %3830 = vmatprep.subr.bf16.mxu0 0
        %3831 = vmatpush1.bf16.msra.mxu0 0
        %3832 = vmatprep.subr.bf16.mxu0 0
        %3833 = vmatpush1.bf16.msra.mxu0 0
        %3834 = vmatprep.subr.bf16.mxu0 0
        %3835 = vmatpush1.bf16.msra.mxu0 0
        %3836 = vmatprep.subr.bf16.mxu0 0
        %3837 = vmatpush1.bf16.msra.mxu0 0
        %3838 = vmatprep.subr.bf16.mxu0 0
        %3839 = vmatpush1.bf16.msra.mxu0 0
        %3840 = vmatprep.mubr.bf16.mxu0 0
        %3841 = vmatmul.mubr.bf16.gmra.mrb[0].mxu0 %v3772
        %v3842 = vpop.f32.mrb[0].mxu0
        %v3843 = vadd.f32 0.0, %v3842
        %v3844 = vpop.f32.mrb[0].mxu0
        %v3845 = vpop.f32.mrb[0].mxu0
        %v3846 = vadd.f32 0.0, %v3845
        %v3847 = vpop.f32.mrb[0].mxu0
        %3848 = vmatprep.mubr.bf16.mxu0 0
        %3849 = vmatmul.mubr.bf16.gmra.mrb[0].mxu0 %v3774
        %v3850 = vpop.f32.mrb[0].mxu0
        %v3851 = vadd.f32 0.0, %v3850
        %v3852 = vpop.f32.mrb[0].mxu0
        %v3853 = vpop.f32.mrb[0].mxu0
        %v3854 = vadd.f32 0.0, %v3853
        %v3855 = vpop.f32.mrb[0].mxu0
        %3856 = vmatprep.mubr.bf16.mxu0 0
        %3857 = vmatmul.mubr.bf16.gmra.mrb[0].mxu0 %v3776
        %v3858 = vpop.f32.mrb[0].mxu0
        %v3859 = vadd.f32 0.0, %v3858
        %v3860 = vpop.f32.mrb[0].mxu0
        %v3861 = vpop.f32.mrb[0].mxu0
        %v3862 = vadd.f32 0.0, %v3861
        %v3863 = vpop.f32.mrb[0].mxu0
        %3864 = vmatprep.mubr.bf16.mxu0 0
        %3865 = vmatmul.mubr.bf16.gmra.mrb[0].mxu0 %v3778
        %v3866 = vpop.f32.mrb[0].mxu0
        %v3867 = vadd.f32 0.0, %v3866
        %v3868 = vpop.f32.mrb[0].mxu0
        %v3869 = vpop.f32.mrb[0].mxu0
        %v3870 = vadd.f32 0.0, %v3869
        %v3871 = vpop.f32.mrb[0].mxu0
        %3872 = vmatprep.mubr.bf16.mxu0 0
        %3873 = vmatmul.mubr.bf16.gmra.mrb[0].mxu0 %v3780
        %v3874 = vpop.f32.mrb[0].mxu0
        %v3875 = vadd.f32 0.0, %v3874
        %v3876 = vpop.f32.mrb[0].mxu0
        %v3877 = vpop.f32.mrb[0].mxu0
        %v3878 = vadd.f32 0.0, %v3877
        %v3879 = vpop.f32.mrb[0].mxu0
        %3880 = vmatprep.mubr.bf16.mxu0 0
        %3881 = vmatmul.mubr.bf16.gmra.mrb[0].mxu0 %v3782
        %v3882 = vpop.f32.mrb[0].mxu0
        %v3883 = vadd.f32 0.0, %v3882
        %v3884 = vpop.f32.mrb[0].mxu0
        %v3885 = vpop.f32.mrb[0].mxu0
        %v3886 = vadd.f32 0.0, %v3885
        %v3887 = vpop.f32.mrb[0].mxu0
        %3888 = vmatprep.mubr.bf16.mxu0 0
        %3889 = vmatmul.mubr.bf16.gmra.mrb[0].mxu0 %v3784
        %v3890 = vpop.f32.mrb[0].mxu0
        %v3891 = vadd.f32 0.0, %v3890
        %v3892 = vpop.f32.mrb[0].mxu0
        %v3893 = vpop.f32.mrb[0].mxu0
        %v3894 = vadd.f32 0.0, %v3893
        %v3895 = vpop.f32.mrb[0].mxu0
        %3896 = vmatprep.mubr.bf16.mxu0 0
        %3897 = vmatmul.mubr.bf16.gmra.mrb[0].mxu0 %v3786
        %v3898 = vpop.f32.mrb[0].mxu0
        %v3899 = vadd.f32 0.0, %v3898
        %v3900 = vpop.f32.mrb[0].mxu0
        %v3901 = vpop.f32.mrb[0].mxu0
        %v3902 = vadd.f32 0.0, %v3901
        %v3903 = vpop.f32.mrb[0].mxu0
        %3904 = vmatprep.mubr.bf16.mxu0 0
        %3905 = vmatmul.mubr.bf16.gmra.mrb[0].mxu0 %v3788
        %v3906 = vpop.f32.mrb[0].mxu0
        %v3907 = vadd.f32 0.0, %v3906
        %v3908 = vpop.f32.mrb[0].mxu0
        %v3909 = vpop.f32.mrb[0].mxu0
        %v3910 = vadd.f32 0.0, %v3909
        %v3911 = vpop.f32.mrb[0].mxu0
        %3912 = vmatprep.mubr.bf16.mxu0 0
        %3913 = vmatmul.mubr.bf16.gmra.mrb[0].mxu0 %v3790
        %v3914 = vpop.f32.mrb[0].mxu0
        %v3915 = vadd.f32 0.0, %v3914
        %v3916 = vpop.f32.mrb[0].mxu0
        %v3917 = vpop.f32.mrb[0].mxu0
        %v3918 = vadd.f32 0.0, %v3917
        %v3919 = vpop.f32.mrb[0].mxu0
        %3920 = vmatprep.mubr.bf16.mxu0 0
        %3921 = vmatmul.mubr.bf16.gmra.mrb[0].mxu0 %v3792
        %v3922 = vpop.f32.mrb[0].mxu0
        %v3923 = vadd.f32 0.0, %v3922
        %v3924 = vpop.f32.mrb[0].mxu0
        %v3925 = vpop.f32.mrb[0].mxu0
        %v3926 = vadd.f32 0.0, %v3925
        %v3927 = vpop.f32.mrb[0].mxu0
        %3928 = vmatprep.mubr.bf16.mxu0 0
        %3929 = vmatmul.mubr.bf16.gmra.mrb[0].mxu0 %v3794
        %v3930 = vpop.f32.mrb[0].mxu0
        %v3931 = vadd.f32 0.0, %v3930
        %v3932 = vpop.f32.mrb[0].mxu0
        %v3933 = vpop.f32.mrb[0].mxu0
        %v3934 = vadd.f32 0.0, %v3933
        %v3935 = vpop.f32.mrb[0].mxu0
        %3936 = vmatprep.mubr.bf16.mxu0 0
        %3937 = vmatmul.mubr.bf16.gmra.mrb[0].mxu0 %v3796
        %v3938 = vpop.f32.mrb[0].mxu0
        %v3939 = vadd.f32 0.0, %v3938
        %v3940 = vpop.f32.mrb[0].mxu0
        %v3941 = vpop.f32.mrb[0].mxu0
        %v3942 = vadd.f32 0.0, %v3941
        %v3943 = vpop.f32.mrb[0].mxu0
        %3944 = vmatprep.mubr.bf16.mxu0 0
        %3945 = vmatmul.mubr.bf16.gmra.mrb[0].mxu0 %v3798
        %v3946 = vpop.f32.mrb[0].mxu0
        %v3947 = vadd.f32 0.0, %v3946
        %v3948 = vpop.f32.mrb[0].mxu0
        %v3949 = vpop.f32.mrb[0].mxu0
        %v3950 = vadd.f32 0.0, %v3949
        %v3951 = vpop.f32.mrb[0].mxu0
        %3952 = vmatprep.mubr.bf16.mxu0 0
        %3953 = vmatmul.mubr.bf16.gmra.mrb[0].mxu0 %v3800
        %v3954 = vpop.f32.mrb[0].mxu0
        %v3955 = vadd.f32 0.0, %v3954
        %v3956 = vpop.f32.mrb[0].mxu0
        %v3957 = vpop.f32.mrb[0].mxu0
        %v3958 = vadd.f32 0.0, %v3957
        %v3959 = vpop.f32.mrb[0].mxu0
        %3960 = vmatprep.mubr.bf16.mxu0 0
        %3961 = vmatmul.mubr.bf16.gmra.mrb[0].mxu0 %v3802
        %v3962 = vpop.f32.mrb[0].mxu0
        %v3963 = vadd.f32 0.0, %v3962
        %v3964 = vpop.f32.mrb[0].mxu0
        %v3965 = vpop.f32.mrb[0].mxu0
        %v3966 = vadd.f32 0.0, %v3965
        %v3967 = vpop.f32.mrb[0].mxu0
        %3968 = vdwg.mxu0
        %v3971 = vunpack.c.l.b16 %v3761
        %v3972 = vunpack.c.l.b16 %v3762
        %v3973 = vpack.c.b16 %v3972, %v3971
        %v3974 = vsel %vm3771, %v3726, 0
        %v3977 = vsel %vm3804, %v3973, 0
        %3979 = vmatprep.subr.bf16.mxu0 0
        %3980 = vmatpush1.bf16.msra.mxu0 %v3977
        %3981 = vmatprep.subr.bf16.mxu0 0
        %3982 = vmatpush1.bf16.msra.mxu0 0
        %3983 = vmatprep.subr.bf16.mxu0 0
        %3984 = vmatpush1.bf16.msra.mxu0 0
        %3985 = vmatprep.subr.bf16.mxu0 0
        %3986 = vmatpush1.bf16.msra.mxu0 0
        %3987 = vmatprep.subr.bf16.mxu0 0
        %3988 = vmatpush1.bf16.msra.mxu0 0
        %3989 = vmatprep.subr.bf16.mxu0 0
        %3990 = vmatpush1.bf16.msra.mxu0 0
        %3991 = vmatprep.subr.bf16.mxu0 0
        %3992 = vmatpush1.bf16.msra.mxu0 0
        %3993 = vmatprep.subr.bf16.mxu0 0
        %3994 = vmatpush1.bf16.msra.mxu0 0
        %3995 = vmatprep.subr.bf16.mxu0 0
        %3996 = vmatpush1.bf16.msra.mxu0 0
        %3997 = vmatprep.subr.bf16.mxu0 0
        %3998 = vmatpush1.bf16.msra.mxu0 0
        %3999 = vmatprep.subr.bf16.mxu0 0
        %4000 = vmatpush1.bf16.msra.mxu0 0
        %4001 = vmatprep.subr.bf16.mxu0 0
        %4002 = vmatpush1.bf16.msra.mxu0 0
        %4003 = vmatprep.subr.bf16.mxu0 0
        %4004 = vmatpush1.bf16.msra.mxu0 0
        %4005 = vmatprep.subr.bf16.mxu0 0
        %4006 = vmatpush1.bf16.msra.mxu0 0
        %4007 = vmatprep.subr.bf16.mxu0 0
        %4008 = vmatpush1.bf16.msra.mxu0 0
        %4009 = vmatprep.subr.bf16.mxu0 0
        %4010 = vmatpush1.bf16.msra.mxu0 0
        %4011 = vmatprep.mubr.bf16.mxu0 0
        %4012 = vmatmul.mubr.bf16.gmra.mrb[0].mxu0 %v3974
        %v4013 = vpop.f32.mrb[0].mxu0
        %v4014 = vadd.f32 %v3843, %v4013
        %v4015 = vpop.f32.mrb[0].mxu0
        %v4016 = vpop.f32.mrb[0].mxu0
        %v4017 = vadd.f32 %v3846, %v4016
        %v4018 = vpop.f32.mrb[0].mxu0
        %4019 = vmatprep.mubr.bf16.mxu0 0
        %4020 = vmatmul.mubr.bf16.gmra.mrb[0].mxu0 %v3772
        %v4021 = vpop.f32.mrb[0].mxu0
        %v4022 = vadd.f32 %v3851, %v4021
        %v4023 = vpop.f32.mrb[0].mxu0
        %v4024 = vpop.f32.mrb[0].mxu0
        %v4025 = vadd.f32 %v3854, %v4024
        %v4026 = vpop.f32.mrb[0].mxu0
        %4027 = vmatprep.mubr.bf16.mxu0 0
        %4028 = vmatmul.mubr.bf16.gmra.mrb[0].mxu0 %v3774
        %v4029 = vpop.f32.mrb[0].mxu0
        %v4030 = vadd.f32 %v3859, %v4029
        %v4031 = vpop.f32.mrb[0].mxu0
        %v4032 = vpop.f32.mrb[0].mxu0
        %v4033 = vadd.f32 %v3862, %v4032
        %v4034 = vpop.f32.mrb[0].mxu0
        %4035 = vmatprep.mubr.bf16.mxu0 0
        %4036 = vmatmul.mubr.bf16.gmra.mrb[0].mxu0 %v3776
        %v4037 = vpop.f32.mrb[0].mxu0
        %v4038 = vadd.f32 %v3867, %v4037
        %v4039 = vpop.f32.mrb[0].mxu0
        %v4040 = vpop.f32.mrb[0].mxu0
        %v4041 = vadd.f32 %v3870, %v4040
        %v4042 = vpop.f32.mrb[0].mxu0
        %4043 = vmatprep.mubr.bf16.mxu0 0
        %4044 = vmatmul.mubr.bf16.gmra.mrb[0].mxu0 %v3778
        %v4045 = vpop.f32.mrb[0].mxu0
        %v4046 = vadd.f32 %v3875, %v4045
        %v4047 = vpop.f32.mrb[0].mxu0
        %v4048 = vpop.f32.mrb[0].mxu0
        %v4049 = vadd.f32 %v3878, %v4048
        %v4050 = vpop.f32.mrb[0].mxu0
        %4051 = vmatprep.mubr.bf16.mxu0 0
        %4052 = vmatmul.mubr.bf16.gmra.mrb[0].mxu0 %v3780
        %v4053 = vpop.f32.mrb[0].mxu0
        %v4054 = vadd.f32 %v3883, %v4053
        %v4055 = vpop.f32.mrb[0].mxu0
        %v4056 = vpop.f32.mrb[0].mxu0
        %v4057 = vadd.f32 %v3886, %v4056
        %v4058 = vpop.f32.mrb[0].mxu0
        %4059 = vmatprep.mubr.bf16.mxu0 0
        %4060 = vmatmul.mubr.bf16.gmra.mrb[0].mxu0 %v3782
        %v4061 = vpop.f32.mrb[0].mxu0
        %v4062 = vadd.f32 %v3891, %v4061
        %v4063 = vpop.f32.mrb[0].mxu0
        %v4064 = vpop.f32.mrb[0].mxu0
        %v4065 = vadd.f32 %v3894, %v4064
        %v4066 = vpop.f32.mrb[0].mxu0
        %4067 = vmatprep.mubr.bf16.mxu0 0
        %4068 = vmatmul.mubr.bf16.gmra.mrb[0].mxu0 %v3784
        %v4069 = vpop.f32.mrb[0].mxu0
        %v4070 = vadd.f32 %v3899, %v4069
        %v4071 = vpop.f32.mrb[0].mxu0
        %v4072 = vpop.f32.mrb[0].mxu0
        %v4073 = vadd.f32 %v3902, %v4072
        %v4074 = vpop.f32.mrb[0].mxu0
        %4075 = vmatprep.mubr.bf16.mxu0 0
        %4076 = vmatmul.mubr.bf16.gmra.mrb[0].mxu0 %v3786
        %v4077 = vpop.f32.mrb[0].mxu0
        %v4078 = vadd.f32 %v3907, %v4077
        %v4079 = vpop.f32.mrb[0].mxu0
        %v4080 = vpop.f32.mrb[0].mxu0
        %v4081 = vadd.f32 %v3910, %v4080
        %v4082 = vpop.f32.mrb[0].mxu0
        %4083 = vmatprep.mubr.bf16.mxu0 0
        %4084 = vmatmul.mubr.bf16.gmra.mrb[0].mxu0 %v3788
        %v4085 = vpop.f32.mrb[0].mxu0
        %v4086 = vadd.f32 %v3915, %v4085
        %v4087 = vpop.f32.mrb[0].mxu0
        %v4088 = vpop.f32.mrb[0].mxu0
        %v4089 = vadd.f32 %v3918, %v4088
        %v4090 = vpop.f32.mrb[0].mxu0
        %4091 = vmatprep.mubr.bf16.mxu0 0
        %4092 = vmatmul.mubr.bf16.gmra.mrb[0].mxu0 %v3790
        %v4093 = vpop.f32.mrb[0].mxu0
        %v4094 = vadd.f32 %v3923, %v4093
        %v4095 = vpop.f32.mrb[0].mxu0
        %v4096 = vpop.f32.mrb[0].mxu0
        %v4097 = vadd.f32 %v3926, %v4096
        %v4098 = vpop.f32.mrb[0].mxu0
        %4099 = vmatprep.mubr.bf16.mxu0 0
        %4100 = vmatmul.mubr.bf16.gmra.mrb[0].mxu0 %v3792
        %v4101 = vpop.f32.mrb[0].mxu0
        %v4102 = vadd.f32 %v3931, %v4101
        %v4103 = vpop.f32.mrb[0].mxu0
        %v4104 = vpop.f32.mrb[0].mxu0
        %v4105 = vadd.f32 %v3934, %v4104
        %v4106 = vpop.f32.mrb[0].mxu0
        %4107 = vmatprep.mubr.bf16.mxu0 0
        %4108 = vmatmul.mubr.bf16.gmra.mrb[0].mxu0 %v3794
        %v4109 = vpop.f32.mrb[0].mxu0
        %v4110 = vadd.f32 %v3939, %v4109
        %v4111 = vpop.f32.mrb[0].mxu0
        %v4112 = vpop.f32.mrb[0].mxu0
        %v4113 = vadd.f32 %v3942, %v4112
        %v4114 = vpop.f32.mrb[0].mxu0
        %4115 = vmatprep.mubr.bf16.mxu0 0
        %4116 = vmatmul.mubr.bf16.gmra.mrb[0].mxu0 %v3796
        %v4117 = vpop.f32.mrb[0].mxu0
        %v4118 = vadd.f32 %v3947, %v4117
        %v4119 = vpop.f32.mrb[0].mxu0
        %v4120 = vpop.f32.mrb[0].mxu0
        %v4121 = vadd.f32 %v3950, %v4120
        %v4122 = vpop.f32.mrb[0].mxu0
        %4123 = vmatprep.mubr.bf16.mxu0 0
        %4124 = vmatmul.mubr.bf16.gmra.mrb[0].mxu0 %v3798
        %v4125 = vpop.f32.mrb[0].mxu0
        %v4126 = vadd.f32 %v3955, %v4125
        %v4127 = vpop.f32.mrb[0].mxu0
        %v4128 = vpop.f32.mrb[0].mxu0
        %v4129 = vadd.f32 %v3958, %v4128
        %v4130 = vpop.f32.mrb[0].mxu0
        %4131 = vmatprep.mubr.bf16.mxu0 0
        %4132 = vmatmul.mubr.bf16.gmra.mrb[0].mxu0 %v3800
        %v4133 = vpop.f32.mrb[0].mxu0
        %v4134 = vadd.f32 %v3963, %v4133
        %v4135 = vpop.f32.mrb[0].mxu0
        %v4136 = vpop.f32.mrb[0].mxu0
        %v4137 = vadd.f32 %v3966, %v4136
        %v4138 = vpop.f32.mrb[0].mxu0
        %4139 = vdwg.mxu0
        %v4140 = vld [vmem:[#allocation10 + $0xc] sm:$0xf]
        %v4141 = vld [vmem:[#allocation10 + $0x10] sm:$0x3]
        %v4144 = vunpack.c.l.b16 %v4140
        %v4145 = vunpack.c.l.b16 %v4141
        %v4146 = vpack.c.b16 %v4145, %v4144
        %v4147 = vsel %vm3771, %v3760, 0
        %v4150 = vsel %vm3804, %v4146, 0
        %4152 = vmatprep.subr.bf16.mxu0 0
        %4153 = vmatpush1.bf16.msra.mxu0 %v4150
        %4154 = vmatprep.subr.bf16.mxu0 0
        %4155 = vmatpush1.bf16.msra.mxu0 0
        %4156 = vmatprep.subr.bf16.mxu0 0
        %4157 = vmatpush1.bf16.msra.mxu0 0
        %4158 = vmatprep.subr.bf16.mxu0 0
        %4159 = vmatpush1.bf16.msra.mxu0 0
        %4160 = vmatprep.subr.bf16.mxu0 0
        %4161 = vmatpush1.bf16.msra.mxu0 0
        %4162 = vmatprep.subr.bf16.mxu0 0
        %4163 = vmatpush1.bf16.msra.mxu0 0
        %4164 = vmatprep.subr.bf16.mxu0 0
        %4165 = vmatpush1.bf16.msra.mxu0 0
        %4166 = vmatprep.subr.bf16.mxu0 0
        %4167 = vmatpush1.bf16.msra.mxu0 0
        %4168 = vmatprep.subr.bf16.mxu0 0
        %4169 = vmatpush1.bf16.msra.mxu0 0
        %4170 = vmatprep.subr.bf16.mxu0 0
        %4171 = vmatpush1.bf16.msra.mxu0 0
        %4172 = vmatprep.subr.bf16.mxu0 0
        %4173 = vmatpush1.bf16.msra.mxu0 0
        %4174 = vmatprep.subr.bf16.mxu0 0
        %4175 = vmatpush1.bf16.msra.mxu0 0
        %4176 = vmatprep.subr.bf16.mxu0 0
        %4177 = vmatpush1.bf16.msra.mxu0 0
        %4178 = vmatprep.subr.bf16.mxu0 0
        %4179 = vmatpush1.bf16.msra.mxu0 0
        %4180 = vmatprep.subr.bf16.mxu0 0
        %4181 = vmatpush1.bf16.msra.mxu0 0
        %4182 = vmatprep.subr.bf16.mxu0 0
        %4183 = vmatpush1.bf16.msra.mxu0 0
        %4184 = vmatprep.mubr.bf16.mxu0 0
        %4185 = vmatmul.mubr.bf16.gmra.mrb[0].mxu0 %v3774
        %v4186 = vpop.f32.mrb[0].mxu0
        %v4187 = vadd.f32 0.0, %v4186
        %v4188 = vpop.f32.mrb[0].mxu0
        %v4189 = vpop.f32.mrb[0].mxu0
        %v4190 = vadd.f32 0.0, %v4189
        %v4191 = vpop.f32.mrb[0].mxu0
        %4192 = vmatprep.mubr.bf16.mxu0 0
        %4193 = vmatmul.mubr.bf16.gmra.mrb[0].mxu0 %v3776
        %v4194 = vpop.f32.mrb[0].mxu0
        %v4195 = vadd.f32 0.0, %v4194
        %v4196 = vpop.f32.mrb[0].mxu0
        %v4197 = vpop.f32.mrb[0].mxu0
        %v4198 = vadd.f32 0.0, %v4197
        %v4199 = vpop.f32.mrb[0].mxu0
        %4200 = vmatprep.mubr.bf16.mxu0 0
        %4201 = vmatmul.mubr.bf16.gmra.mrb[0].mxu0 %v3778
        %v4202 = vpop.f32.mrb[0].mxu0
        %v4203 = vadd.f32 0.0, %v4202
        %v4204 = vpop.f32.mrb[0].mxu0
        %v4205 = vpop.f32.mrb[0].mxu0
        %v4206 = vadd.f32 0.0, %v4205
        %v4207 = vpop.f32.mrb[0].mxu0
        %4208 = vmatprep.mubr.bf16.mxu0 0
        %4209 = vmatmul.mubr.bf16.gmra.mrb[0].mxu0 %v3780
        %v4210 = vpop.f32.mrb[0].mxu0
        %v4211 = vadd.f32 0.0, %v4210
        %v4212 = vpop.f32.mrb[0].mxu0
        %v4213 = vpop.f32.mrb[0].mxu0
        %v4214 = vadd.f32 0.0, %v4213
        %v4215 = vpop.f32.mrb[0].mxu0
        %4216 = vmatprep.mubr.bf16.mxu0 0
        %4217 = vmatmul.mubr.bf16.gmra.mrb[0].mxu0 %v3782
        %v4218 = vpop.f32.mrb[0].mxu0
        %v4219 = vadd.f32 0.0, %v4218
        %v4220 = vpop.f32.mrb[0].mxu0
        %v4221 = vpop.f32.mrb[0].mxu0
        %v4222 = vadd.f32 0.0, %v4221
        %v4223 = vpop.f32.mrb[0].mxu0
        %4224 = vmatprep.mubr.bf16.mxu0 0
        %4225 = vmatmul.mubr.bf16.gmra.mrb[0].mxu0 %v3784
        %v4226 = vpop.f32.mrb[0].mxu0
        %v4227 = vadd.f32 0.0, %v4226
        %v4228 = vpop.f32.mrb[0].mxu0
        %v4229 = vpop.f32.mrb[0].mxu0
        %v4230 = vadd.f32 0.0, %v4229
        %v4231 = vpop.f32.mrb[0].mxu0
        %4232 = vmatprep.mubr.bf16.mxu0 0
        %4233 = vmatmul.mubr.bf16.gmra.mrb[0].mxu0 %v3786
        %v4234 = vpop.f32.mrb[0].mxu0
        %v4235 = vadd.f32 0.0, %v4234
        %v4236 = vpop.f32.mrb[0].mxu0
        %v4237 = vpop.f32.mrb[0].mxu0
        %v4238 = vadd.f32 0.0, %v4237
        %v4239 = vpop.f32.mrb[0].mxu0
        %4240 = vmatprep.mubr.bf16.mxu0 0
        %4241 = vmatmul.mubr.bf16.gmra.mrb[0].mxu0 %v3788
        %v4242 = vpop.f32.mrb[0].mxu0
        %v4243 = vadd.f32 0.0, %v4242
        %v4244 = vpop.f32.mrb[0].mxu0
        %v4245 = vpop.f32.mrb[0].mxu0
        %v4246 = vadd.f32 0.0, %v4245
        %v4247 = vpop.f32.mrb[0].mxu0
        %4248 = vmatprep.mubr.bf16.mxu0 0
        %4249 = vmatmul.mubr.bf16.gmra.mrb[0].mxu0 %v3790
        %v4250 = vpop.f32.mrb[0].mxu0
        %v4251 = vadd.f32 0.0, %v4250
        %v4252 = vpop.f32.mrb[0].mxu0
        %v4253 = vpop.f32.mrb[0].mxu0
        %v4254 = vadd.f32 0.0, %v4253
        %v4255 = vpop.f32.mrb[0].mxu0
        %4256 = vmatprep.mubr.bf16.mxu0 0
        %4257 = vmatmul.mubr.bf16.gmra.mrb[0].mxu0 %v3792
        %v4258 = vpop.f32.mrb[0].mxu0
        %v4259 = vadd.f32 0.0, %v4258
        %v4260 = vpop.f32.mrb[0].mxu0
        %v4261 = vpop.f32.mrb[0].mxu0
        %v4262 = vadd.f32 0.0, %v4261
        %v4263 = vpop.f32.mrb[0].mxu0
        %4264 = vmatprep.mubr.bf16.mxu0 0
        %4265 = vmatmul.mubr.bf16.gmra.mrb[0].mxu0 %v3794
        %v4266 = vpop.f32.mrb[0].mxu0
        %v4267 = vadd.f32 0.0, %v4266
        %v4268 = vpop.f32.mrb[0].mxu0
        %v4269 = vpop.f32.mrb[0].mxu0
        %v4270 = vadd.f32 0.0, %v4269
        %v4271 = vpop.f32.mrb[0].mxu0
        %4272 = vmatprep.mubr.bf16.mxu0 0
        %4273 = vmatmul.mubr.bf16.gmra.mrb[0].mxu0 %v3796
        %v4274 = vpop.f32.mrb[0].mxu0
        %v4275 = vadd.f32 0.0, %v4274
        %v4276 = vpop.f32.mrb[0].mxu0
        %v4277 = vpop.f32.mrb[0].mxu0
        %v4278 = vadd.f32 0.0, %v4277
        %v4279 = vpop.f32.mrb[0].mxu0
        %4280 = vmatprep.mubr.bf16.mxu0 0
        %4281 = vmatmul.mubr.bf16.gmra.mrb[0].mxu0 %v3798
        %v4282 = vpop.f32.mrb[0].mxu0
        %v4283 = vadd.f32 0.0, %v4282
        %v4284 = vpop.f32.mrb[0].mxu0
        %v4285 = vpop.f32.mrb[0].mxu0
        %v4286 = vadd.f32 0.0, %v4285
        %v4287 = vpop.f32.mrb[0].mxu0
        %4288 = vmatprep.mubr.bf16.mxu0 0
        %4289 = vmatmul.mubr.bf16.gmra.mrb[0].mxu0 %v3800
        %v4290 = vpop.f32.mrb[0].mxu0
        %v4291 = vadd.f32 0.0, %v4290
        %v4292 = vpop.f32.mrb[0].mxu0
        %v4293 = vpop.f32.mrb[0].mxu0
        %v4294 = vadd.f32 0.0, %v4293
        %v4295 = vpop.f32.mrb[0].mxu0
        %4296 = vmatprep.mubr.bf16.mxu0 0
        %4297 = vmatmul.mubr.bf16.gmra.mrb[0].mxu0 %v3802
        %v4298 = vpop.f32.mrb[0].mxu0
        %v4299 = vadd.f32 0.0, %v4298
        %v4300 = vpop.f32.mrb[0].mxu0
        %v4301 = vpop.f32.mrb[0].mxu0
        %v4302 = vadd.f32 0.0, %v4301
        %v4303 = vpop.f32.mrb[0].mxu0
        %4304 = vmatprep.mubr.bf16.mxu0 0
        %4305 = vmatmul.mubr.bf16.gmra.mrb[0].mxu0 %v4147
        %v4306 = vpop.f32.mrb[0].mxu0
        %v4307 = vadd.f32 0.0, %v4306
        %v4308 = vpop.f32.mrb[0].mxu0
        %v4309 = vpop.f32.mrb[0].mxu0
        %v4310 = vadd.f32 0.0, %v4309
        %v4311 = vpop.f32.mrb[0].mxu0
        %4312 = vdwg.mxu0
        %v4313 = vadd.f32 %v4014, %v4187
        %v4314 = vadd.f32 %v4017, %v4190
        %v4315 = vadd.f32 %v4022, %v4195
        %v4316 = vadd.f32 %v4025, %v4198
        %v4317 = vadd.f32 %v4030, %v4203
        %v4318 = vadd.f32 %v4033, %v4206
        %v4319 = vadd.f32 %v4038, %v4211
        %v4320 = vadd.f32 %v4041, %v4214
        %v4321 = vadd.f32 %v4046, %v4219
        %v4322 = vadd.f32 %v4049, %v4222
        %v4323 = vadd.f32 %v4054, %v4227
        %v4324 = vadd.f32 %v4057, %v4230
        %v4325 = vadd.f32 %v4062, %v4235
        %v4326 = vadd.f32 %v4065, %v4238
        %v4327 = vadd.f32 %v4070, %v4243
        %v4328 = vadd.f32 %v4073, %v4246
        %v4329 = vadd.f32 %v4078, %v4251
        %v4330 = vadd.f32 %v4081, %v4254
        %v4331 = vadd.f32 %v4086, %v4259
        %v4332 = vadd.f32 %v4089, %v4262
        %v4333 = vadd.f32 %v4094, %v4267
        %v4334 = vadd.f32 %v4097, %v4270
        %v4335 = vadd.f32 %v4102, %v4275
        %v4336 = vadd.f32 %v4105, %v4278
        %v4337 = vadd.f32 %v4110, %v4283
        %v4338 = vadd.f32 %v4113, %v4286
        %v4339 = vadd.f32 %v4118, %v4291
        %v4340 = vadd.f32 %v4121, %v4294
        %v4341 = vadd.f32 %v4126, %v4299
        %v4342 = vadd.f32 %v4129, %v4302
        %v4343 = vadd.f32 %v4134, %v4307
        %v4344 = vadd.f32 %v4137, %v4310
        %v4345 = vld [vmem:[#allocation12] sm:$0x1]
        %v4347 = vlaneseq
        %v4348 = vshrl.u32 %v4347, 7
        %v4349 = vsub.s32 0, %v4348
        %v4350 = vrot.slane %v4345, %v4349
        %v4352 = vadd.f32 %v4313, %v4350
        %v4353 = vadd.f32 %v4314, %v4350
        %v4354 = vadd.f32 %v4315, %v4350
        %v4355 = vadd.f32 %v4316, %v4350
        %v4356 = vadd.f32 %v4317, %v4350
        %v4357 = vadd.f32 %v4318, %v4350
        %v4358 = vadd.f32 %v4319, %v4350
        %v4359 = vadd.f32 %v4320, %v4350
        %v4360 = vadd.f32 %v4321, %v4350
        %v4361 = vadd.f32 %v4322, %v4350
        %v4362 = vadd.f32 %v4323, %v4350
        %v4363 = vadd.f32 %v4324, %v4350
        %v4364 = vadd.f32 %v4325, %v4350
        %v4365 = vadd.f32 %v4326, %v4350
        %v4366 = vadd.f32 %v4327, %v4350
        %v4367 = vadd.f32 %v4328, %v4350
        %v4368 = vadd.f32 %v4329, %v4350
        %v4369 = vadd.f32 %v4330, %v4350
        %v4370 = vadd.f32 %v4331, %v4350
        %v4371 = vadd.f32 %v4332, %v4350
        %v4372 = vadd.f32 %v4333, %v4350
        %v4373 = vadd.f32 %v4334, %v4350
        %v4374 = vadd.f32 %v4335, %v4350
        %v4375 = vadd.f32 %v4336, %v4350
        %v4376 = vadd.f32 %v4337, %v4350
        %v4377 = vadd.f32 %v4338, %v4350
        %v4378 = vadd.f32 %v4339, %v4350
        %v4379 = vadd.f32 %v4340, %v4350
        %v4380 = vadd.f32 %v4341, %v4350
        %v4381 = vadd.f32 %v4342, %v4350
        %v4382 = vadd.f32 %v4343, %v4350
        %v4383 = vadd.f32 %v4344, %v4350
        %v4384 = vmax.f32 %v4352, 0.0
        %v4385 = vmax.f32 %v4353, 0.0
        %v4386 = vmax.f32 %v4354, 0.0
        %v4387 = vmax.f32 %v4355, 0.0
        %v4388 = vmax.f32 %v4356, 0.0
        %v4389 = vmax.f32 %v4357, 0.0
        %v4390 = vmax.f32 %v4358, 0.0
        %v4391 = vmax.f32 %v4359, 0.0
        %v4392 = vmax.f32 %v4360, 0.0
        %v4393 = vmax.f32 %v4361, 0.0
        %v4394 = vmax.f32 %v4362, 0.0
        %v4395 = vmax.f32 %v4363, 0.0
        %v4396 = vmax.f32 %v4364, 0.0
        %v4397 = vmax.f32 %v4365, 0.0
        %v4398 = vmax.f32 %v4366, 0.0
        %v4399 = vmax.f32 %v4367, 0.0
        %v4400 = vmax.f32 %v4368, 0.0
        %v4401 = vmax.f32 %v4369, 0.0
        %v4402 = vmax.f32 %v4370, 0.0
        %v4403 = vmax.f32 %v4371, 0.0
        %v4404 = vmax.f32 %v4372, 0.0
        %v4405 = vmax.f32 %v4373, 0.0
        %v4406 = vmax.f32 %v4374, 0.0
        %v4407 = vmax.f32 %v4375, 0.0
        %v4408 = vmax.f32 %v4376, 0.0
        %v4409 = vmax.f32 %v4377, 0.0
        %v4410 = vmax.f32 %v4378, 0.0
        %v4411 = vmax.f32 %v4379, 0.0
        %v4412 = vmax.f32 %v4380, 0.0
        %v4413 = vmax.f32 %v4381, 0.0
        %v4414 = vmax.f32 %v4382, 0.0
        %v4415 = vmax.f32 %v4383, 0.0
        %v4416 = vld [vmem:[#allocation13] sm:$0xf]
        %v4417 = vld [vmem:[#allocation13 + $0x4] sm:$0xf]
        %v4418 = vpack.c.bf16 %v4385, %v4384
        %v4419 = vpack.c.bf16 %v4387, %v4386
        %v4420 = vpack.c.bf16 %v4389, %v4388
        %v4421 = vpack.c.bf16 %v4391, %v4390
        %v4422 = vpack.c.bf16 %v4393, %v4392
        %v4423 = vpack.c.bf16 %v4395, %v4394
        %v4424 = vpack.c.bf16 %v4397, %v4396
        %v4425 = vpack.c.bf16 %v4399, %v4398
        %v4426 = vpack.c.bf16 %v4401, %v4400
        %v4427 = vpack.c.bf16 %v4403, %v4402
        %v4428 = vpack.c.bf16 %v4405, %v4404
        %v4429 = vpack.c.bf16 %v4407, %v4406
        %v4430 = vpack.c.bf16 %v4409, %v4408
        %v4431 = vpack.c.bf16 %v4411, %v4410
        %v4432 = vpack.c.bf16 %v4413, %v4412
        %v4433 = vpack.c.bf16 %v4415, %v4414
        %v4434 = vld [vmem:[#allocation15] sm:$0xff]
        %v4435 = vld [vmem:[#allocation15 + $0x8] sm:$0xff]
        %4437 = vset.pattern.permute.xlu0 0
        %4438 = vperm.xlu0 %4437, %v4434
        %v4439 = vpop.permute.xlu0 %4438
        %4442 = vset.pattern.permute.xlu0 0
        %4443 = vperm.xlu0 %4442, %v4435
        %v4444 = vpop.permute.xlu0 %4443
        %v4448 = vunpack.c.l.b16 %v4416
        %v4449 = vunpack.c.l.b16 %v4417
        %v4450 = vpack.c.b16 %v4449, %v4448
        %v4452 = vsel %vm3688, %v4450, 0
        %v4455 = vsel %vm3688, %v4418, 0
        %v4458 = vsel %vm3688, %v4419, 0
        %v4461 = vsel %vm3688, %v4420, 0
        %v4464 = vsel %vm3688, %v4421, 0
        %v4467 = vsel %vm3688, %v4422, 0
        %v4470 = vsel %vm3688, %v4423, 0
        %v4473 = vsel %vm3688, %v4424, 0
        %v4476 = vsel %vm3688, %v4425, 0
        %v4479 = vsel %vm3688, %v4426, 0
        %v4482 = vsel %vm3688, %v4427, 0
        %v4485 = vsel %vm3688, %v4428, 0
        %v4488 = vsel %vm3688, %v4429, 0
        %v4491 = vsel %vm3688, %v4430, 0
        %v4494 = vsel %vm3688, %v4431, 0
        %v4497 = vsel %vm3688, %v4432, 0
        %v4500 = vsel %vm3688, %v4433, 0
        %4502 = vmatprep.subr.bf16.mxu0 0
        %4503 = vmatpush1.bf16.xpose.msra.mxu0 %v4455
        %4504 = vmatprep.subr.bf16.mxu0 0
        %4505 = vmatpush1.bf16.xpose.msra.mxu0 %v4458
        %4506 = vmatprep.subr.bf16.mxu0 0
        %4507 = vmatpush1.bf16.xpose.msra.mxu0 %v4461
        %4508 = vmatprep.subr.bf16.mxu0 0
        %4509 = vmatpush1.bf16.xpose.msra.mxu0 %v4464
        %4510 = vmatprep.subr.bf16.mxu0 0
        %4511 = vmatpush1.bf16.xpose.msra.mxu0 %v4467
        %4512 = vmatprep.subr.bf16.mxu0 0
        %4513 = vmatpush1.bf16.xpose.msra.mxu0 %v4470
        %4514 = vmatprep.subr.bf16.mxu0 0
        %4515 = vmatpush1.bf16.xpose.msra.mxu0 %v4473
        %4516 = vmatprep.subr.bf16.mxu0 0
        %4517 = vmatpush1.bf16.xpose.msra.mxu0 %v4476
        %4518 = vmatprep.subr.bf16.mxu0 0
        %4519 = vmatpush1.bf16.xpose.msra.mxu0 %v4479
        %4520 = vmatprep.subr.bf16.mxu0 0
        %4521 = vmatpush1.bf16.xpose.msra.mxu0 %v4482
        %4522 = vmatprep.subr.bf16.mxu0 0
        %4523 = vmatpush1.bf16.xpose.msra.mxu0 %v4485
        %4524 = vmatprep.subr.bf16.mxu0 0
        %4525 = vmatpush1.bf16.xpose.msra.mxu0 %v4488
        %4526 = vmatprep.subr.bf16.mxu0 0
        %4527 = vmatpush1.bf16.xpose.msra.mxu0 %v4491
        %4528 = vmatprep.subr.bf16.mxu0 0
        %4529 = vmatpush1.bf16.xpose.msra.mxu0 %v4494
        %4530 = vmatprep.subr.bf16.mxu0 0
        %4531 = vmatpush1.bf16.xpose.msra.mxu0 %v4497
        %4532 = vmatprep.subr.bf16.mxu0 0
        %4533 = vmatpush1.bf16.xpose.msra.mxu0 %v4500
        %4534 = vmatprep.mubr.bf16.mxu0 0
        %4535 = vmatmul.mubr.bf16.gmra.mrb[0].mxu0 %v4452
        %v4536 = vpop.f32.mrb[0].mxu0
        %v4537 = vadd.f32 %v4439, %v4536
        %v4538 = vpop.f32.mrb[0].mxu0
        %v4539 = vadd.f32 %v4439, %v4538
        %v4540 = vpop.f32.mrb[0].mxu0
        %v4541 = vadd.f32 %v4444, %v4540
        %v4542 = vpop.f32.mrb[0].mxu0
        %v4543 = vadd.f32 %v4444, %v4542
        %4544 = vdwg.mxu0
        %4545 = vst [vmem:[%s379] sm:$0xff] %v4537
        %4546 = vst [vmem:[%s379 + $0x8] sm:$0xff] %v4539
        %4547 = vst [vmem:[%s379 + $0x10] sm:$0xff] %v4541
        %4548 = vst [vmem:[%s379 + $0x18] sm:$0xff] %v4543
        %s4549 = sand.u32 %s187, 1
        %s4550 = scalar_lea.sflag [#allocation6], %s4549
        %s4551 = sand.u32 %s187, 1
        %s4552 = smul.addr %s4551, 32
        %s4553 = scalar_lea.vmem [#allocation16], %s4552
        // Predicated region
        $region77: #{stage_up_forward.1} parent=47 // pred_check
          %p4554 = pneg %p197
        $region78: #{stage_up_forward.1} parent=47 // pred_check_branch
          %4556 = sbr.rel (%p4554) target = $region80
        $region79: #{stage_up_forward.1} parent=47 // pred_region
          %s4558 = ssub.s32 512, 512
          %4559 = vsyncadd %s4550, %s4558
          %s4560 = smul.addr %s27, 4
          %s4561 = smul.addr %s4560, 128
          %s4562 = scalar_lea.hbm %s7, %s4561
          %s4563 = sshll.u32 %s4553, 4
          %s4564 = int_to_ptr.vmem [resolvable:$true] %s4563
          %4569 = dma.vmem_to_hbm [thread:$0]  %s4564, 512, %s4562, %s4550, 256, 256, 16
        $region80: #{stage_up_forward.1} parent=47 // pred_fallthru
          _
      $region48: #{stage_up_forward.1} parent=5 // pred_fallthru
        _
      %p4570 = scmp.le.s32.totalorder 2, %s22
      // Predicated region
      $region81: #{stage_up_forward.1} parent=5 // pred_check
        %p4571 = pneg %p4570
      $region82: #{stage_up_forward.1} parent=5 // pred_check_branch
        %4573 = sbr.rel (%p4571) target = $region84
      $region83: #{stage_up_forward.1} parent=5 // pred_region
        %s4574 = ssub.s32 %s22, 2
        // Predicated region
        $region85: #{stage_up_forward.1} parent=83 // pred_check
          %p4575 = pneg %p203
        $region86: #{stage_up_forward.1} parent=83 // pred_check_branch
          %4577 = sbr.rel (%p4575) target = $region88
        $region87: #{stage_up_forward.1} parent=83 // pred_region
          %s4578 = sand.u32 %s188, 1
          %s4579 = scalar_lea.sflag [#allocation6], %s4578
          %s4580 = sand.u32 %s188, 1
          %s4581 = smul.addr %s4580, 32
          %s4582 = scalar_lea.vmem [#allocation16], %s4581
          %4583 = dma.done %s4579, 512
        $region88: #{stage_up_forward.1} parent=83 // pred_fallthru
          _
      $region84: #{stage_up_forward.1} parent=5 // pred_fallthru
        _
    $region6: #{stage_up_forward.1} parent=1 // loop_footer
      %s26 = sadd.s32 1, %s22
    $region7: #{stage_up_forward.1} parent=1 // loop_footer_branch
      %21 = sbr.rel target = $region3
    $region8: #{stage_up_forward.1} parent=1 // loop_exit
      _
    %4584 = vsyncpa [#allocation5], 1
    %s4585 = scalar_lea.sflag [#allocation5], 1
    %4586 = vsyncpa %s4585, 1
    %4587 = vsyncpa [#allocation8], 1
    %4588 = vsyncpa [#allocation11], 1
    %4589 = vsyncpa [#allocation14], 1
    %4590 = vsyncpa [#allocation6], 1
    %s4591 = scalar_lea.sflag [#allocation6], 1
    %4592 = vsyncpa %s4591, 1

</llo_original>
